<compile_context>
chip_gen: v7x
topology: tpu7x:2x2x1
jax: 0.10.0
libtpu: 0.0.40
codegen_flags: <defaults>
</compile_context>

<pallas_src>
import functools

import jax
import jax.numpy as jnp
from jax.experimental import pallas as pl
from jax.experimental.pallas import tpu as pltpu

EPS = 1e-5  # nn.BatchNorm3d default eps


def _pick_tile(m, target):
    """Largest row-tile <= target that divides m (multiple of 8 when possible)."""
    if m <= target:
        return m
    t = (target // 8) * 8
    while t >= 8:
        if m % t == 0:
            return t
        t -= 8
    return m


# ----------------------------- conv 3x3x3 (s=1, p=1) -------------------------

def _conv3_kernel(x_ref, w_ref, o_ref, *, L, Wp):
    # x_ref: (R, Cin) flattened (Hp*Wp) rows of one padded depth slab
    # w_ref: (9, Cin, Cout)  -- the 9 in-plane taps of depth tap a
    # o_ref: (L, Cout)       -- resident accumulator across the depth-tap axis
    a = pl.program_id(2)
    acc = None
    for t in range(9):
        b, c = divmod(t, 3)
        off = b * Wp + c
        part = jnp.dot(x_ref[off:off + L, :], w_ref[t],
                       preferred_element_type=jnp.float32)
        acc = part if acc is None else acc + part

    @pl.when(a == 0)
    def _():
        o_ref[...] = acc

    @pl.when(a > 0)
    def _():
        o_ref[...] = o_ref[...] + acc


def conv3x3x3(x5, w):
    """3x3x3 conv, stride 1, padding 1.  x5: (N,D,H,W,Cin) channels-last,
    w: torch layout (Cout,Cin,3,3,3).  Returns (N,D,H,W,Cout)."""
    N, D, H, W, Cin = x5.shape
    Cout = w.shape[0]
    if Cin < 8:  # stem: pad channel (lane) dim so the GEMM contraction is >= 8
        pad_c = 8 - Cin
        x5 = jnp.pad(x5, ((0, 0),) * 4 + ((0, pad_c),))
        w = jnp.pad(w, ((0, 0), (0, pad_c), (0, 0), (0, 0), (0, 0)))
        Cin = 8

    Do, Ho, Wo = D, H, W
    Dp, Hp, Wp = D + 2, H + 3, W + 2     # extra bottom H row keeps tap slices in range
    xp = jnp.pad(x5, ((0, 0), (1, 1), (1, 2), (1, 1), (0, 0)))
    xs = xp.reshape(N, Dp, Hp * Wp, Cin)                   # free (contiguous) reshape
    wp = jnp.transpose(w, (2, 3, 4, 1, 0)).reshape(3, 9, Cin, Cout)

    R = Hp * Wp
    L = Ho * Wp
    flops = 2 * N * Do * 27 * L * Cin * Cout
    bytes_accessed = 4 * (N * Dp * R * Cin + N * Do * L * Cout
                          + N * Do * 3 * 9 * Cin * Cout)

    out = pl.pallas_call(
        functools.partial(_conv3_kernel, L=L, Wp=Wp),
        out_shape=jax.ShapeDtypeStruct((N, Do, L, Cout), jnp.float32),
        grid=(N, Do, 3),
        in_specs=[
            pl.BlockSpec((None, None, R, Cin), lambda n, d, a: (n, d + a, 0, 0)),
            pl.BlockSpec((None, 9, Cin, Cout), lambda n, d, a: (a, 0, 0, 0)),
        ],
        out_specs=pl.BlockSpec((None, None, L, Cout), lambda n, d, a: (n, d, 0, 0)),
        compiler_params=pltpu.CompilerParams(
            dimension_semantics=("parallel", "parallel", "arbitrary")),
        cost_estimate=pl.CostEstimate(flops=flops, transcendentals=0,
                                      bytes_accessed=bytes_accessed),
    )(xs, wp)
    # drop the 2 wrapped junk columns per row
    out = out.reshape(N, Do, Ho, Wp, Cout)[:, :, :, :Wo, :]
    return out


def subsample2(x5):
    """Spatial stride-2 subsample (exactly stride-2 conv output positions)."""
    return x5[:, ::2, ::2, ::2, :]


# ----------------------------- tiled matmul ----------------------------------

def _matmul_kernel(a_ref, b_ref, o_ref):
    o_ref[...] = jnp.dot(a_ref[...], b_ref[...],
                         preferred_element_type=jnp.float32)


def pallas_matmul(a, b, target_tm=256):
    """(M,K) @ (K,N) tiled over M (tile divides M, no pad copy).  K,N here are
    <=64 so K/N tiling is unnecessary at these sizes."""
    M, K = a.shape
    _, Nn = b.shape
    tm = _pick_tile(M, target_tm)
    T = M // tm
    return pl.pallas_call(
        _matmul_kernel,
        out_shape=jax.ShapeDtypeStruct((M, Nn), jnp.float32),
        grid=(T,),
        in_specs=[pl.BlockSpec((tm, K), lambda i: (i, 0)),
                  pl.BlockSpec((K, Nn), lambda i: (0, 0))],
        out_specs=pl.BlockSpec((tm, Nn), lambda i: (i, 0)),
        compiler_params=pltpu.CompilerParams(dimension_semantics=("parallel",)),
        cost_estimate=pl.CostEstimate(flops=2 * M * K * Nn, transcendentals=0,
                                      bytes_accessed=4 * (M * K + T * K * Nn + M * Nn)),
    )(a, b)


def conv1x1x1(x5, w):
    """1x1x1 conv (stride handled by the caller via subsampling)."""
    N, D, H, W, Cin = x5.shape
    Cout = w.shape[0]
    wm = jnp.transpose(w.reshape(Cout, Cin), (1, 0))
    y = pallas_matmul(x5.reshape(-1, Cin), wm)
    return y.reshape(N, D, H, W, Cout)


# ----------------------------- BatchNorm (training-mode stats) ---------------

def _bn_stats_kernel(x_ref, sum_ref, m2_ref):
    x = x_ref[...]                                      # (tm, C)
    s = jnp.sum(x, axis=0, keepdims=True)               # (1, C)
    mu = s * (1.0 / x.shape[0])
    d = x - mu
    m2 = jnp.sum(d * d, axis=0, keepdims=True)          # centered per-tile SS
    sum_ref[...] = jnp.broadcast_to(s, sum_ref.shape)   # (8, C) block
    m2_ref[...] = jnp.broadcast_to(m2, m2_ref.shape)


def _bn_apply_kernel(x_ref, scale_ref, shift_ref, *rest, relu, has_res):
    o_ref = rest[-1]
    y = x_ref[...] * scale_ref[...] + shift_ref[...]
    if has_res:
        y = y + rest[0][...]
    if relu:
        y = jnp.maximum(y, 0.0)
    o_ref[...] = y


def batchnorm(x5, gamma, beta, *, relu=False, res5=None, target_tm=512):
    """Training-mode BatchNorm3d (batch statistics), fused with optional
    residual add and ReLU.  Stats are computed per row-tile in a parallel-grid
    Pallas kernel and combined globally with Chan's formula (no E[x^2]-mean^2
    cancellation); apply is a second tiled Pallas pass."""
    shape = x5.shape
    C = shape[-1]
    x = x5.reshape(-1, C)
    M = x.shape[0]
    tm = _pick_tile(M, target_tm)
    T = M // tm

    sums, m2s = pl.pallas_call(
        _bn_stats_kernel,
        out_shape=(jax.ShapeDtypeStruct((T, 8, C), jnp.float32),
                   jax.ShapeDtypeStruct((T, 8, C), jnp.float32)),
        grid=(T,),
        in_specs=[pl.BlockSpec((tm, C), lambda i: (i, 0))],
        out_specs=(pl.BlockSpec((None, 8, C), lambda i: (i, 0, 0)),
                   pl.BlockSpec((None, 8, C), lambda i: (i, 0, 0))),
        compiler_params=pltpu.CompilerParams(dimension_semantics=("parallel",)),
    )(x)

    tile_sum = sums[:, 0, :]                     # (T, C)
    tile_m2 = m2s[:, 0, :]                       # (T, C)
    mean = jnp.sum(tile_sum, axis=0) / M
    tile_mean = tile_sum / tm
    m2 = jnp.sum(tile_m2, axis=0) + tm * jnp.sum((tile_mean - mean) ** 2, axis=0)
    var = m2 / M                                 # biased variance (PyTorch norm)
    scale = gamma * jax.lax.rsqrt(var + EPS)
    shift = beta - mean * scale

    args = [x, scale.reshape(1, C), shift.reshape(1, C)]
    in_specs = [pl.BlockSpec((tm, C), lambda i: (i, 0)),
                pl.BlockSpec((1, C), lambda i: (0, 0)),
                pl.BlockSpec((1, C), lambda i: (0, 0))]
    has_res = res5 is not None
    if has_res:
        args.append(res5.reshape(-1, C))
        in_specs.append(pl.BlockSpec((tm, C), lambda i: (i, 0)))

    y = pl.pallas_call(
        functools.partial(_bn_apply_kernel, relu=relu, has_res=has_res),
        out_shape=jax.ShapeDtypeStruct((M, C), jnp.float32),
        grid=(T,),
        in_specs=in_specs,
        out_specs=pl.BlockSpec((tm, C), lambda i: (i, 0)),
        compiler_params=pltpu.CompilerParams(dimension_semantics=("parallel",)),
    )(*args)
    return y.reshape(shape)


# ----------------------------- MaxPool3d(3, 2, 1) ----------------------------

def _maxpool_kernel(ee_ref, eo_ref, oe_ref, oo_ref, o_ref, *, Ho, Wo):
    a = pl.program_id(2)
    # H taps {0,1,2} -> even phase shifts {0,1}, odd phase shift {0}; same for W.
    refs = ((ee_ref, (0, 1), (0, 1)),
            (eo_ref, (0, 1), (0,)),
            (oe_ref, (0,), (0, 1)),
            (oo_ref, (0,), (0,)))
    cur = None
    for ref, hs, ws in refs:
        for sh in hs:
            for sw in ws:
                v = ref[sh:sh + Ho, sw:sw + Wo, :]
                cur = v if cur is None else jnp.maximum(cur, v)

    @pl.when(a == 0)
    def _():
        o_ref[...] = cur

    @pl.when(a > 0)
    def _():
        o_ref[...] = jnp.maximum(o_ref[...], cur)


def maxpool3d_k3s2p1(x5):
    N, D, H, W, C = x5.shape
    assert H % 2 == 0 and W % 2 == 0, "even H/W expected for the phase split"
    Do = (D - 1) // 2 + 1
    Ho, Wo = H // 2, W // 2
    xp = jnp.pad(x5, ((0, 0), (1, 1), (1, 1), (1, 1), (0, 0)),
                 constant_values=-jnp.inf)
    Hh, Wh = (H + 2) // 2, (W + 2) // 2
    phases = [xp[:, :, ph::2, pw::2, :] for ph in (0, 1) for pw in (0, 1)]
    phase_spec = pl.BlockSpec((None, None, Hh, Wh, C),
                              lambda n, d, a: (n, 2 * d + a, 0, 0, 0))
    return pl.pallas_call(
        functools.partial(_maxpool_kernel, Ho=Ho, Wo=Wo),
        out_shape=jax.ShapeDtypeStruct((N, Do, Ho, Wo, C), jnp.float32),
        grid=(N, Do, 3),
        in_specs=[phase_spec, phase_spec, phase_spec, phase_spec],
        out_specs=pl.BlockSpec((None, None, Ho, Wo, C),
                               lambda n, d, a: (n, d, 0, 0, 0)),
        compiler_params=pltpu.CompilerParams(
            dimension_semantics=("parallel", "parallel", "arbitrary")),
    )(*phases)


# ----------------------------- avgpool + fc head ------------------------------

def _head_kernel(x_ref, w_ref, b_ref, o_ref):
    pooled = jnp.mean(x_ref[...], axis=1)                   # (N, C)
    o_ref[...] = jnp.dot(pooled, w_ref[...],
                         preferred_element_type=jnp.float32) + b_ref[...]


def head(x5, fc_w, fc_b):
    N, D, H, W, C = x5.shape
    S = D * H * W
    ncls = fc_w.shape[1]
    x = x5.reshape(N, S, C)
    return pl.pallas_call(
        _head_kernel,
        out_shape=jax.ShapeDtypeStruct((N, ncls), jnp.float32),
        grid=(1,),
        in_specs=[pl.BlockSpec((N, S, C), lambda i: (0, 0, 0)),
                  pl.BlockSpec((C, ncls), lambda i: (0, 0)),
                  pl.BlockSpec((1, ncls), lambda i: (0, 0))],
        out_specs=pl.BlockSpec((N, ncls), lambda i: (0, 0)),
    )(x, fc_w, fc_b.reshape(1, ncls))


# ------------------------------ ResNet model ---------------------------------

def basic_block_fwd(x5, p, stride):
    """BasicBlock (expansion=1): conv3-bn-relu-conv3-bn (+res) -relu."""
    h = conv3x3x3(x5, p['conv1_w'])
    if stride == 2:
        h = subsample2(h)
    h = batchnorm(h, p['bn1_g'], p['bn1_b'], relu=True)
    h2 = conv3x3x3(h, p['conv2_w'])                       # always stride 1

    if 'down_conv_w' in p:                                # shortcut type 'B'
        xs = subsample2(x5) if stride == 2 else x5
        res = conv1x1x1(xs, p['down_conv_w'])
        res = batchnorm(res, p['down_bn_g'], p['down_bn_b'], relu=False)
    else:
        res = x5

    return batchnorm(h2, p['bn2_g'], p['bn2_b'], relu=True, res5=res)


def resnet_forward(x_ncdhw, params):
    x = jnp.transpose(x_ncdhw, (0, 2, 3, 4, 1)).astype(jnp.float32)  # channels-last
    # stem: conv1 (k=3, s=1, p=1) + bn1 + relu + maxpool(3,2,1)
    h = conv3x3x3(x, params['conv1_w'])
    h = batchnorm(h, params['bn1_g'], params['bn1_b'], relu=True)
    h = maxpool3d_k3s2p1(h)
    for name in ('layer1', 'layer2', 'layer3', 'layer4'):
        for blk_params, stride in params[name]:
            h = basic_block_fwd(h, blk_params, stride)
    logits = head(h, params['fc_w'], params['fc_b'])      # AdaptiveAvgPool3d + Linear
    # TODO(synk): n_classes2 head (fc1) omitted -- demo instantiates n_classes2=None.
    return logits


def init_params(key, *, block_inplanes, layers_cfg, n_input_channels, n_classes):
    keys = iter(jax.random.split(key, 256))

    def conv_w(cout, cin, k):
        # kaiming_normal_, mode='fan_out', nonlinearity='relu'
        fan_out = cout * k ** 3
        std = (2.0 / fan_out) ** 0.5
        return jax.random.normal(next(keys), (cout, cin, k, k, k),
                                 jnp.float32) * std

    params = {}
    in_planes = block_inplanes[0]
    params['conv1_w'] = conv_w(in_planes, n_input_channels, 3)
    params['bn1_g'] = jnp.ones((in_planes,), jnp.float32)
    params['bn1_b'] = jnp.zeros((in_planes,), jnp.float32)

    for li, (planes, nblocks) in enumerate(zip(block_inplanes, layers_cfg)):
        layer_stride = 1 if li == 0 else 2
        blocks = []
        for bi in range(nblocks):
            s = layer_stride if bi == 0 else 1
            p = {
                'conv1_w': conv_w(planes, in_planes, 3),
                'bn1_g': jnp.ones((planes,), jnp.float32),
                'bn1_b': jnp.zeros((planes,), jnp.float32),
                'conv2_w': conv_w(planes, planes, 3),
                'bn2_g': jnp.ones((planes,), jnp.float32),
                'bn2_b': jnp.zeros((planes,), jnp.float32),
            }
            if s != 1 or in_planes != planes:   # shortcut_type 'B'
                p['down_conv_w'] = conv_w(planes, in_planes, 1)
                p['down_bn_g'] = jnp.ones((planes,), jnp.float32)
                p['down_bn_b'] = jnp.zeros((planes,), jnp.float32)
            blocks.append((p, s))
            in_planes = planes
        params[f'layer{li + 1}'] = blocks

    in_features = block_inplanes[3]  # BasicBlock.expansion == 1
    bound = 1.0 / (in_features ** 0.5)
    params['fc_w'] = jax.random.uniform(next(keys), (in_features, n_classes),
                                        jnp.float32, -bound, bound)
    params['fc_b'] = jax.random.uniform(next(keys), (n_classes,),
                                        jnp.float32, -bound, bound)
    return params


if __name__ == "__main__":
    key = jax.random.PRNGKey(0)
    k_params, k_x = jax.random.split(key)

    # Small ResNet-10-style config: BasicBlock, layers=[1,1,1,1],
    # block_inplanes=[8,16,32,64], n_input_channels=1, n_classes=10.
    params = init_params(k_params,
                         block_inplanes=[8, 16, 32, 64],
                         layers_cfg=[1, 1, 1, 1],
                         n_input_channels=1,
                         n_classes=10)

    # Input in PyTorch NCDHW layout: (batch=2, channels=1, D=8, H=16, W=16).
    x = jax.random.normal(k_x, (2, 1, 8, 16, 16), jnp.float32)

    logits = resnet_forward(x, params)
    jax.block_until_ready(logits)
    assert logits.shape == (2, 10) and bool(jnp.all(jnp.isfinite(logits)))
    print("KERNEL_OK")
</pallas_src>

<mosaic_0001>
module attributes {stable_mosaic.version = 11 : i64} {
  func.func @_conv3_kernel(%arg0: i32, %arg1: i32, %arg2: i32, %arg3: memref<1x1x342x8xf32, #tpu.memory_space<vmem>>, %arg4: memref<1x9x8x8xf32, #tpu.memory_space<vmem>>, %arg5: memref<1x1x288x8xf32, #tpu.memory_space<vmem>>) attributes {dimension_semantics = [#tpu.dimension_semantics<parallel>, #tpu.dimension_semantics<parallel>, #tpu.dimension_semantics<arbitrary>], iteration_bounds = array<i64: 2, 8, 3>, scalar_prefetch = 0 : i64, scratch_operands = 0 : i64, tpu.core_type = #tpu.core_type<tc>, window_params = [{transform_indices = @transform_0, window_bounds = array<i64: 1, 1, 342, 8>}, {transform_indices = @transform_1, window_bounds = array<i64: 1, 9, 8, 8>}, {transform_indices = @transform_2, window_bounds = array<i64: 1, 1, 288, 8>}]} {
    %c0 = arith.constant 0 : index
    %c0_0 = arith.constant 0 : index
    %c0_1 = arith.constant 0 : index
    %c0_2 = arith.constant 0 : index
    %0 = vector.load %arg3[%c0, %c0_0, %c0_1, %c0_2] : memref<1x1x342x8xf32, #tpu.memory_space<vmem>>, vector<1x1x288x8xf32>
    %1 = vector.shape_cast %0 : vector<1x1x288x8xf32> to vector<288x8xf32>
    %c0_3 = arith.constant 0 : index
    %c0_4 = arith.constant 0 : index
    %c0_5 = arith.constant 0 : index
    %c0_6 = arith.constant 0 : index
    %2 = vector.load %arg4[%c0_3, %c0_4, %c0_5, %c0_6] : memref<1x9x8x8xf32, #tpu.memory_space<vmem>>, vector<1x1x8x8xf32>
    %3 = vector.shape_cast %2 : vector<1x1x8x8xf32> to vector<8x8xf32>
    %cst = arith.constant dense<0.000000e+00> : vector<288x8xf32>
    %4 = tpu.matmul %1, %3, %cst {dimension_numbers = #tpu.dot_dimension_numbers<[1], [0], [0], [1], [0, 0, 1, 1], [], []>} : vector<288x8xf32>, vector<8x8xf32>, vector<288x8xf32> -> vector<288x8xf32>
    %c0_7 = arith.constant 0 : index
    %c0_8 = arith.constant 0 : index
    %c1 = arith.constant 1 : index
    %c0_9 = arith.constant 0 : index
    %5 = vector.load %arg3[%c0_7, %c0_8, %c1, %c0_9] : memref<1x1x342x8xf32, #tpu.memory_space<vmem>>, vector<1x1x288x8xf32>
    %6 = vector.shape_cast %5 : vector<1x1x288x8xf32> to vector<288x8xf32>
    %c0_10 = arith.constant 0 : index
    %c1_11 = arith.constant 1 : index
    %c0_12 = arith.constant 0 : index
    %c0_13 = arith.constant 0 : index
    %7 = vector.load %arg4[%c0_10, %c1_11, %c0_12, %c0_13] : memref<1x9x8x8xf32, #tpu.memory_space<vmem>>, vector<1x1x8x8xf32>
    %8 = vector.shape_cast %7 : vector<1x1x8x8xf32> to vector<8x8xf32>
    %cst_14 = arith.constant dense<0.000000e+00> : vector<288x8xf32>
    %9 = tpu.matmul %6, %8, %cst_14 {dimension_numbers = #tpu.dot_dimension_numbers<[1], [0], [0], [1], [0, 0, 1, 1], [], []>} : vector<288x8xf32>, vector<8x8xf32>, vector<288x8xf32> -> vector<288x8xf32>
    %10 = arith.addf %4, %9 : vector<288x8xf32>
    %c0_15 = arith.constant 0 : index
    %c0_16 = arith.constant 0 : index
    %c2 = arith.constant 2 : index
    %c0_17 = arith.constant 0 : index
    %11 = vector.load %arg3[%c0_15, %c0_16, %c2, %c0_17] : memref<1x1x342x8xf32, #tpu.memory_space<vmem>>, vector<1x1x288x8xf32>
    %12 = vector.shape_cast %11 : vector<1x1x288x8xf32> to vector<288x8xf32>
    %c0_18 = arith.constant 0 : index
    %c2_19 = arith.constant 2 : index
    %c0_20 = arith.constant 0 : index
    %c0_21 = arith.constant 0 : index
    %13 = vector.load %arg4[%c0_18, %c2_19, %c0_20, %c0_21] : memref<1x9x8x8xf32, #tpu.memory_space<vmem>>, vector<1x1x8x8xf32>
    %14 = vector.shape_cast %13 : vector<1x1x8x8xf32> to vector<8x8xf32>
    %cst_22 = arith.constant dense<0.000000e+00> : vector<288x8xf32>
    %15 = tpu.matmul %12, %14, %cst_22 {dimension_numbers = #tpu.dot_dimension_numbers<[1], [0], [0], [1], [0, 0, 1, 1], [], []>} : vector<288x8xf32>, vector<8x8xf32>, vector<288x8xf32> -> vector<288x8xf32>
    %16 = arith.addf %10, %15 : vector<288x8xf32>
    %c0_23 = arith.constant 0 : index
    %c0_24 = arith.constant 0 : index
    %c18 = arith.constant 18 : index
    %c0_25 = arith.constant 0 : index
    %17 = vector.load %arg3[%c0_23, %c0_24, %c18, %c0_25] : memref<1x1x342x8xf32, #tpu.memory_space<vmem>>, vector<1x1x288x8xf32>
    %18 = vector.shape_cast %17 : vector<1x1x288x8xf32> to vector<288x8xf32>
    %c0_26 = arith.constant 0 : index
    %c3 = arith.constant 3 : index
    %c0_27 = arith.constant 0 : index
    %c0_28 = arith.constant 0 : index
    %19 = vector.load %arg4[%c0_26, %c3, %c0_27, %c0_28] : memref<1x9x8x8xf32, #tpu.memory_space<vmem>>, vector<1x1x8x8xf32>
    %20 = vector.shape_cast %19 : vector<1x1x8x8xf32> to vector<8x8xf32>
    %cst_29 = arith.constant dense<0.000000e+00> : vector<288x8xf32>
    %21 = tpu.matmul %18, %20, %cst_29 {dimension_numbers = #tpu.dot_dimension_numbers<[1], [0], [0], [1], [0, 0, 1, 1], [], []>} : vector<288x8xf32>, vector<8x8xf32>, vector<288x8xf32> -> vector<288x8xf32>
    %22 = arith.addf %16, %21 : vector<288x8xf32>
    %c0_30 = arith.constant 0 : index
    %c0_31 = arith.constant 0 : index
    %c19 = arith.constant 19 : index
    %c0_32 = arith.constant 0 : index
    %23 = vector.load %arg3[%c0_30, %c0_31, %c19, %c0_32] : memref<1x1x342x8xf32, #tpu.memory_space<vmem>>, vector<1x1x288x8xf32>
    %24 = vector.shape_cast %23 : vector<1x1x288x8xf32> to vector<288x8xf32>
    %c0_33 = arith.constant 0 : index
    %c4 = arith.constant 4 : index
    %c0_34 = arith.constant 0 : index
    %c0_35 = arith.constant 0 : index
    %25 = vector.load %arg4[%c0_33, %c4, %c0_34, %c0_35] : memref<1x9x8x8xf32, #tpu.memory_space<vmem>>, vector<1x1x8x8xf32>
    %26 = vector.shape_cast %25 : vector<1x1x8x8xf32> to vector<8x8xf32>
    %cst_36 = arith.constant dense<0.000000e+00> : vector<288x8xf32>
    %27 = tpu.matmul %24, %26, %cst_36 {dimension_numbers = #tpu.dot_dimension_numbers<[1], [0], [0], [1], [0, 0, 1, 1], [], []>} : vector<288x8xf32>, vector<8x8xf32>, vector<288x8xf32> -> vector<288x8xf32>
    %28 = arith.addf %22, %27 : vector<288x8xf32>
    %c0_37 = arith.constant 0 : index
    %c0_38 = arith.constant 0 : index
    %c20 = arith.constant 20 : index
    %c0_39 = arith.constant 0 : index
    %29 = vector.load %arg3[%c0_37, %c0_38, %c20, %c0_39] : memref<1x1x342x8xf32, #tpu.memory_space<vmem>>, vector<1x1x288x8xf32>
    %30 = vector.shape_cast %29 : vector<1x1x288x8xf32> to vector<288x8xf32>
    %c0_40 = arith.constant 0 : index
    %c5 = arith.constant 5 : index
    %c0_41 = arith.constant 0 : index
    %c0_42 = arith.constant 0 : index
    %31 = vector.load %arg4[%c0_40, %c5, %c0_41, %c0_42] : memref<1x9x8x8xf32, #tpu.memory_space<vmem>>, vector<1x1x8x8xf32>
    %32 = vector.shape_cast %31 : vector<1x1x8x8xf32> to vector<8x8xf32>
    %cst_43 = arith.constant dense<0.000000e+00> : vector<288x8xf32>
    %33 = tpu.matmul %30, %32, %cst_43 {dimension_numbers = #tpu.dot_dimension_numbers<[1], [0], [0], [1], [0, 0, 1, 1], [], []>} : vector<288x8xf32>, vector<8x8xf32>, vector<288x8xf32> -> vector<288x8xf32>
    %34 = arith.addf %28, %33 : vector<288x8xf32>
    %c0_44 = arith.constant 0 : index
    %c0_45 = arith.constant 0 : index
    %c36 = arith.constant 36 : index
    %c0_46 = arith.constant 0 : index
    %35 = vector.load %arg3[%c0_44, %c0_45, %c36, %c0_46] : memref<1x1x342x8xf32, #tpu.memory_space<vmem>>, vector<1x1x288x8xf32>
    %36 = vector.shape_cast %35 : vector<1x1x288x8xf32> to vector<288x8xf32>
    %c0_47 = arith.constant 0 : index
    %c6 = arith.constant 6 : index
    %c0_48 = arith.constant 0 : index
    %c0_49 = arith.constant 0 : index
    %37 = vector.load %arg4[%c0_47, %c6, %c0_48, %c0_49] : memref<1x9x8x8xf32, #tpu.memory_space<vmem>>, vector<1x1x8x8xf32>
    %38 = vector.shape_cast %37 : vector<1x1x8x8xf32> to vector<8x8xf32>
    %cst_50 = arith.constant dense<0.000000e+00> : vector<288x8xf32>
    %39 = tpu.matmul %36, %38, %cst_50 {dimension_numbers = #tpu.dot_dimension_numbers<[1], [0], [0], [1], [0, 0, 1, 1], [], []>} : vector<288x8xf32>, vector<8x8xf32>, vector<288x8xf32> -> vector<288x8xf32>
    %40 = arith.addf %34, %39 : vector<288x8xf32>
    %c0_51 = arith.constant 0 : index
    %c0_52 = arith.constant 0 : index
    %c37 = arith.constant 37 : index
    %c0_53 = arith.constant 0 : index
    %41 = vector.load %arg3[%c0_51, %c0_52, %c37, %c0_53] : memref<1x1x342x8xf32, #tpu.memory_space<vmem>>, vector<1x1x288x8xf32>
    %42 = vector.shape_cast %41 : vector<1x1x288x8xf32> to vector<288x8xf32>
    %c0_54 = arith.constant 0 : index
    %c7 = arith.constant 7 : index
    %c0_55 = arith.constant 0 : index
    %c0_56 = arith.constant 0 : index
    %43 = vector.load %arg4[%c0_54, %c7, %c0_55, %c0_56] : memref<1x9x8x8xf32, #tpu.memory_space<vmem>>, vector<1x1x8x8xf32>
    %44 = vector.shape_cast %43 : vector<1x1x8x8xf32> to vector<8x8xf32>
    %cst_57 = arith.constant dense<0.000000e+00> : vector<288x8xf32>
    %45 = tpu.matmul %42, %44, %cst_57 {dimension_numbers = #tpu.dot_dimension_numbers<[1], [0], [0], [1], [0, 0, 1, 1], [], []>} : vector<288x8xf32>, vector<8x8xf32>, vector<288x8xf32> -> vector<288x8xf32>
    %46 = arith.addf %40, %45 : vector<288x8xf32>
    %c0_58 = arith.constant 0 : index
    %c0_59 = arith.constant 0 : index
    %c38 = arith.constant 38 : index
    %c0_60 = arith.constant 0 : index
    %47 = vector.load %arg3[%c0_58, %c0_59, %c38, %c0_60] : memref<1x1x342x8xf32, #tpu.memory_space<vmem>>, vector<1x1x288x8xf32>
    %48 = vector.shape_cast %47 : vector<1x1x288x8xf32> to vector<288x8xf32>
    %c0_61 = arith.constant 0 : index
    %c8 = arith.constant 8 : index
    %c0_62 = arith.constant 0 : index
    %c0_63 = arith.constant 0 : index
    %49 = vector.load %arg4[%c0_61, %c8, %c0_62, %c0_63] : memref<1x9x8x8xf32, #tpu.memory_space<vmem>>, vector<1x1x8x8xf32>
    %50 = vector.shape_cast %49 : vector<1x1x8x8xf32> to vector<8x8xf32>
    %cst_64 = arith.constant dense<0.000000e+00> : vector<288x8xf32>
    %51 = tpu.matmul %48, %50, %cst_64 {dimension_numbers = #tpu.dot_dimension_numbers<[1], [0], [0], [1], [0, 0, 1, 1], [], []>} : vector<288x8xf32>, vector<8x8xf32>, vector<288x8xf32> -> vector<288x8xf32>
    %52 = arith.addf %46, %51 : vector<288x8xf32>
    %c0_i32 = arith.constant 0 : i32
    %53 = arith.cmpi eq, %arg2, %c0_i32 : i32
    %54 = arith.extui %53 : i1 to i32
    %c0_i32_65 = arith.constant 0 : i32
    %55 = arith.cmpi ne, %54, %c0_i32_65 : i32
    scf.if %55 {
      %c0_68 = arith.constant 0 : index
      %c0_69 = arith.constant 0 : index
      %c0_70 = arith.constant 0 : index
      %c0_71 = arith.constant 0 : index
      %59 = vector.load %arg5[%c0_68, %c0_69, %c0_70, %c0_71] : memref<1x1x288x8xf32, #tpu.memory_space<vmem>>, vector<1x1x288x8xf32>
      %60 = vector.shape_cast %59 : vector<1x1x288x8xf32> to vector<288x8xf32>
      %61 = vector.shape_cast %52 : vector<288x8xf32> to vector<1x1x288x8xf32>
      tpu.vector_store %arg5[%c0_68, %c0_69, %c0_70, %c0_71], %61 {strides = array<i32>} : memref<1x1x288x8xf32, #tpu.memory_space<vmem>>, vector<1x1x288x8xf32>,
    } else {
    }
    %c0_i32_66 = arith.constant 0 : i32
    %56 = arith.cmpi sgt, %arg2, %c0_i32_66 : i32
    %57 = arith.extui %56 : i1 to i32
    %c0_i32_67 = arith.constant 0 : i32
    %58 = arith.cmpi ne, %57, %c0_i32_67 : i32
    scf.if %58 {
      %c0_68 = arith.constant 0 : index
      %c0_69 = arith.constant 0 : index
      %c0_70 = arith.constant 0 : index
      %c0_71 = arith.constant 0 : index
      %59 = vector.load %arg5[%c0_68, %c0_69, %c0_70, %c0_71] : memref<1x1x288x8xf32, #tpu.memory_space<vmem>>, vector<1x1x288x8xf32>
      %60 = vector.shape_cast %59 : vector<1x1x288x8xf32> to vector<288x8xf32>
      %61 = arith.addf %60, %52 : vector<288x8xf32>
      %c0_72 = arith.constant 0 : index
      %c0_73 = arith.constant 0 : index
      %c0_74 = arith.constant 0 : index
      %c0_75 = arith.constant 0 : index
      %62 = vector.load %arg5[%c0_72, %c0_73, %c0_74, %c0_75] : memref<1x1x288x8xf32, #tpu.memory_space<vmem>>, vector<1x1x288x8xf32>
      %63 = vector.shape_cast %62 : vector<1x1x288x8xf32> to vector<288x8xf32>
      %64 = vector.shape_cast %61 : vector<288x8xf32> to vector<1x1x288x8xf32>
      tpu.vector_store %arg5[%c0_72, %c0_73, %c0_74, %c0_75], %64 {strides = array<i32>} : memref<1x1x288x8xf32, #tpu.memory_space<vmem>>, vector<1x1x288x8xf32>,
    } else {
    }
    return
  }
  func.func @transform_0(%arg0: i32, %arg1: i32, %arg2: i32) -> (i32, i32, i32, i32) {
    %0 = arith.addi %arg1, %arg2 : i32
    %c0_i32 = arith.constant 0 : i32
    %c0_i32_0 = arith.constant 0 : i32
    %c0_i32_1 = arith.constant 0 : i32
    return %arg0, %0, %c0_i32, %c0_i32_0 : i32, i32, i32, i32
  }
  func.func @transform_1(%arg0: i32, %arg1: i32, %arg2: i32) -> (i32, i32, i32, i32) {
    %c0_i32 = arith.constant 0 : i32
    %c0_i32_0 = arith.constant 0 : i32
    %c0_i32_1 = arith.constant 0 : i32
    %c0_i32_2 = arith.constant 0 : i32
    return %arg2, %c0_i32, %c0_i32_0, %c0_i32_1 : i32, i32, i32, i32
  }
  func.func @transform_2(%arg0: i32, %arg1: i32, %arg2: i32) -> (i32, i32, i32, i32) {
    %c0_i32 = arith.constant 0 : i32
    %c0_i32_0 = arith.constant 0 : i32
    %c0_i32_1 = arith.constant 0 : i32
    return %arg0, %arg1, %c0_i32, %c0_i32_0 : i32, i32, i32, i32
  }
}

</mosaic_0001>

<llo_original>
// kernel: tpu_custom_call.1
$region0: #{tpu_custom_call.1}
  #allocation0 [shape = 'u32[]', space=smem, size = 0x4, offset = 0x4, fixed_abs, tag = 'smem constant byte address 0x4 - core index']
  #allocation1 [shape = 'u32[144,128]{1,0:T(1,128)}', space=vmem, size = 0x12000, scoped, tag = 'internal scratch']
  %s0 = inlined_call_operand.vmem [shape: f32[2,10,342,8], index: 0, kind: input, shape index: {}]
  %s1 = inlined_call_operand.vmem [shape: f32[3,9,8,8], index: 1, kind: input, shape index: {}]
  %s2 = inlined_call_operand.vmem [shape: f32[2,8,288,8], index: 2, kind: output, shape index: {}]
  %s3 = sld [smem:[#allocation0]]
  $region49: #{tpu_custom_call.1} parent=0
    _
  %s5 = ssub.s32 1, %s3
  %s6 = scalar_select 0, %s5, %s3
  loop: start=0, step=1, limit=50
  $region2: #{tpu_custom_call.1} parent=0 // loop_pre_header
    _
  $region3: #{tpu_custom_call.1} parent=0 // loop_header
    %s8 = sphi 0, %s12
    %p9 = scmp.ge.s32.totalorder %s8, 50
    %s15 = sphi 0, %s34
    %s16 = sphi 0, %s30
    %s17 = sphi 0, %s26
    %s18 = sphi 0, %s15
    %s19 = sphi 0, %s16
    %s20 = sphi 0, %s17
    %s21 = sphi 0, %s18
    %s22 = sphi 0, %s19
    %s23 = sphi 0, %s20
    %s41 = sphi 0, %s43
    %s44 = sphi 0, %s41
    %s45 = sphi 0, %s44
    %s61 = sphi 0, %s45
    %s67 = sphi 0, %s69
    %s70 = sphi 0, %s67
    %s71 = sphi 0, %s70
    %s87 = sphi 0, %s71
    %s95 = sphi 0, %s97
    %s98 = sphi 0, %s95
    %s99 = sphi 0, %s98
    %s115 = sphi 0, %s99
  $region4: #{tpu_custom_call.1} parent=0 // loop_header_branch
    %11 = sbr.rel (%p9) target = $region8
  $region5: #{tpu_custom_call.1} parent=0 // loop_body
    %s13 = ssub.s32 %s8, 1
    %s14 = ssub.s32 %s8, 2
    %s24 = sadd.s32 1, %s17
    %p25 = scmp.ge.s32.totalorder %s24, 3
    %s26 = scalar_select %p25, 0, %s24
    %s27 = sadd.s32 1, %s16
    %s28 = scalar_select %p25, %s27, %s16
    %p29 = scmp.ge.s32.totalorder %s28, 8
    %s30 = scalar_select %p29, 0, %s28
    %s31 = sadd.s32 1, %s15
    %s32 = scalar_select %p29, %s31, %s15
    %p33 = scmp.ge.s32.totalorder %s32, 2
    %s34 = scalar_select %p33, 0, %s32
    %s35 = sadd.s32 %s16, %s17
    %s36 = sadd.s32 %s30, %s26
    %s37 = ssub.s32 %s15, %s34
    %s38 = ssub.s32 %s35, %s36
    %s39 = sor.u32 %s37, %s38
    %p40 = scmp.eq.s32.totalorder %s39, 0
    %s42 = sadd.s32 %s41, 1
    %s43 = scalar_select %p40, %s41, %s42
    %p46 = pneg %p40
    %p47 = scmp.eq.s32.totalorder %s8, 47
    %p48 = por %p46, %p47
    %p49 = scmp.ne.s32.totalorder %s41, %s44
    %p50 = scmp.eq.s32.totalorder %s8, 0
    %p51 = por %p49, %p50
    %p52 = scmp.ne.s32.totalorder %s41, %s44
    %p53 = scmp.eq.s32.totalorder %s13, 47
    %p54 = por %p52, %p53
    %p55 = scmp.ne.s32.totalorder %s44, %s45
    %p56 = scmp.eq.s32.totalorder %s13, 0
    %p57 = por %p55, %p56
    %p58 = scmp.ne.s32.totalorder %s44, %s45
    %p59 = scmp.eq.s32.totalorder %s14, 47
    %p60 = por %p58, %p59
    %p62 = scmp.ne.s32.totalorder %s45, %s61
    %p63 = scmp.eq.s32.totalorder %s14, 0
    %p64 = por %p62, %p63
    %s65 = ssub.s32 %s17, %s26
    %p66 = scmp.eq.s32.totalorder %s65, 0
    %s68 = sadd.s32 %s67, 1
    %s69 = scalar_select %p66, %s67, %s68
    %p72 = pneg %p66
    %p73 = scmp.eq.s32.totalorder %s8, 47
    %p74 = por %p72, %p73
    %p75 = scmp.ne.s32.totalorder %s67, %s70
    %p76 = scmp.eq.s32.totalorder %s8, 0
    %p77 = por %p75, %p76
    %p78 = scmp.ne.s32.totalorder %s67, %s70
    %p79 = scmp.eq.s32.totalorder %s13, 47
    %p80 = por %p78, %p79
    %p81 = scmp.ne.s32.totalorder %s70, %s71
    %p82 = scmp.eq.s32.totalorder %s13, 0
    %p83 = por %p81, %p82
    %p84 = scmp.ne.s32.totalorder %s70, %s71
    %p85 = scmp.eq.s32.totalorder %s14, 47
    %p86 = por %p84, %p85
    %p88 = scmp.ne.s32.totalorder %s71, %s87
    %p89 = scmp.eq.s32.totalorder %s14, 0
    %p90 = por %p88, %p89
    %s91 = ssub.s32 %s15, %s34
    %s92 = ssub.s32 %s16, %s30
    %s93 = sor.u32 %s91, %s92
    %p94 = scmp.eq.s32.totalorder %s93, 0
    %s96 = sadd.s32 %s95, 1
    %s97 = scalar_select %p94, %s95, %s96
    %p100 = pneg %p94
    %p101 = scmp.eq.s32.totalorder %s8, 47
    %p102 = por %p100, %p101
    %p103 = scmp.ne.s32.totalorder %s95, %s98
    %p104 = scmp.eq.s32.totalorder %s8, 0
    %p105 = por %p103, %p104
    %p106 = scmp.ne.s32.totalorder %s95, %s98
    %p107 = scmp.eq.s32.totalorder %s13, 47
    %p108 = por %p106, %p107
    %p109 = scmp.ne.s32.totalorder %s98, %s99
    %p110 = scmp.eq.s32.totalorder %s13, 0
    %p111 = por %p109, %p110
    %p112 = scmp.ne.s32.totalorder %s98, %s99
    %p113 = scmp.eq.s32.totalorder %s14, 47
    %p114 = por %p112, %p113
    %p116 = scmp.ne.s32.totalorder %s99, %s115
    %p117 = scmp.eq.s32.totalorder %s14, 0
    %p118 = por %p116, %p117
    %p119 = scmp.le.s32.totalorder 1, %s8
    %p120 = scmp.lt.s32.totalorder %s8, 49
    %p121 = pnand %p119, %p120
    %p122 = pneg %p121
    // Predicated region
    $region9: #{tpu_custom_call.1} parent=5 // pred_check
      _
    $region10: #{tpu_custom_call.1} parent=5 // pred_check_branch
      %124 = sbr.rel (%p121) target = $region12
    $region11: #{tpu_custom_call.1} parent=5 // pred_region
      %s125 = ssub.s32 %s8, 1
    $region12: #{tpu_custom_call.1} parent=5 // pred_fallthru
      _
    %p126 = scmp.lt.s32.totalorder %s8, 48
    // Predicated region
    $region13: #{tpu_custom_call.1} parent=5 // pred_check
      %p127 = pneg %p126
    $region14: #{tpu_custom_call.1} parent=5 // pred_check_branch
      %129 = sbr.rel (%p127) target = $region16
    $region15: #{tpu_custom_call.1} parent=5 // pred_region
      // Predicated region
      $region17: #{tpu_custom_call.1} parent=15 // pred_check
        %p130 = pneg %p51
      $region18: #{tpu_custom_call.1} parent=15 // pred_check_branch
        %132 = sbr.rel (%p130) target = $region20
      $region19: #{tpu_custom_call.1} parent=15 // pred_region
        %s133 = sadd.s32 %s16, %s17
        %p134 = scmp.lt.s32.totalorder %s15, 1
        %s135 = scalar_select %p134, %s15, 1
        %p136 = scmp.lt.s32.totalorder %s133, 9
        %s137 = scalar_select %p136, %s133, 9
        %s138 = smul.addr %s137, 43
        %s139 = smul.addr %s135, 430
        %s140 = sadd.s32 %s138, %s139
        %s141 = smul.addr %s140, 8
        %s142 = scalar_lea.vmem %s0, %s141
        %s143 = sadd.s32 %s16, %s17
      $region20: #{tpu_custom_call.1} parent=15 // pred_fallthru
        _
      // Predicated region
      $region21: #{tpu_custom_call.1} parent=15 // pred_check
        %p144 = pneg %p77
      $region22: #{tpu_custom_call.1} parent=15 // pred_check_branch
        %146 = sbr.rel (%p144) target = $region24
      $region23: #{tpu_custom_call.1} parent=15 // pred_region
        %p147 = scmp.lt.s32.totalorder %s17, 2
        %s148 = scalar_select %p147, %s17, 2
        %s149 = smul.addr %s148, 9
        %s150 = smul.addr %s149, 8
        %s151 = scalar_lea.vmem %s1, %s150
      $region24: #{tpu_custom_call.1} parent=15 // pred_fallthru
        _
    $region16: #{tpu_custom_call.1} parent=5 // pred_fallthru
      _
    %p152 = scmp.le.s32.totalorder 1, %s8
    %p153 = scmp.lt.s32.totalorder %s8, 49
    %p154 = pnand %p152, %p153
    %p155 = pneg %p154
    // Predicated region
    $region25: #{tpu_custom_call.1} parent=5 // pred_check
      _
    $region26: #{tpu_custom_call.1} parent=5 // pred_check_branch
      %157 = sbr.rel (%p154) target = $region28
    $region27: #{tpu_custom_call.1} parent=5 // pred_region
      %s158 = ssub.s32 %s8, 1
      %s159 = sadd.s32 %s19, %s20
      %p160 = scmp.lt.s32.totalorder %s18, 1
      %s161 = scalar_select %p160, %s18, 1
      %p162 = scmp.lt.s32.totalorder %s159, 9
      %s163 = scalar_select %p162, %s159, 9
      %s164 = smul.addr %s163, 43
      %s165 = smul.addr %s161, 430
      %s166 = sadd.s32 %s164, %s165
      %s167 = smul.addr %s166, 8
      %s168 = scalar_lea.vmem %s0, %s167
      %p169 = pneg %p57
      %p170 = pneg %p54
      %p171 = scmp.lt.s32.totalorder %s20, 2
      %s172 = scalar_select %p171, %s20, 2
      %s173 = smul.addr %s172, 9
      %s174 = smul.addr %s173, 8
      %s175 = scalar_lea.vmem %s1, %s174
      %p176 = pneg %p83
      %p177 = pneg %p80
      %p178 = pneg %p111
      %p179 = pneg %p108
      %p180 = scmp.lt.s32.totalorder %s18, 1
      %s181 = scalar_select %p180, %s18, 1
      %p182 = scmp.lt.s32.totalorder %s19, 7
      %s183 = scalar_select %p182, %s19, 7
      %s184 = smul.addr %s183, 36
      %s185 = smul.addr %s181, 288
      %s186 = sadd.s32 %s184, %s185
      %s187 = smul.addr %s186, 8
      %s188 = scalar_lea.vmem %s2, %s187
      %s189 = sadd.s32 %s19, %s20
      %p190 = scmp.lt.s32.totalorder %s18, 1
      %s191 = scalar_select %p190, %s18, 1
      %p192 = scmp.lt.s32.totalorder %s189, 9
      %s193 = scalar_select %p192, %s189, 9
      %s194 = smul.addr %s193, 43
      %s195 = smul.addr %s191, 430
      %s196 = sadd.s32 %s194, %s195
      %s197 = smul.addr %s196, 8
      %s198 = scalar_lea.vmem %s0, %s197
      %s199 = sadd.s32 %s19, %s20
      %p200 = scmp.lt.s32.totalorder %s20, 2
      %s201 = scalar_select %p200, %s20, 2
      %s202 = smul.addr %s201, 9
      %s203 = smul.addr %s202, 8
      %s204 = scalar_lea.vmem %s1, %s203
      %p205 = scmp.lt.s32.totalorder %s18, 1
      %s206 = scalar_select %p205, %s18, 1
      %p207 = scmp.lt.s32.totalorder %s19, 7
      %s208 = scalar_select %p207, %s19, 7
      %s209 = smul.addr %s208, 36
      %s210 = smul.addr %s206, 288
      %s211 = sadd.s32 %s209, %s210
      %s212 = smul.addr %s211, 8
      %s213 = scalar_lea.vmem %s2, %s212
      %v214 = vld [vmem:[%s198] sm:$0xff]
      %v215 = vld [vmem:[%s198 + $0x8] sm:$0xff]
      %v216 = vld [vmem:[%s198 + $0x10] sm:$0xff]
      %v217 = vld [vmem:[%s198 + $0x18] sm:$0xff]
      %v218 = vld [vmem:[%s198 + $0x20] sm:$0xff]
      %v219 = vld [vmem:[%s198 + $0x28] sm:$0xff]
      %v220 = vld [vmem:[%s198 + $0x30] sm:$0xff]
      %v221 = vld [vmem:[%s198 + $0x38] sm:$0xff]
      %v222 = vld [vmem:[%s198 + $0x40] sm:$0xff]
      %v223 = vld [vmem:[%s198 + $0x48] sm:$0xff]
      %v224 = vld [vmem:[%s198 + $0x50] sm:$0xff]
      %v225 = vld [vmem:[%s198 + $0x58] sm:$0xff]
      %v226 = vld [vmem:[%s198 + $0x60] sm:$0xff]
      %v227 = vld [vmem:[%s198 + $0x68] sm:$0xff]
      %v228 = vld [vmem:[%s198 + $0x70] sm:$0xff]
      %v229 = vld [vmem:[%s198 + $0x78] sm:$0xff]
      %v230 = vld [vmem:[%s198 + $0x80] sm:$0xff]
      %v231 = vld [vmem:[%s198 + $0x88] sm:$0xff]
      %v232 = vld [vmem:[%s198 + $0x90] sm:$0xff]
      %v233 = vld [vmem:[%s198 + $0x98] sm:$0xff]
      %v234 = vld [vmem:[%s198 + $0xa0] sm:$0xff]
      %v235 = vld [vmem:[%s198 + $0xa8] sm:$0xff]
      %v236 = vld [vmem:[%s198 + $0xb0] sm:$0xff]
      %v237 = vld [vmem:[%s198 + $0xb8] sm:$0xff]
      %v238 = vld [vmem:[%s198 + $0xc0] sm:$0xff]
      %v239 = vld [vmem:[%s198 + $0xc8] sm:$0xff]
      %v240 = vld [vmem:[%s198 + $0xd0] sm:$0xff]
      %v241 = vld [vmem:[%s198 + $0xd8] sm:$0xff]
      %v242 = vld [vmem:[%s198 + $0xe0] sm:$0xff]
      %v243 = vld [vmem:[%s198 + $0xe8] sm:$0xff]
      %v244 = vld [vmem:[%s198 + $0xf0] sm:$0xff]
      %v245 = vld [vmem:[%s198 + $0xf8] sm:$0xff]
      %v246 = vld [vmem:[%s198 + $0x100] sm:$0xff]
      %v247 = vld [vmem:[%s198 + $0x108] sm:$0xff]
      %v248 = vld [vmem:[%s198 + $0x110] sm:$0xff]
      %v249 = vld [vmem:[%s198 + $0x118] sm:$0xff]
      %v250 = vld [vmem:[%s204] sm:$0xff]
      %v251 = vld [vmem:[%s198 + $0x1] sm:$0xff]
      %v252 = vld [vmem:[%s198 + $0x9] sm:$0xff]
      %v253 = vld [vmem:[%s198 + $0x11] sm:$0xff]
      %v254 = vld [vmem:[%s198 + $0x19] sm:$0xff]
      %v255 = vld [vmem:[%s198 + $0x21] sm:$0xff]
      %v256 = vld [vmem:[%s198 + $0x29] sm:$0xff]
      %v257 = vld [vmem:[%s198 + $0x31] sm:$0xff]
      %v258 = vld [vmem:[%s198 + $0x39] sm:$0xff]
      %v259 = vld [vmem:[%s198 + $0x41] sm:$0xff]
      %v260 = vld [vmem:[%s198 + $0x49] sm:$0xff]
      %v261 = vld [vmem:[%s198 + $0x51] sm:$0xff]
      %v262 = vld [vmem:[%s198 + $0x59] sm:$0xff]
      %v263 = vld [vmem:[%s198 + $0x61] sm:$0xff]
      %v264 = vld [vmem:[%s198 + $0x69] sm:$0xff]
      %v265 = vld [vmem:[%s198 + $0x71] sm:$0xff]
      %v266 = vld [vmem:[%s198 + $0x79] sm:$0xff]
      %v267 = vld [vmem:[%s198 + $0x81] sm:$0xff]
      %v268 = vld [vmem:[%s198 + $0x89] sm:$0xff]
      %v269 = vld [vmem:[%s198 + $0x91] sm:$0xff]
      %v270 = vld [vmem:[%s198 + $0x99] sm:$0xff]
      %v271 = vld [vmem:[%s198 + $0xa1] sm:$0xff]
      %v272 = vld [vmem:[%s198 + $0xa9] sm:$0xff]
      %v273 = vld [vmem:[%s198 + $0xb1] sm:$0xff]
      %v274 = vld [vmem:[%s198 + $0xb9] sm:$0xff]
      %v275 = vld [vmem:[%s198 + $0xc1] sm:$0xff]
      %v276 = vld [vmem:[%s198 + $0xc9] sm:$0xff]
      %v277 = vld [vmem:[%s198 + $0xd1] sm:$0xff]
      %v278 = vld [vmem:[%s198 + $0xd9] sm:$0xff]
      %v279 = vld [vmem:[%s198 + $0xe1] sm:$0xff]
      %v280 = vld [vmem:[%s198 + $0xe9] sm:$0xff]
      %v281 = vld [vmem:[%s198 + $0xf1] sm:$0xff]
      %v282 = vld [vmem:[%s198 + $0xf9] sm:$0xff]
      %v283 = vld [vmem:[%s198 + $0x101] sm:$0xff]
      %v284 = vld [vmem:[%s198 + $0x109] sm:$0xff]
      %v285 = vld [vmem:[%s198 + $0x111] sm:$0xff]
      %v286 = vld [vmem:[%s198 + $0x119] sm:$0xff]
      %s287 = scalar_lea.vmem %s204, 8
      %v288 = vld [vmem:[%s287] sm:$0xff]
      %vm289 = vcmask 64512
      %v291 = vsel %vm289, %v251, 0
      %v294 = vsel %vm289, %v252, 0
      %v297 = vsel %vm289, %v253, 0
      %v300 = vsel %vm289, %v254, 0
      %v303 = vsel %vm289, %v255, 0
      %v306 = vsel %vm289, %v256, 0
      %v309 = vsel %vm289, %v257, 0
      %v312 = vsel %vm289, %v258, 0
      %v315 = vsel %vm289, %v259, 0
      %v318 = vsel %vm289, %v260, 0
      %v321 = vsel %vm289, %v261, 0
      %v324 = vsel %vm289, %v262, 0
      %v327 = vsel %vm289, %v263, 0
      %v330 = vsel %vm289, %v264, 0
      %v333 = vsel %vm289, %v265, 0
      %v336 = vsel %vm289, %v266, 0
      %v339 = vsel %vm289, %v267, 0
      %v342 = vsel %vm289, %v268, 0
      %v345 = vsel %vm289, %v269, 0
      %v348 = vsel %vm289, %v270, 0
      %v351 = vsel %vm289, %v271, 0
      %v354 = vsel %vm289, %v272, 0
      %v357 = vsel %vm289, %v273, 0
      %v360 = vsel %vm289, %v274, 0
      %v363 = vsel %vm289, %v275, 0
      %v366 = vsel %vm289, %v276, 0
      %v369 = vsel %vm289, %v277, 0
      %v372 = vsel %vm289, %v278, 0
      %v375 = vsel %vm289, %v279, 0
      %v378 = vsel %vm289, %v280, 0
      %v381 = vsel %vm289, %v281, 0
      %v384 = vsel %vm289, %v282, 0
      %v387 = vsel %vm289, %v283, 0
      %v390 = vsel %vm289, %v284, 0
      %v393 = vsel %vm289, %v285, 0
      %v396 = vsel %vm289, %v286, 0
      %398 = vmatprep.subr.mxu0 0.0
      %399 = vmatpush1.msra.mxu0 %v288
      %400 = vmatprep.subr.mxu0 0.0
      %401 = vmatpush1.msra.mxu0 0.0
      %402 = vmatprep.subr.mxu0 0.0
      %403 = vmatpush1.msra.mxu0 0.0
      %404 = vmatprep.subr.mxu0 0.0
      %405 = vmatpush1.msra.mxu0 0.0
      %406 = vmatprep.subr.mxu0 0.0
      %407 = vmatpush1.msra.mxu0 0.0
      %408 = vmatprep.subr.mxu0 0.0
      %409 = vmatpush1.msra.mxu0 0.0
      %410 = vmatprep.subr.mxu0 0.0
      %411 = vmatpush1.msra.mxu0 0.0
      %412 = vmatprep.subr.mxu0 0.0
      %413 = vmatpush1.msra.mxu0 0.0
      %414 = vmatprep.subr.mxu0 0.0
      %415 = vmatpush1.msra.mxu0 0.0
      %416 = vmatprep.subr.mxu0 0.0
      %417 = vmatpush1.msra.mxu0 0.0
      %418 = vmatprep.subr.mxu0 0.0
      %419 = vmatpush1.msra.mxu0 0.0
      %420 = vmatprep.subr.mxu0 0.0
      %421 = vmatpush1.msra.mxu0 0.0
      %422 = vmatprep.subr.mxu0 0.0
      %423 = vmatpush1.msra.mxu0 0.0
      %424 = vmatprep.subr.mxu0 0.0
      %425 = vmatpush1.msra.mxu0 0.0
      %426 = vmatprep.subr.mxu0 0.0
      %427 = vmatpush1.msra.mxu0 0.0
      %428 = vmatprep.subr.mxu0 0.0
      %429 = vmatpush1.msra.mxu0 0.0
      %430 = vmatprep.subr.mxu0 0.0
      %431 = vmatpush1.msra.mxu0 0.0
      %432 = vmatprep.subr.mxu0 0.0
      %433 = vmatpush1.msra.mxu0 0.0
      %434 = vmatprep.subr.mxu0 0.0
      %435 = vmatpush1.msra.mxu0 0.0
      %436 = vmatprep.subr.mxu0 0.0
      %437 = vmatpush1.msra.mxu0 0.0
      %438 = vmatprep.subr.mxu0 0.0
      %439 = vmatpush1.msra.mxu0 0.0
      %440 = vmatprep.subr.mxu0 0.0
      %441 = vmatpush1.msra.mxu0 0.0
      %442 = vmatprep.subr.mxu0 0.0
      %443 = vmatpush1.msra.mxu0 0.0
      %444 = vmatprep.subr.mxu0 0.0
      %445 = vmatpush1.msra.mxu0 0.0
      %446 = vmatprep.subr.mxu0 0.0
      %447 = vmatpush1.msra.mxu0 0.0
      %448 = vmatprep.subr.mxu0 0.0
      %449 = vmatpush1.msra.mxu0 0.0
      %450 = vmatprep.subr.mxu0 0.0
      %451 = vmatpush1.msra.mxu0 0.0
      %452 = vmatprep.subr.mxu0 0.0
      %453 = vmatpush1.msra.mxu0 0.0
      %454 = vmatprep.subr.mxu0 0.0
      %455 = vmatpush1.msra.mxu0 0.0
      %456 = vmatprep.subr.mxu0 0.0
      %457 = vmatpush1.msra.mxu0 0.0
      %458 = vmatprep.subr.mxu0 0.0
      %459 = vmatpush1.msra.mxu0 0.0
      %460 = vmatprep.subr.mxu0 0.0
      %461 = vmatpush1.msra.mxu0 0.0
      %462 = vmatprep.mubr.f32.mxu0 0.0
      %463 = vmatmul.mubr.f32.gmra.mrb[0].mxu0 %v291
      %v464 = vpop.f32.mrb[0].mxu0
      %v465 = vadd.f32 0.0, %v464
      %v466 = vpop.f32.mrb[0].mxu0
      %467 = vmatprep.mubr.f32.mxu0 0.0
      %468 = vmatmul.mubr.f32.gmra.mrb[0].mxu0 %v294
      %v469 = vpop.f32.mrb[0].mxu0
      %v470 = vadd.f32 0.0, %v469
      %v471 = vpop.f32.mrb[0].mxu0
      %472 = vmatprep.mubr.f32.mxu0 0.0
      %473 = vmatmul.mubr.f32.gmra.mrb[0].mxu0 %v297
      %v474 = vpop.f32.mrb[0].mxu0
      %v475 = vadd.f32 0.0, %v474
      %v476 = vpop.f32.mrb[0].mxu0
      %477 = vmatprep.mubr.f32.mxu0 0.0
      %478 = vmatmul.mubr.f32.gmra.mrb[0].mxu0 %v300
      %v479 = vpop.f32.mrb[0].mxu0
      %v480 = vadd.f32 0.0, %v479
      %v481 = vpop.f32.mrb[0].mxu0
      %482 = vmatprep.mubr.f32.mxu0 0.0
      %483 = vmatmul.mubr.f32.gmra.mrb[0].mxu0 %v303
      %v484 = vpop.f32.mrb[0].mxu0
      %v485 = vadd.f32 0.0, %v484
      %v486 = vpop.f32.mrb[0].mxu0
      %487 = vmatprep.mubr.f32.mxu0 0.0
      %488 = vmatmul.mubr.f32.gmra.mrb[0].mxu0 %v306
      %v489 = vpop.f32.mrb[0].mxu0
      %v490 = vadd.f32 0.0, %v489
      %v491 = vpop.f32.mrb[0].mxu0
      %492 = vmatprep.mubr.f32.mxu0 0.0
      %493 = vmatmul.mubr.f32.gmra.mrb[0].mxu0 %v309
      %v494 = vpop.f32.mrb[0].mxu0
      %v495 = vadd.f32 0.0, %v494
      %v496 = vpop.f32.mrb[0].mxu0
      %497 = vmatprep.mubr.f32.mxu0 0.0
      %498 = vmatmul.mubr.f32.gmra.mrb[0].mxu0 %v312
      %v499 = vpop.f32.mrb[0].mxu0
      %v500 = vadd.f32 0.0, %v499
      %v501 = vpop.f32.mrb[0].mxu0
      %502 = vmatprep.mubr.f32.mxu0 0.0
      %503 = vmatmul.mubr.f32.gmra.mrb[0].mxu0 %v315
      %v504 = vpop.f32.mrb[0].mxu0
      %v505 = vadd.f32 0.0, %v504
      %v506 = vpop.f32.mrb[0].mxu0
      %507 = vmatprep.mubr.f32.mxu0 0.0
      %508 = vmatmul.mubr.f32.gmra.mrb[0].mxu0 %v318
      %v509 = vpop.f32.mrb[0].mxu0
      %v510 = vadd.f32 0.0, %v509
      %v511 = vpop.f32.mrb[0].mxu0
      %512 = vmatprep.mubr.f32.mxu0 0.0
      %513 = vmatmul.mubr.f32.gmra.mrb[0].mxu0 %v321
      %v514 = vpop.f32.mrb[0].mxu0
      %v515 = vadd.f32 0.0, %v514
      %v516 = vpop.f32.mrb[0].mxu0
      %517 = vmatprep.mubr.f32.mxu0 0.0
      %518 = vmatmul.mubr.f32.gmra.mrb[0].mxu0 %v324
      %v519 = vpop.f32.mrb[0].mxu0
      %v520 = vadd.f32 0.0, %v519
      %v521 = vpop.f32.mrb[0].mxu0
      %522 = vmatprep.mubr.f32.mxu0 0.0
      %523 = vmatmul.mubr.f32.gmra.mrb[0].mxu0 %v327
      %v524 = vpop.f32.mrb[0].mxu0
      %v525 = vadd.f32 0.0, %v524
      %v526 = vpop.f32.mrb[0].mxu0
      %527 = vmatprep.mubr.f32.mxu0 0.0
      %528 = vmatmul.mubr.f32.gmra.mrb[0].mxu0 %v330
      %v529 = vpop.f32.mrb[0].mxu0
      %v530 = vadd.f32 0.0, %v529
      %v531 = vpop.f32.mrb[0].mxu0
      %532 = vmatprep.mubr.f32.mxu0 0.0
      %533 = vmatmul.mubr.f32.gmra.mrb[0].mxu0 %v333
      %v534 = vpop.f32.mrb[0].mxu0
      %v535 = vadd.f32 0.0, %v534
      %v536 = vpop.f32.mrb[0].mxu0
      %537 = vmatprep.mubr.f32.mxu0 0.0
      %538 = vmatmul.mubr.f32.gmra.mrb[0].mxu0 %v336
      %v539 = vpop.f32.mrb[0].mxu0
      %v540 = vadd.f32 0.0, %v539
      %v541 = vpop.f32.mrb[0].mxu0
      %542 = vmatprep.mubr.f32.mxu0 0.0
      %543 = vmatmul.mubr.f32.gmra.mrb[0].mxu0 %v339
      %v544 = vpop.f32.mrb[0].mxu0
      %v545 = vadd.f32 0.0, %v544
      %v546 = vpop.f32.mrb[0].mxu0
      %547 = vmatprep.mubr.f32.mxu0 0.0
      %548 = vmatmul.mubr.f32.gmra.mrb[0].mxu0 %v342
      %v549 = vpop.f32.mrb[0].mxu0
      %v550 = vadd.f32 0.0, %v549
      %v551 = vpop.f32.mrb[0].mxu0
      %552 = vmatprep.mubr.f32.mxu0 0.0
      %553 = vmatmul.mubr.f32.gmra.mrb[0].mxu0 %v345
      %v554 = vpop.f32.mrb[0].mxu0
      %v555 = vadd.f32 0.0, %v554
      %v556 = vpop.f32.mrb[0].mxu0
      %557 = vmatprep.mubr.f32.mxu0 0.0
      %558 = vmatmul.mubr.f32.gmra.mrb[0].mxu0 %v348
      %v559 = vpop.f32.mrb[0].mxu0
      %v560 = vadd.f32 0.0, %v559
      %v561 = vpop.f32.mrb[0].mxu0
      %562 = vmatprep.mubr.f32.mxu0 0.0
      %563 = vmatmul.mubr.f32.gmra.mrb[0].mxu0 %v351
      %v564 = vpop.f32.mrb[0].mxu0
      %v565 = vadd.f32 0.0, %v564
      %v566 = vpop.f32.mrb[0].mxu0
      %567 = vmatprep.mubr.f32.mxu0 0.0
      %568 = vmatmul.mubr.f32.gmra.mrb[0].mxu0 %v354
      %v569 = vpop.f32.mrb[0].mxu0
      %v570 = vadd.f32 0.0, %v569
      %v571 = vpop.f32.mrb[0].mxu0
      %572 = vmatprep.mubr.f32.mxu0 0.0
      %573 = vmatmul.mubr.f32.gmra.mrb[0].mxu0 %v357
      %v574 = vpop.f32.mrb[0].mxu0
      %v575 = vadd.f32 0.0, %v574
      %v576 = vpop.f32.mrb[0].mxu0
      %577 = vmatprep.mubr.f32.mxu0 0.0
      %578 = vmatmul.mubr.f32.gmra.mrb[0].mxu0 %v360
      %v579 = vpop.f32.mrb[0].mxu0
      %v580 = vadd.f32 0.0, %v579
      %v581 = vpop.f32.mrb[0].mxu0
      %582 = vmatprep.mubr.f32.mxu0 0.0
      %583 = vmatmul.mubr.f32.gmra.mrb[0].mxu0 %v363
      %v584 = vpop.f32.mrb[0].mxu0
      %v585 = vadd.f32 0.0, %v584
      %v586 = vpop.f32.mrb[0].mxu0
      %587 = vmatprep.mubr.f32.mxu0 0.0
      %588 = vmatmul.mubr.f32.gmra.mrb[0].mxu0 %v366
      %v589 = vpop.f32.mrb[0].mxu0
      %v590 = vadd.f32 0.0, %v589
      %v591 = vpop.f32.mrb[0].mxu0
      %592 = vmatprep.mubr.f32.mxu0 0.0
      %593 = vmatmul.mubr.f32.gmra.mrb[0].mxu0 %v369
      %v594 = vpop.f32.mrb[0].mxu0
      %v595 = vadd.f32 0.0, %v594
      %v596 = vpop.f32.mrb[0].mxu0
      %597 = vmatprep.mubr.f32.mxu0 0.0
      %598 = vmatmul.mubr.f32.gmra.mrb[0].mxu0 %v372
      %v599 = vpop.f32.mrb[0].mxu0
      %v600 = vadd.f32 0.0, %v599
      %v601 = vpop.f32.mrb[0].mxu0
      %602 = vmatprep.mubr.f32.mxu0 0.0
      %603 = vmatmul.mubr.f32.gmra.mrb[0].mxu0 %v375
      %v604 = vpop.f32.mrb[0].mxu0
      %v605 = vadd.f32 0.0, %v604
      %v606 = vpop.f32.mrb[0].mxu0
      %607 = vmatprep.mubr.f32.mxu0 0.0
      %608 = vmatmul.mubr.f32.gmra.mrb[0].mxu0 %v378
      %v609 = vpop.f32.mrb[0].mxu0
      %v610 = vadd.f32 0.0, %v609
      %v611 = vpop.f32.mrb[0].mxu0
      %612 = vmatprep.mubr.f32.mxu0 0.0
      %613 = vmatmul.mubr.f32.gmra.mrb[0].mxu0 %v381
      %v614 = vpop.f32.mrb[0].mxu0
      %v615 = vadd.f32 0.0, %v614
      %v616 = vpop.f32.mrb[0].mxu0
      %617 = vmatprep.mubr.f32.mxu0 0.0
      %618 = vmatmul.mubr.f32.gmra.mrb[0].mxu0 %v384
      %v619 = vpop.f32.mrb[0].mxu0
      %v620 = vadd.f32 0.0, %v619
      %v621 = vpop.f32.mrb[0].mxu0
      %622 = vmatprep.mubr.f32.mxu0 0.0
      %623 = vmatmul.mubr.f32.gmra.mrb[0].mxu0 %v387
      %v624 = vpop.f32.mrb[0].mxu0
      %v625 = vadd.f32 0.0, %v624
      %v626 = vpop.f32.mrb[0].mxu0
      %627 = vmatprep.mubr.f32.mxu0 0.0
      %628 = vmatmul.mubr.f32.gmra.mrb[0].mxu0 %v390
      %v629 = vpop.f32.mrb[0].mxu0
      %v630 = vadd.f32 0.0, %v629
      %v631 = vpop.f32.mrb[0].mxu0
      %632 = vmatprep.mubr.f32.mxu0 0.0
      %633 = vmatmul.mubr.f32.gmra.mrb[0].mxu0 %v393
      %v634 = vpop.f32.mrb[0].mxu0
      %v635 = vadd.f32 0.0, %v634
      %v636 = vpop.f32.mrb[0].mxu0
      %637 = vmatprep.mubr.f32.mxu0 0.0
      %638 = vmatmul.mubr.f32.gmra.mrb[0].mxu0 %v396
      %v639 = vpop.f32.mrb[0].mxu0
      %v640 = vadd.f32 0.0, %v639
      %v641 = vpop.f32.mrb[0].mxu0
      %642 = vdwg.mxu0
      %v644 = vsel %vm289, %v214, 0
      %v647 = vsel %vm289, %v215, 0
      %v650 = vsel %vm289, %v216, 0
      %v653 = vsel %vm289, %v217, 0
      %v656 = vsel %vm289, %v218, 0
      %v659 = vsel %vm289, %v219, 0
      %v662 = vsel %vm289, %v220, 0
      %v665 = vsel %vm289, %v221, 0
      %v668 = vsel %vm289, %v222, 0
      %v671 = vsel %vm289, %v223, 0
      %v674 = vsel %vm289, %v224, 0
      %v677 = vsel %vm289, %v225, 0
      %v680 = vsel %vm289, %v226, 0
      %v683 = vsel %vm289, %v227, 0
      %v686 = vsel %vm289, %v228, 0
      %v689 = vsel %vm289, %v229, 0
      %v692 = vsel %vm289, %v230, 0
      %v695 = vsel %vm289, %v231, 0
      %v698 = vsel %vm289, %v232, 0
      %v701 = vsel %vm289, %v233, 0
      %v704 = vsel %vm289, %v234, 0
      %v707 = vsel %vm289, %v235, 0
      %v710 = vsel %vm289, %v236, 0
      %v713 = vsel %vm289, %v237, 0
      %v716 = vsel %vm289, %v238, 0
      %v719 = vsel %vm289, %v239, 0
      %v722 = vsel %vm289, %v240, 0
      %v725 = vsel %vm289, %v241, 0
      %v728 = vsel %vm289, %v242, 0
      %v731 = vsel %vm289, %v243, 0
      %v734 = vsel %vm289, %v244, 0
      %v737 = vsel %vm289, %v245, 0
      %v740 = vsel %vm289, %v246, 0
      %v743 = vsel %vm289, %v247, 0
      %v746 = vsel %vm289, %v248, 0
      %v749 = vsel %vm289, %v249, 0
      %751 = vmatprep.subr.mxu0 0.0
      %752 = vmatpush1.msra.mxu0 %v250
      %753 = vmatprep.subr.mxu0 0.0
      %754 = vmatpush1.msra.mxu0 0.0
      %755 = vmatprep.subr.mxu0 0.0
      %756 = vmatpush1.msra.mxu0 0.0
      %757 = vmatprep.subr.mxu0 0.0
      %758 = vmatpush1.msra.mxu0 0.0
      %759 = vmatprep.subr.mxu0 0.0
      %760 = vmatpush1.msra.mxu0 0.0
      %761 = vmatprep.subr.mxu0 0.0
      %762 = vmatpush1.msra.mxu0 0.0
      %763 = vmatprep.subr.mxu0 0.0
      %764 = vmatpush1.msra.mxu0 0.0
      %765 = vmatprep.subr.mxu0 0.0
      %766 = vmatpush1.msra.mxu0 0.0
      %767 = vmatprep.subr.mxu0 0.0
      %768 = vmatpush1.msra.mxu0 0.0
      %769 = vmatprep.subr.mxu0 0.0
      %770 = vmatpush1.msra.mxu0 0.0
      %771 = vmatprep.subr.mxu0 0.0
      %772 = vmatpush1.msra.mxu0 0.0
      %773 = vmatprep.subr.mxu0 0.0
      %774 = vmatpush1.msra.mxu0 0.0
      %775 = vmatprep.subr.mxu0 0.0
      %776 = vmatpush1.msra.mxu0 0.0
      %777 = vmatprep.subr.mxu0 0.0
      %778 = vmatpush1.msra.mxu0 0.0
      %779 = vmatprep.subr.mxu0 0.0
      %780 = vmatpush1.msra.mxu0 0.0
      %781 = vmatprep.subr.mxu0 0.0
      %782 = vmatpush1.msra.mxu0 0.0
      %783 = vmatprep.subr.mxu0 0.0
      %784 = vmatpush1.msra.mxu0 0.0
      %785 = vmatprep.subr.mxu0 0.0
      %786 = vmatpush1.msra.mxu0 0.0
      %787 = vmatprep.subr.mxu0 0.0
      %788 = vmatpush1.msra.mxu0 0.0
      %789 = vmatprep.subr.mxu0 0.0
      %790 = vmatpush1.msra.mxu0 0.0
      %791 = vmatprep.subr.mxu0 0.0
      %792 = vmatpush1.msra.mxu0 0.0
      %793 = vmatprep.subr.mxu0 0.0
      %794 = vmatpush1.msra.mxu0 0.0
      %795 = vmatprep.subr.mxu0 0.0
      %796 = vmatpush1.msra.mxu0 0.0
      %797 = vmatprep.subr.mxu0 0.0
      %798 = vmatpush1.msra.mxu0 0.0
      %799 = vmatprep.subr.mxu0 0.0
      %800 = vmatpush1.msra.mxu0 0.0
      %801 = vmatprep.subr.mxu0 0.0
      %802 = vmatpush1.msra.mxu0 0.0
      %803 = vmatprep.subr.mxu0 0.0
      %804 = vmatpush1.msra.mxu0 0.0
      %805 = vmatprep.subr.mxu0 0.0
      %806 = vmatpush1.msra.mxu0 0.0
      %807 = vmatprep.subr.mxu0 0.0
      %808 = vmatpush1.msra.mxu0 0.0
      %809 = vmatprep.subr.mxu0 0.0
      %810 = vmatpush1.msra.mxu0 0.0
      %811 = vmatprep.subr.mxu0 0.0
      %812 = vmatpush1.msra.mxu0 0.0
      %813 = vmatprep.subr.mxu0 0.0
      %814 = vmatpush1.msra.mxu0 0.0
      %815 = vmatprep.mubr.f32.mxu0 0.0
      %816 = vmatmul.mubr.f32.gmra.mrb[0].mxu0 %v644
      %v817 = vpop.f32.mrb[0].mxu0
      %v818 = vadd.f32 %v465, %v817
      %v819 = vpop.f32.mrb[0].mxu0
      %820 = vmatprep.mubr.f32.mxu0 0.0
      %821 = vmatmul.mubr.f32.gmra.mrb[0].mxu0 %v647
      %v822 = vpop.f32.mrb[0].mxu0
      %v823 = vadd.f32 %v470, %v822
      %v824 = vpop.f32.mrb[0].mxu0
      %825 = vmatprep.mubr.f32.mxu0 0.0
      %826 = vmatmul.mubr.f32.gmra.mrb[0].mxu0 %v650
      %v827 = vpop.f32.mrb[0].mxu0
      %v828 = vadd.f32 %v475, %v827
      %v829 = vpop.f32.mrb[0].mxu0
      %830 = vmatprep.mubr.f32.mxu0 0.0
      %831 = vmatmul.mubr.f32.gmra.mrb[0].mxu0 %v653
      %v832 = vpop.f32.mrb[0].mxu0
      %v833 = vadd.f32 %v480, %v832
      %v834 = vpop.f32.mrb[0].mxu0
      %835 = vmatprep.mubr.f32.mxu0 0.0
      %836 = vmatmul.mubr.f32.gmra.mrb[0].mxu0 %v656
      %v837 = vpop.f32.mrb[0].mxu0
      %v838 = vadd.f32 %v485, %v837
      %v839 = vpop.f32.mrb[0].mxu0
      %840 = vmatprep.mubr.f32.mxu0 0.0
      %841 = vmatmul.mubr.f32.gmra.mrb[0].mxu0 %v659
      %v842 = vpop.f32.mrb[0].mxu0
      %v843 = vadd.f32 %v490, %v842
      %v844 = vpop.f32.mrb[0].mxu0
      %845 = vmatprep.mubr.f32.mxu0 0.0
      %846 = vmatmul.mubr.f32.gmra.mrb[0].mxu0 %v662
      %v847 = vpop.f32.mrb[0].mxu0
      %v848 = vadd.f32 %v495, %v847
      %v849 = vpop.f32.mrb[0].mxu0
      %850 = vmatprep.mubr.f32.mxu0 0.0
      %851 = vmatmul.mubr.f32.gmra.mrb[0].mxu0 %v665
      %v852 = vpop.f32.mrb[0].mxu0
      %v853 = vadd.f32 %v500, %v852
      %v854 = vpop.f32.mrb[0].mxu0
      %855 = vmatprep.mubr.f32.mxu0 0.0
      %856 = vmatmul.mubr.f32.gmra.mrb[0].mxu0 %v668
      %v857 = vpop.f32.mrb[0].mxu0
      %v858 = vadd.f32 %v505, %v857
      %v859 = vpop.f32.mrb[0].mxu0
      %860 = vmatprep.mubr.f32.mxu0 0.0
      %861 = vmatmul.mubr.f32.gmra.mrb[0].mxu0 %v671
      %v862 = vpop.f32.mrb[0].mxu0
      %v863 = vadd.f32 %v510, %v862
      %v864 = vpop.f32.mrb[0].mxu0
      %865 = vmatprep.mubr.f32.mxu0 0.0
      %866 = vmatmul.mubr.f32.gmra.mrb[0].mxu0 %v674
      %v867 = vpop.f32.mrb[0].mxu0
      %v868 = vadd.f32 %v515, %v867
      %v869 = vpop.f32.mrb[0].mxu0
      %870 = vmatprep.mubr.f32.mxu0 0.0
      %871 = vmatmul.mubr.f32.gmra.mrb[0].mxu0 %v677
      %v872 = vpop.f32.mrb[0].mxu0
      %v873 = vadd.f32 %v520, %v872
      %v874 = vpop.f32.mrb[0].mxu0
      %875 = vmatprep.mubr.f32.mxu0 0.0
      %876 = vmatmul.mubr.f32.gmra.mrb[0].mxu0 %v680
      %v877 = vpop.f32.mrb[0].mxu0
      %v878 = vadd.f32 %v525, %v877
      %v879 = vpop.f32.mrb[0].mxu0
      %880 = vmatprep.mubr.f32.mxu0 0.0
      %881 = vmatmul.mubr.f32.gmra.mrb[0].mxu0 %v683
      %v882 = vpop.f32.mrb[0].mxu0
      %v883 = vadd.f32 %v530, %v882
      %v884 = vpop.f32.mrb[0].mxu0
      %885 = vmatprep.mubr.f32.mxu0 0.0
      %886 = vmatmul.mubr.f32.gmra.mrb[0].mxu0 %v686
      %v887 = vpop.f32.mrb[0].mxu0
      %v888 = vadd.f32 %v535, %v887
      %v889 = vpop.f32.mrb[0].mxu0
      %890 = vmatprep.mubr.f32.mxu0 0.0
      %891 = vmatmul.mubr.f32.gmra.mrb[0].mxu0 %v689
      %v892 = vpop.f32.mrb[0].mxu0
      %v893 = vadd.f32 %v540, %v892
      %v894 = vpop.f32.mrb[0].mxu0
      %895 = vmatprep.mubr.f32.mxu0 0.0
      %896 = vmatmul.mubr.f32.gmra.mrb[0].mxu0 %v692
      %v897 = vpop.f32.mrb[0].mxu0
      %v898 = vadd.f32 %v545, %v897
      %v899 = vpop.f32.mrb[0].mxu0
      %900 = vmatprep.mubr.f32.mxu0 0.0
      %901 = vmatmul.mubr.f32.gmra.mrb[0].mxu0 %v695
      %v902 = vpop.f32.mrb[0].mxu0
      %v903 = vadd.f32 %v550, %v902
      %v904 = vpop.f32.mrb[0].mxu0
      %905 = vmatprep.mubr.f32.mxu0 0.0
      %906 = vmatmul.mubr.f32.gmra.mrb[0].mxu0 %v698
      %v907 = vpop.f32.mrb[0].mxu0
      %v908 = vadd.f32 %v555, %v907
      %v909 = vpop.f32.mrb[0].mxu0
      %910 = vmatprep.mubr.f32.mxu0 0.0
      %911 = vmatmul.mubr.f32.gmra.mrb[0].mxu0 %v701
      %v912 = vpop.f32.mrb[0].mxu0
      %v913 = vadd.f32 %v560, %v912
      %v914 = vpop.f32.mrb[0].mxu0
      %915 = vmatprep.mubr.f32.mxu0 0.0
      %916 = vmatmul.mubr.f32.gmra.mrb[0].mxu0 %v704
      %v917 = vpop.f32.mrb[0].mxu0
      %v918 = vadd.f32 %v565, %v917
      %v919 = vpop.f32.mrb[0].mxu0
      %920 = vmatprep.mubr.f32.mxu0 0.0
      %921 = vmatmul.mubr.f32.gmra.mrb[0].mxu0 %v707
      %v922 = vpop.f32.mrb[0].mxu0
      %v923 = vadd.f32 %v570, %v922
      %v924 = vpop.f32.mrb[0].mxu0
      %925 = vmatprep.mubr.f32.mxu0 0.0
      %926 = vmatmul.mubr.f32.gmra.mrb[0].mxu0 %v710
      %v927 = vpop.f32.mrb[0].mxu0
      %v928 = vadd.f32 %v575, %v927
      %v929 = vpop.f32.mrb[0].mxu0
      %930 = vmatprep.mubr.f32.mxu0 0.0
      %931 = vmatmul.mubr.f32.gmra.mrb[0].mxu0 %v713
      %v932 = vpop.f32.mrb[0].mxu0
      %v933 = vadd.f32 %v580, %v932
      %v934 = vpop.f32.mrb[0].mxu0
      %935 = vmatprep.mubr.f32.mxu0 0.0
      %936 = vmatmul.mubr.f32.gmra.mrb[0].mxu0 %v716
      %v937 = vpop.f32.mrb[0].mxu0
      %v938 = vadd.f32 %v585, %v937
      %v939 = vpop.f32.mrb[0].mxu0
      %940 = vmatprep.mubr.f32.mxu0 0.0
      %941 = vmatmul.mubr.f32.gmra.mrb[0].mxu0 %v719
      %v942 = vpop.f32.mrb[0].mxu0
      %v943 = vadd.f32 %v590, %v942
      %v944 = vpop.f32.mrb[0].mxu0
      %945 = vmatprep.mubr.f32.mxu0 0.0
      %946 = vmatmul.mubr.f32.gmra.mrb[0].mxu0 %v722
      %v947 = vpop.f32.mrb[0].mxu0
      %v948 = vadd.f32 %v595, %v947
      %v949 = vpop.f32.mrb[0].mxu0
      %950 = vmatprep.mubr.f32.mxu0 0.0
      %951 = vmatmul.mubr.f32.gmra.mrb[0].mxu0 %v725
      %v952 = vpop.f32.mrb[0].mxu0
      %v953 = vadd.f32 %v600, %v952
      %v954 = vpop.f32.mrb[0].mxu0
      %955 = vmatprep.mubr.f32.mxu0 0.0
      %956 = vmatmul.mubr.f32.gmra.mrb[0].mxu0 %v728
      %v957 = vpop.f32.mrb[0].mxu0
      %v958 = vadd.f32 %v605, %v957
      %v959 = vpop.f32.mrb[0].mxu0
      %960 = vmatprep.mubr.f32.mxu0 0.0
      %961 = vmatmul.mubr.f32.gmra.mrb[0].mxu0 %v731
      %v962 = vpop.f32.mrb[0].mxu0
      %v963 = vadd.f32 %v610, %v962
      %v964 = vpop.f32.mrb[0].mxu0
      %965 = vmatprep.mubr.f32.mxu0 0.0
      %966 = vmatmul.mubr.f32.gmra.mrb[0].mxu0 %v734
      %v967 = vpop.f32.mrb[0].mxu0
      %v968 = vadd.f32 %v615, %v967
      %v969 = vpop.f32.mrb[0].mxu0
      %970 = vmatprep.mubr.f32.mxu0 0.0
      %971 = vmatmul.mubr.f32.gmra.mrb[0].mxu0 %v737
      %v972 = vpop.f32.mrb[0].mxu0
      %v973 = vadd.f32 %v620, %v972
      %v974 = vpop.f32.mrb[0].mxu0
      %975 = vmatprep.mubr.f32.mxu0 0.0
      %976 = vmatmul.mubr.f32.gmra.mrb[0].mxu0 %v740
      %v977 = vpop.f32.mrb[0].mxu0
      %v978 = vadd.f32 %v625, %v977
      %v979 = vpop.f32.mrb[0].mxu0
      %980 = vmatprep.mubr.f32.mxu0 0.0
      %981 = vmatmul.mubr.f32.gmra.mrb[0].mxu0 %v743
      %v982 = vpop.f32.mrb[0].mxu0
      %v983 = vadd.f32 %v630, %v982
      %v984 = vpop.f32.mrb[0].mxu0
      %985 = vmatprep.mubr.f32.mxu0 0.0
      %986 = vmatmul.mubr.f32.gmra.mrb[0].mxu0 %v746
      %v987 = vpop.f32.mrb[0].mxu0
      %v988 = vadd.f32 %v635, %v987
      %v989 = vpop.f32.mrb[0].mxu0
      %990 = vmatprep.mubr.f32.mxu0 0.0
      %991 = vmatmul.mubr.f32.gmra.mrb[0].mxu0 %v749
      %v992 = vpop.f32.mrb[0].mxu0
      %v993 = vadd.f32 %v640, %v992
      %v994 = vpop.f32.mrb[0].mxu0
      %995 = vdwg.mxu0
      %v996 = vld [vmem:[%s198 + $0x2] sm:$0xff]
      %v997 = vld [vmem:[%s198 + $0xa] sm:$0xff]
      %v998 = vld [vmem:[%s198 + $0x12] sm:$0xff]
      %v999 = vld [vmem:[%s198 + $0x1a] sm:$0xff]
      %v1000 = vld [vmem:[%s198 + $0x22] sm:$0xff]
      %v1001 = vld [vmem:[%s198 + $0x2a] sm:$0xff]
      %v1002 = vld [vmem:[%s198 + $0x32] sm:$0xff]
      %v1003 = vld [vmem:[%s198 + $0x3a] sm:$0xff]
      %v1004 = vld [vmem:[%s198 + $0x42] sm:$0xff]
      %v1005 = vld [vmem:[%s198 + $0x4a] sm:$0xff]
      %v1006 = vld [vmem:[%s198 + $0x52] sm:$0xff]
      %v1007 = vld [vmem:[%s198 + $0x5a] sm:$0xff]
      %v1008 = vld [vmem:[%s198 + $0x62] sm:$0xff]
      %v1009 = vld [vmem:[%s198 + $0x6a] sm:$0xff]
      %v1010 = vld [vmem:[%s198 + $0x72] sm:$0xff]
      %v1011 = vld [vmem:[%s198 + $0x7a] sm:$0xff]
      %v1012 = vld [vmem:[%s198 + $0x82] sm:$0xff]
      %v1013 = vld [vmem:[%s198 + $0x8a] sm:$0xff]
      %v1014 = vld [vmem:[%s198 + $0x92] sm:$0xff]
      %v1015 = vld [vmem:[%s198 + $0x9a] sm:$0xff]
      %v1016 = vld [vmem:[%s198 + $0xa2] sm:$0xff]
      %v1017 = vld [vmem:[%s198 + $0xaa] sm:$0xff]
      %v1018 = vld [vmem:[%s198 + $0xb2] sm:$0xff]
      %v1019 = vld [vmem:[%s198 + $0xba] sm:$0xff]
      %v1020 = vld [vmem:[%s198 + $0xc2] sm:$0xff]
      %v1021 = vld [vmem:[%s198 + $0xca] sm:$0xff]
      %v1022 = vld [vmem:[%s198 + $0xd2] sm:$0xff]
      %v1023 = vld [vmem:[%s198 + $0xda] sm:$0xff]
      %v1024 = vld [vmem:[%s198 + $0xe2] sm:$0xff]
      %v1025 = vld [vmem:[%s198 + $0xea] sm:$0xff]
      %v1026 = vld [vmem:[%s198 + $0xf2] sm:$0xff]
      %v1027 = vld [vmem:[%s198 + $0xfa] sm:$0xff]
      %v1028 = vld [vmem:[%s198 + $0x102] sm:$0xff]
      %v1029 = vld [vmem:[%s198 + $0x10a] sm:$0xff]
      %v1030 = vld [vmem:[%s198 + $0x112] sm:$0xff]
      %v1031 = vld [vmem:[%s198 + $0x11a] sm:$0xff]
      %s1032 = scalar_lea.vmem %s204, 16
      %v1033 = vld [vmem:[%s1032] sm:$0xff]
      %v1035 = vsel %vm289, %v996, 0
      %v1038 = vsel %vm289, %v997, 0
      %v1041 = vsel %vm289, %v998, 0
      %v1044 = vsel %vm289, %v999, 0
      %v1047 = vsel %vm289, %v1000, 0
      %v1050 = vsel %vm289, %v1001, 0
      %v1053 = vsel %vm289, %v1002, 0
      %v1056 = vsel %vm289, %v1003, 0
      %v1059 = vsel %vm289, %v1004, 0
      %v1062 = vsel %vm289, %v1005, 0
      %v1065 = vsel %vm289, %v1006, 0
      %v1068 = vsel %vm289, %v1007, 0
      %v1071 = vsel %vm289, %v1008, 0
      %v1074 = vsel %vm289, %v1009, 0
      %v1077 = vsel %vm289, %v1010, 0
      %v1080 = vsel %vm289, %v1011, 0
      %v1083 = vsel %vm289, %v1012, 0
      %v1086 = vsel %vm289, %v1013, 0
      %v1089 = vsel %vm289, %v1014, 0
      %v1092 = vsel %vm289, %v1015, 0
      %v1095 = vsel %vm289, %v1016, 0
      %v1098 = vsel %vm289, %v1017, 0
      %v1101 = vsel %vm289, %v1018, 0
      %v1104 = vsel %vm289, %v1019, 0
      %v1107 = vsel %vm289, %v1020, 0
      %v1110 = vsel %vm289, %v1021, 0
      %v1113 = vsel %vm289, %v1022, 0
      %v1116 = vsel %vm289, %v1023, 0
      %v1119 = vsel %vm289, %v1024, 0
      %v1122 = vsel %vm289, %v1025, 0
      %v1125 = vsel %vm289, %v1026, 0
      %v1128 = vsel %vm289, %v1027, 0
      %v1131 = vsel %vm289, %v1028, 0
      %v1134 = vsel %vm289, %v1029, 0
      %v1137 = vsel %vm289, %v1030, 0
      %v1140 = vsel %vm289, %v1031, 0
      %1142 = vmatprep.subr.mxu0 0.0
      %1143 = vmatpush1.msra.mxu0 %v1033
      %1144 = vmatprep.subr.mxu0 0.0
      %1145 = vmatpush1.msra.mxu0 0.0
      %1146 = vmatprep.subr.mxu0 0.0
      %1147 = vmatpush1.msra.mxu0 0.0
      %1148 = vmatprep.subr.mxu0 0.0
      %1149 = vmatpush1.msra.mxu0 0.0
      %1150 = vmatprep.subr.mxu0 0.0
      %1151 = vmatpush1.msra.mxu0 0.0
      %1152 = vmatprep.subr.mxu0 0.0
      %1153 = vmatpush1.msra.mxu0 0.0
      %1154 = vmatprep.subr.mxu0 0.0
      %1155 = vmatpush1.msra.mxu0 0.0
      %1156 = vmatprep.subr.mxu0 0.0
      %1157 = vmatpush1.msra.mxu0 0.0
      %1158 = vmatprep.subr.mxu0 0.0
      %1159 = vmatpush1.msra.mxu0 0.0
      %1160 = vmatprep.subr.mxu0 0.0
      %1161 = vmatpush1.msra.mxu0 0.0
      %1162 = vmatprep.subr.mxu0 0.0
      %1163 = vmatpush1.msra.mxu0 0.0
      %1164 = vmatprep.subr.mxu0 0.0
      %1165 = vmatpush1.msra.mxu0 0.0
      %1166 = vmatprep.subr.mxu0 0.0
      %1167 = vmatpush1.msra.mxu0 0.0
      %1168 = vmatprep.subr.mxu0 0.0
      %1169 = vmatpush1.msra.mxu0 0.0
      %1170 = vmatprep.subr.mxu0 0.0
      %1171 = vmatpush1.msra.mxu0 0.0
      %1172 = vmatprep.subr.mxu0 0.0
      %1173 = vmatpush1.msra.mxu0 0.0
      %1174 = vmatprep.subr.mxu0 0.0
      %1175 = vmatpush1.msra.mxu0 0.0
      %1176 = vmatprep.subr.mxu0 0.0
      %1177 = vmatpush1.msra.mxu0 0.0
      %1178 = vmatprep.subr.mxu0 0.0
      %1179 = vmatpush1.msra.mxu0 0.0
      %1180 = vmatprep.subr.mxu0 0.0
      %1181 = vmatpush1.msra.mxu0 0.0
      %1182 = vmatprep.subr.mxu0 0.0
      %1183 = vmatpush1.msra.mxu0 0.0
      %1184 = vmatprep.subr.mxu0 0.0
      %1185 = vmatpush1.msra.mxu0 0.0
      %1186 = vmatprep.subr.mxu0 0.0
      %1187 = vmatpush1.msra.mxu0 0.0
      %1188 = vmatprep.subr.mxu0 0.0
      %1189 = vmatpush1.msra.mxu0 0.0
      %1190 = vmatprep.subr.mxu0 0.0
      %1191 = vmatpush1.msra.mxu0 0.0
      %1192 = vmatprep.subr.mxu0 0.0
      %1193 = vmatpush1.msra.mxu0 0.0
      %1194 = vmatprep.subr.mxu0 0.0
      %1195 = vmatpush1.msra.mxu0 0.0
      %1196 = vmatprep.subr.mxu0 0.0
      %1197 = vmatpush1.msra.mxu0 0.0
      %1198 = vmatprep.subr.mxu0 0.0
      %1199 = vmatpush1.msra.mxu0 0.0
      %1200 = vmatprep.subr.mxu0 0.0
      %1201 = vmatpush1.msra.mxu0 0.0
      %1202 = vmatprep.subr.mxu0 0.0
      %1203 = vmatpush1.msra.mxu0 0.0
      %1204 = vmatprep.subr.mxu0 0.0
      %1205 = vmatpush1.msra.mxu0 0.0
      %1206 = vmatprep.mubr.f32.mxu0 0.0
      %1207 = vmatmul.mubr.f32.gmra.mrb[0].mxu0 %v1035
      %v1208 = vpop.f32.mrb[0].mxu0
      %v1209 = vadd.f32 0.0, %v1208
      %v1210 = vpop.f32.mrb[0].mxu0
      %1211 = vmatprep.mubr.f32.mxu0 0.0
      %1212 = vmatmul.mubr.f32.gmra.mrb[0].mxu0 %v1038
      %v1213 = vpop.f32.mrb[0].mxu0
      %v1214 = vadd.f32 0.0, %v1213
      %v1215 = vpop.f32.mrb[0].mxu0
      %1216 = vmatprep.mubr.f32.mxu0 0.0
      %1217 = vmatmul.mubr.f32.gmra.mrb[0].mxu0 %v1041
      %v1218 = vpop.f32.mrb[0].mxu0
      %v1219 = vadd.f32 0.0, %v1218
      %v1220 = vpop.f32.mrb[0].mxu0
      %1221 = vmatprep.mubr.f32.mxu0 0.0
      %1222 = vmatmul.mubr.f32.gmra.mrb[0].mxu0 %v1044
      %v1223 = vpop.f32.mrb[0].mxu0
      %v1224 = vadd.f32 0.0, %v1223
      %v1225 = vpop.f32.mrb[0].mxu0
      %1226 = vmatprep.mubr.f32.mxu0 0.0
      %1227 = vmatmul.mubr.f32.gmra.mrb[0].mxu0 %v1047
      %v1228 = vpop.f32.mrb[0].mxu0
      %v1229 = vadd.f32 0.0, %v1228
      %v1230 = vpop.f32.mrb[0].mxu0
      %1231 = vmatprep.mubr.f32.mxu0 0.0
      %1232 = vmatmul.mubr.f32.gmra.mrb[0].mxu0 %v1050
      %v1233 = vpop.f32.mrb[0].mxu0
      %v1234 = vadd.f32 0.0, %v1233
      %v1235 = vpop.f32.mrb[0].mxu0
      %1236 = vmatprep.mubr.f32.mxu0 0.0
      %1237 = vmatmul.mubr.f32.gmra.mrb[0].mxu0 %v1053
      %v1238 = vpop.f32.mrb[0].mxu0
      %v1239 = vadd.f32 0.0, %v1238
      %v1240 = vpop.f32.mrb[0].mxu0
      %1241 = vmatprep.mubr.f32.mxu0 0.0
      %1242 = vmatmul.mubr.f32.gmra.mrb[0].mxu0 %v1056
      %v1243 = vpop.f32.mrb[0].mxu0
      %v1244 = vadd.f32 0.0, %v1243
      %v1245 = vpop.f32.mrb[0].mxu0
      %1246 = vmatprep.mubr.f32.mxu0 0.0
      %1247 = vmatmul.mubr.f32.gmra.mrb[0].mxu0 %v1059
      %v1248 = vpop.f32.mrb[0].mxu0
      %v1249 = vadd.f32 0.0, %v1248
      %v1250 = vpop.f32.mrb[0].mxu0
      %1251 = vmatprep.mubr.f32.mxu0 0.0
      %1252 = vmatmul.mubr.f32.gmra.mrb[0].mxu0 %v1062
      %v1253 = vpop.f32.mrb[0].mxu0
      %v1254 = vadd.f32 0.0, %v1253
      %v1255 = vpop.f32.mrb[0].mxu0
      %1256 = vmatprep.mubr.f32.mxu0 0.0
      %1257 = vmatmul.mubr.f32.gmra.mrb[0].mxu0 %v1065
      %v1258 = vpop.f32.mrb[0].mxu0
      %v1259 = vadd.f32 0.0, %v1258
      %v1260 = vpop.f32.mrb[0].mxu0
      %1261 = vmatprep.mubr.f32.mxu0 0.0
      %1262 = vmatmul.mubr.f32.gmra.mrb[0].mxu0 %v1068
      %v1263 = vpop.f32.mrb[0].mxu0
      %v1264 = vadd.f32 0.0, %v1263
      %v1265 = vpop.f32.mrb[0].mxu0
      %1266 = vmatprep.mubr.f32.mxu0 0.0
      %1267 = vmatmul.mubr.f32.gmra.mrb[0].mxu0 %v1071
      %v1268 = vpop.f32.mrb[0].mxu0
      %v1269 = vadd.f32 0.0, %v1268
      %v1270 = vpop.f32.mrb[0].mxu0
      %1271 = vmatprep.mubr.f32.mxu0 0.0
      %1272 = vmatmul.mubr.f32.gmra.mrb[0].mxu0 %v1074
      %v1273 = vpop.f32.mrb[0].mxu0
      %v1274 = vadd.f32 0.0, %v1273
      %v1275 = vpop.f32.mrb[0].mxu0
      %1276 = vmatprep.mubr.f32.mxu0 0.0
      %1277 = vmatmul.mubr.f32.gmra.mrb[0].mxu0 %v1077
      %v1278 = vpop.f32.mrb[0].mxu0
      %v1279 = vadd.f32 0.0, %v1278
      %v1280 = vpop.f32.mrb[0].mxu0
      %1281 = vmatprep.mubr.f32.mxu0 0.0
      %1282 = vmatmul.mubr.f32.gmra.mrb[0].mxu0 %v1080
      %v1283 = vpop.f32.mrb[0].mxu0
      %v1284 = vadd.f32 0.0, %v1283
      %v1285 = vpop.f32.mrb[0].mxu0
      %1286 = vmatprep.mubr.f32.mxu0 0.0
      %1287 = vmatmul.mubr.f32.gmra.mrb[0].mxu0 %v1083
      %v1288 = vpop.f32.mrb[0].mxu0
      %v1289 = vadd.f32 0.0, %v1288
      %v1290 = vpop.f32.mrb[0].mxu0
      %1291 = vmatprep.mubr.f32.mxu0 0.0
      %1292 = vmatmul.mubr.f32.gmra.mrb[0].mxu0 %v1086
      %v1293 = vpop.f32.mrb[0].mxu0
      %v1294 = vadd.f32 0.0, %v1293
      %v1295 = vpop.f32.mrb[0].mxu0
      %1296 = vmatprep.mubr.f32.mxu0 0.0
      %1297 = vmatmul.mubr.f32.gmra.mrb[0].mxu0 %v1089
      %v1298 = vpop.f32.mrb[0].mxu0
      %v1299 = vadd.f32 0.0, %v1298
      %v1300 = vpop.f32.mrb[0].mxu0
      %1301 = vmatprep.mubr.f32.mxu0 0.0
      %1302 = vmatmul.mubr.f32.gmra.mrb[0].mxu0 %v1092
      %v1303 = vpop.f32.mrb[0].mxu0
      %v1304 = vadd.f32 0.0, %v1303
      %v1305 = vpop.f32.mrb[0].mxu0
      %1306 = vmatprep.mubr.f32.mxu0 0.0
      %1307 = vmatmul.mubr.f32.gmra.mrb[0].mxu0 %v1095
      %v1308 = vpop.f32.mrb[0].mxu0
      %v1309 = vadd.f32 0.0, %v1308
      %v1310 = vpop.f32.mrb[0].mxu0
      %1311 = vmatprep.mubr.f32.mxu0 0.0
      %1312 = vmatmul.mubr.f32.gmra.mrb[0].mxu0 %v1098
      %v1313 = vpop.f32.mrb[0].mxu0
      %v1314 = vadd.f32 0.0, %v1313
      %v1315 = vpop.f32.mrb[0].mxu0
      %1316 = vmatprep.mubr.f32.mxu0 0.0
      %1317 = vmatmul.mubr.f32.gmra.mrb[0].mxu0 %v1101
      %v1318 = vpop.f32.mrb[0].mxu0
      %v1319 = vadd.f32 0.0, %v1318
      %v1320 = vpop.f32.mrb[0].mxu0
      %1321 = vmatprep.mubr.f32.mxu0 0.0
      %1322 = vmatmul.mubr.f32.gmra.mrb[0].mxu0 %v1104
      %v1323 = vpop.f32.mrb[0].mxu0
      %v1324 = vadd.f32 0.0, %v1323
      %v1325 = vpop.f32.mrb[0].mxu0
      %1326 = vmatprep.mubr.f32.mxu0 0.0
      %1327 = vmatmul.mubr.f32.gmra.mrb[0].mxu0 %v1107
      %v1328 = vpop.f32.mrb[0].mxu0
      %v1329 = vadd.f32 0.0, %v1328
      %v1330 = vpop.f32.mrb[0].mxu0
      %1331 = vmatprep.mubr.f32.mxu0 0.0
      %1332 = vmatmul.mubr.f32.gmra.mrb[0].mxu0 %v1110
      %v1333 = vpop.f32.mrb[0].mxu0
      %v1334 = vadd.f32 0.0, %v1333
      %v1335 = vpop.f32.mrb[0].mxu0
      %1336 = vmatprep.mubr.f32.mxu0 0.0
      %1337 = vmatmul.mubr.f32.gmra.mrb[0].mxu0 %v1113
      %v1338 = vpop.f32.mrb[0].mxu0
      %v1339 = vadd.f32 0.0, %v1338
      %v1340 = vpop.f32.mrb[0].mxu0
      %1341 = vmatprep.mubr.f32.mxu0 0.0
      %1342 = vmatmul.mubr.f32.gmra.mrb[0].mxu0 %v1116
      %v1343 = vpop.f32.mrb[0].mxu0
      %v1344 = vadd.f32 0.0, %v1343
      %v1345 = vpop.f32.mrb[0].mxu0
      %1346 = vmatprep.mubr.f32.mxu0 0.0
      %1347 = vmatmul.mubr.f32.gmra.mrb[0].mxu0 %v1119
      %v1348 = vpop.f32.mrb[0].mxu0
      %v1349 = vadd.f32 0.0, %v1348
      %v1350 = vpop.f32.mrb[0].mxu0
      %1351 = vmatprep.mubr.f32.mxu0 0.0
      %1352 = vmatmul.mubr.f32.gmra.mrb[0].mxu0 %v1122
      %v1353 = vpop.f32.mrb[0].mxu0
      %v1354 = vadd.f32 0.0, %v1353
      %v1355 = vpop.f32.mrb[0].mxu0
      %1356 = vmatprep.mubr.f32.mxu0 0.0
      %1357 = vmatmul.mubr.f32.gmra.mrb[0].mxu0 %v1125
      %v1358 = vpop.f32.mrb[0].mxu0
      %v1359 = vadd.f32 0.0, %v1358
      %v1360 = vpop.f32.mrb[0].mxu0
      %1361 = vmatprep.mubr.f32.mxu0 0.0
      %1362 = vmatmul.mubr.f32.gmra.mrb[0].mxu0 %v1128
      %v1363 = vpop.f32.mrb[0].mxu0
      %v1364 = vadd.f32 0.0, %v1363
      %v1365 = vpop.f32.mrb[0].mxu0
      %1366 = vmatprep.mubr.f32.mxu0 0.0
      %1367 = vmatmul.mubr.f32.gmra.mrb[0].mxu0 %v1131
      %v1368 = vpop.f32.mrb[0].mxu0
      %v1369 = vadd.f32 0.0, %v1368
      %v1370 = vpop.f32.mrb[0].mxu0
      %1371 = vmatprep.mubr.f32.mxu0 0.0
      %1372 = vmatmul.mubr.f32.gmra.mrb[0].mxu0 %v1134
      %v1373 = vpop.f32.mrb[0].mxu0
      %v1374 = vadd.f32 0.0, %v1373
      %v1375 = vpop.f32.mrb[0].mxu0
      %1376 = vmatprep.mubr.f32.mxu0 0.0
      %1377 = vmatmul.mubr.f32.gmra.mrb[0].mxu0 %v1137
      %v1378 = vpop.f32.mrb[0].mxu0
      %v1379 = vadd.f32 0.0, %v1378
      %v1380 = vpop.f32.mrb[0].mxu0
      %1381 = vmatprep.mubr.f32.mxu0 0.0
      %1382 = vmatmul.mubr.f32.gmra.mrb[0].mxu0 %v1140
      %v1383 = vpop.f32.mrb[0].mxu0
      %v1384 = vadd.f32 0.0, %v1383
      %v1385 = vpop.f32.mrb[0].mxu0
      %1386 = vdwg.mxu0
      %v1387 = vadd.f32 %v818, %v1209
      %v1388 = vadd.f32 %v823, %v1214
      %v1389 = vadd.f32 %v828, %v1219
      %v1390 = vadd.f32 %v833, %v1224
      %v1391 = vadd.f32 %v838, %v1229
      %v1392 = vadd.f32 %v843, %v1234
      %v1393 = vadd.f32 %v848, %v1239
      %v1394 = vadd.f32 %v853, %v1244
      %v1395 = vadd.f32 %v858, %v1249
      %v1396 = vadd.f32 %v863, %v1254
      %v1397 = vadd.f32 %v868, %v1259
      %v1398 = vadd.f32 %v873, %v1264
      %v1399 = vadd.f32 %v878, %v1269
      %v1400 = vadd.f32 %v883, %v1274
      %v1401 = vadd.f32 %v888, %v1279
      %v1402 = vadd.f32 %v893, %v1284
      %v1403 = vadd.f32 %v898, %v1289
      %v1404 = vadd.f32 %v903, %v1294
      %v1405 = vadd.f32 %v908, %v1299
      %v1406 = vadd.f32 %v913, %v1304
      %v1407 = vadd.f32 %v918, %v1309
      %v1408 = vadd.f32 %v923, %v1314
      %v1409 = vadd.f32 %v928, %v1319
      %v1410 = vadd.f32 %v933, %v1324
      %v1411 = vadd.f32 %v938, %v1329
      %v1412 = vadd.f32 %v943, %v1334
      %v1413 = vadd.f32 %v948, %v1339
      %v1414 = vadd.f32 %v953, %v1344
      %v1415 = vadd.f32 %v958, %v1349
      %v1416 = vadd.f32 %v963, %v1354
      %v1417 = vadd.f32 %v968, %v1359
      %v1418 = vadd.f32 %v973, %v1364
      %v1419 = vadd.f32 %v978, %v1369
      %v1420 = vadd.f32 %v983, %v1374
      %v1421 = vadd.f32 %v988, %v1379
      %v1422 = vadd.f32 %v993, %v1384
      %v1423 = vld [vmem:[%s198 + $0x12] sm:$0xff]
      %v1424 = vld [vmem:[%s198 + $0x1a] sm:$0xff]
      %v1425 = vld [vmem:[%s198 + $0x22] sm:$0xff]
      %v1426 = vld [vmem:[%s198 + $0x2a] sm:$0xff]
      %v1427 = vld [vmem:[%s198 + $0x32] sm:$0xff]
      %v1428 = vld [vmem:[%s198 + $0x3a] sm:$0xff]
      %v1429 = vld [vmem:[%s198 + $0x42] sm:$0xff]
      %v1430 = vld [vmem:[%s198 + $0x4a] sm:$0xff]
      %v1431 = vld [vmem:[%s198 + $0x52] sm:$0xff]
      %v1432 = vld [vmem:[%s198 + $0x5a] sm:$0xff]
      %v1433 = vld [vmem:[%s198 + $0x62] sm:$0xff]
      %v1434 = vld [vmem:[%s198 + $0x6a] sm:$0xff]
      %v1435 = vld [vmem:[%s198 + $0x72] sm:$0xff]
      %v1436 = vld [vmem:[%s198 + $0x7a] sm:$0xff]
      %v1437 = vld [vmem:[%s198 + $0x82] sm:$0xff]
      %v1438 = vld [vmem:[%s198 + $0x8a] sm:$0xff]
      %v1439 = vld [vmem:[%s198 + $0x92] sm:$0xff]
      %v1440 = vld [vmem:[%s198 + $0x9a] sm:$0xff]
      %v1441 = vld [vmem:[%s198 + $0xa2] sm:$0xff]
      %v1442 = vld [vmem:[%s198 + $0xaa] sm:$0xff]
      %v1443 = vld [vmem:[%s198 + $0xb2] sm:$0xff]
      %v1444 = vld [vmem:[%s198 + $0xba] sm:$0xff]
      %v1445 = vld [vmem:[%s198 + $0xc2] sm:$0xff]
      %v1446 = vld [vmem:[%s198 + $0xca] sm:$0xff]
      %v1447 = vld [vmem:[%s198 + $0xd2] sm:$0xff]
      %v1448 = vld [vmem:[%s198 + $0xda] sm:$0xff]
      %v1449 = vld [vmem:[%s198 + $0xe2] sm:$0xff]
      %v1450 = vld [vmem:[%s198 + $0xea] sm:$0xff]
      %v1451 = vld [vmem:[%s198 + $0xf2] sm:$0xff]
      %v1452 = vld [vmem:[%s198 + $0xfa] sm:$0xff]
      %v1453 = vld [vmem:[%s198 + $0x102] sm:$0xff]
      %v1454 = vld [vmem:[%s198 + $0x10a] sm:$0xff]
      %v1455 = vld [vmem:[%s198 + $0x112] sm:$0xff]
      %v1456 = vld [vmem:[%s198 + $0x11a] sm:$0xff]
      %v1457 = vld [vmem:[%s198 + $0x122] sm:$0xff]
      %v1458 = vld [vmem:[%s198 + $0x12a] sm:$0xff]
      %s1459 = scalar_lea.vmem %s204, 24
      %v1460 = vld [vmem:[%s1459] sm:$0xff]
      %v1462 = vsel %vm289, %v1423, 0
      %v1465 = vsel %vm289, %v1424, 0
      %v1468 = vsel %vm289, %v1425, 0
      %v1471 = vsel %vm289, %v1426, 0
      %v1474 = vsel %vm289, %v1427, 0
      %v1477 = vsel %vm289, %v1428, 0
      %v1480 = vsel %vm289, %v1429, 0
      %v1483 = vsel %vm289, %v1430, 0
      %v1486 = vsel %vm289, %v1431, 0
      %v1489 = vsel %vm289, %v1432, 0
      %v1492 = vsel %vm289, %v1433, 0
      %v1495 = vsel %vm289, %v1434, 0
      %v1498 = vsel %vm289, %v1435, 0
      %v1501 = vsel %vm289, %v1436, 0
      %v1504 = vsel %vm289, %v1437, 0
      %v1507 = vsel %vm289, %v1438, 0
      %v1510 = vsel %vm289, %v1439, 0
      %v1513 = vsel %vm289, %v1440, 0
      %v1516 = vsel %vm289, %v1441, 0
      %v1519 = vsel %vm289, %v1442, 0
      %v1522 = vsel %vm289, %v1443, 0
      %v1525 = vsel %vm289, %v1444, 0
      %v1528 = vsel %vm289, %v1445, 0
      %v1531 = vsel %vm289, %v1446, 0
      %v1534 = vsel %vm289, %v1447, 0
      %v1537 = vsel %vm289, %v1448, 0
      %v1540 = vsel %vm289, %v1449, 0
      %v1543 = vsel %vm289, %v1450, 0
      %v1546 = vsel %vm289, %v1451, 0
      %v1549 = vsel %vm289, %v1452, 0
      %v1552 = vsel %vm289, %v1453, 0
      %v1555 = vsel %vm289, %v1454, 0
      %v1558 = vsel %vm289, %v1455, 0
      %v1561 = vsel %vm289, %v1456, 0
      %v1564 = vsel %vm289, %v1457, 0
      %v1567 = vsel %vm289, %v1458, 0
      %1569 = vmatprep.subr.mxu0 0.0
      %1570 = vmatpush1.msra.mxu0 %v1460
      %1571 = vmatprep.subr.mxu0 0.0
      %1572 = vmatpush1.msra.mxu0 0.0
      %1573 = vmatprep.subr.mxu0 0.0
      %1574 = vmatpush1.msra.mxu0 0.0
      %1575 = vmatprep.subr.mxu0 0.0
      %1576 = vmatpush1.msra.mxu0 0.0
      %1577 = vmatprep.subr.mxu0 0.0
      %1578 = vmatpush1.msra.mxu0 0.0
      %1579 = vmatprep.subr.mxu0 0.0
      %1580 = vmatpush1.msra.mxu0 0.0
      %1581 = vmatprep.subr.mxu0 0.0
      %1582 = vmatpush1.msra.mxu0 0.0
      %1583 = vmatprep.subr.mxu0 0.0
      %1584 = vmatpush1.msra.mxu0 0.0
      %1585 = vmatprep.subr.mxu0 0.0
      %1586 = vmatpush1.msra.mxu0 0.0
      %1587 = vmatprep.subr.mxu0 0.0
      %1588 = vmatpush1.msra.mxu0 0.0
      %1589 = vmatprep.subr.mxu0 0.0
      %1590 = vmatpush1.msra.mxu0 0.0
      %1591 = vmatprep.subr.mxu0 0.0
      %1592 = vmatpush1.msra.mxu0 0.0
      %1593 = vmatprep.subr.mxu0 0.0
      %1594 = vmatpush1.msra.mxu0 0.0
      %1595 = vmatprep.subr.mxu0 0.0
      %1596 = vmatpush1.msra.mxu0 0.0
      %1597 = vmatprep.subr.mxu0 0.0
      %1598 = vmatpush1.msra.mxu0 0.0
      %1599 = vmatprep.subr.mxu0 0.0
      %1600 = vmatpush1.msra.mxu0 0.0
      %1601 = vmatprep.subr.mxu0 0.0
      %1602 = vmatpush1.msra.mxu0 0.0
      %1603 = vmatprep.subr.mxu0 0.0
      %1604 = vmatpush1.msra.mxu0 0.0
      %1605 = vmatprep.subr.mxu0 0.0
      %1606 = vmatpush1.msra.mxu0 0.0
      %1607 = vmatprep.subr.mxu0 0.0
      %1608 = vmatpush1.msra.mxu0 0.0
      %1609 = vmatprep.subr.mxu0 0.0
      %1610 = vmatpush1.msra.mxu0 0.0
      %1611 = vmatprep.subr.mxu0 0.0
      %1612 = vmatpush1.msra.mxu0 0.0
      %1613 = vmatprep.subr.mxu0 0.0
      %1614 = vmatpush1.msra.mxu0 0.0
      %1615 = vmatprep.subr.mxu0 0.0
      %1616 = vmatpush1.msra.mxu0 0.0
      %1617 = vmatprep.subr.mxu0 0.0
      %1618 = vmatpush1.msra.mxu0 0.0
      %1619 = vmatprep.subr.mxu0 0.0
      %1620 = vmatpush1.msra.mxu0 0.0
      %1621 = vmatprep.subr.mxu0 0.0
      %1622 = vmatpush1.msra.mxu0 0.0
      %1623 = vmatprep.subr.mxu0 0.0
      %1624 = vmatpush1.msra.mxu0 0.0
      %1625 = vmatprep.subr.mxu0 0.0
      %1626 = vmatpush1.msra.mxu0 0.0
      %1627 = vmatprep.subr.mxu0 0.0
      %1628 = vmatpush1.msra.mxu0 0.0
      %1629 = vmatprep.subr.mxu0 0.0
      %1630 = vmatpush1.msra.mxu0 0.0
      %1631 = vmatprep.subr.mxu0 0.0
      %1632 = vmatpush1.msra.mxu0 0.0
      %1633 = vmatprep.mubr.f32.mxu0 0.0
      %1634 = vmatmul.mubr.f32.gmra.mrb[0].mxu0 %v1462
      %v1635 = vpop.f32.mrb[0].mxu0
      %v1636 = vadd.f32 0.0, %v1635
      %v1637 = vpop.f32.mrb[0].mxu0
      %1638 = vmatprep.mubr.f32.mxu0 0.0
      %1639 = vmatmul.mubr.f32.gmra.mrb[0].mxu0 %v1465
      %v1640 = vpop.f32.mrb[0].mxu0
      %v1641 = vadd.f32 0.0, %v1640
      %v1642 = vpop.f32.mrb[0].mxu0
      %1643 = vmatprep.mubr.f32.mxu0 0.0
      %1644 = vmatmul.mubr.f32.gmra.mrb[0].mxu0 %v1468
      %v1645 = vpop.f32.mrb[0].mxu0
      %v1646 = vadd.f32 0.0, %v1645
      %v1647 = vpop.f32.mrb[0].mxu0
      %1648 = vmatprep.mubr.f32.mxu0 0.0
      %1649 = vmatmul.mubr.f32.gmra.mrb[0].mxu0 %v1471
      %v1650 = vpop.f32.mrb[0].mxu0
      %v1651 = vadd.f32 0.0, %v1650
      %v1652 = vpop.f32.mrb[0].mxu0
      %1653 = vmatprep.mubr.f32.mxu0 0.0
      %1654 = vmatmul.mubr.f32.gmra.mrb[0].mxu0 %v1474
      %v1655 = vpop.f32.mrb[0].mxu0
      %v1656 = vadd.f32 0.0, %v1655
      %v1657 = vpop.f32.mrb[0].mxu0
      %1658 = vmatprep.mubr.f32.mxu0 0.0
      %1659 = vmatmul.mubr.f32.gmra.mrb[0].mxu0 %v1477
      %v1660 = vpop.f32.mrb[0].mxu0
      %v1661 = vadd.f32 0.0, %v1660
      %v1662 = vpop.f32.mrb[0].mxu0
      %1663 = vmatprep.mubr.f32.mxu0 0.0
      %1664 = vmatmul.mubr.f32.gmra.mrb[0].mxu0 %v1480
      %v1665 = vpop.f32.mrb[0].mxu0
      %v1666 = vadd.f32 0.0, %v1665
      %v1667 = vpop.f32.mrb[0].mxu0
      %1668 = vmatprep.mubr.f32.mxu0 0.0
      %1669 = vmatmul.mubr.f32.gmra.mrb[0].mxu0 %v1483
      %v1670 = vpop.f32.mrb[0].mxu0
      %v1671 = vadd.f32 0.0, %v1670
      %v1672 = vpop.f32.mrb[0].mxu0
      %1673 = vmatprep.mubr.f32.mxu0 0.0
      %1674 = vmatmul.mubr.f32.gmra.mrb[0].mxu0 %v1486
      %v1675 = vpop.f32.mrb[0].mxu0
      %v1676 = vadd.f32 0.0, %v1675
      %v1677 = vpop.f32.mrb[0].mxu0
      %1678 = vmatprep.mubr.f32.mxu0 0.0
      %1679 = vmatmul.mubr.f32.gmra.mrb[0].mxu0 %v1489
      %v1680 = vpop.f32.mrb[0].mxu0
      %v1681 = vadd.f32 0.0, %v1680
      %v1682 = vpop.f32.mrb[0].mxu0
      %1683 = vmatprep.mubr.f32.mxu0 0.0
      %1684 = vmatmul.mubr.f32.gmra.mrb[0].mxu0 %v1492
      %v1685 = vpop.f32.mrb[0].mxu0
      %v1686 = vadd.f32 0.0, %v1685
      %v1687 = vpop.f32.mrb[0].mxu0
      %1688 = vmatprep.mubr.f32.mxu0 0.0
      %1689 = vmatmul.mubr.f32.gmra.mrb[0].mxu0 %v1495
      %v1690 = vpop.f32.mrb[0].mxu0
      %v1691 = vadd.f32 0.0, %v1690
      %v1692 = vpop.f32.mrb[0].mxu0
      %1693 = vmatprep.mubr.f32.mxu0 0.0
      %1694 = vmatmul.mubr.f32.gmra.mrb[0].mxu0 %v1498
      %v1695 = vpop.f32.mrb[0].mxu0
      %v1696 = vadd.f32 0.0, %v1695
      %v1697 = vpop.f32.mrb[0].mxu0
      %1698 = vmatprep.mubr.f32.mxu0 0.0
      %1699 = vmatmul.mubr.f32.gmra.mrb[0].mxu0 %v1501
      %v1700 = vpop.f32.mrb[0].mxu0
      %v1701 = vadd.f32 0.0, %v1700
      %v1702 = vpop.f32.mrb[0].mxu0
      %1703 = vmatprep.mubr.f32.mxu0 0.0
      %1704 = vmatmul.mubr.f32.gmra.mrb[0].mxu0 %v1504
      %v1705 = vpop.f32.mrb[0].mxu0
      %v1706 = vadd.f32 0.0, %v1705
      %v1707 = vpop.f32.mrb[0].mxu0
      %1708 = vmatprep.mubr.f32.mxu0 0.0
      %1709 = vmatmul.mubr.f32.gmra.mrb[0].mxu0 %v1507
      %v1710 = vpop.f32.mrb[0].mxu0
      %v1711 = vadd.f32 0.0, %v1710
      %v1712 = vpop.f32.mrb[0].mxu0
      %1713 = vmatprep.mubr.f32.mxu0 0.0
      %1714 = vmatmul.mubr.f32.gmra.mrb[0].mxu0 %v1510
      %v1715 = vpop.f32.mrb[0].mxu0
      %v1716 = vadd.f32 0.0, %v1715
      %v1717 = vpop.f32.mrb[0].mxu0
      %1718 = vmatprep.mubr.f32.mxu0 0.0
      %1719 = vmatmul.mubr.f32.gmra.mrb[0].mxu0 %v1513
      %v1720 = vpop.f32.mrb[0].mxu0
      %v1721 = vadd.f32 0.0, %v1720
      %v1722 = vpop.f32.mrb[0].mxu0
      %1723 = vmatprep.mubr.f32.mxu0 0.0
      %1724 = vmatmul.mubr.f32.gmra.mrb[0].mxu0 %v1516
      %v1725 = vpop.f32.mrb[0].mxu0
      %v1726 = vadd.f32 0.0, %v1725
      %v1727 = vpop.f32.mrb[0].mxu0
      %1728 = vmatprep.mubr.f32.mxu0 0.0
      %1729 = vmatmul.mubr.f32.gmra.mrb[0].mxu0 %v1519
      %v1730 = vpop.f32.mrb[0].mxu0
      %v1731 = vadd.f32 0.0, %v1730
      %v1732 = vpop.f32.mrb[0].mxu0
      %1733 = vmatprep.mubr.f32.mxu0 0.0
      %1734 = vmatmul.mubr.f32.gmra.mrb[0].mxu0 %v1522
      %v1735 = vpop.f32.mrb[0].mxu0
      %v1736 = vadd.f32 0.0, %v1735
      %v1737 = vpop.f32.mrb[0].mxu0
      %1738 = vmatprep.mubr.f32.mxu0 0.0
      %1739 = vmatmul.mubr.f32.gmra.mrb[0].mxu0 %v1525
      %v1740 = vpop.f32.mrb[0].mxu0
      %v1741 = vadd.f32 0.0, %v1740
      %v1742 = vpop.f32.mrb[0].mxu0
      %1743 = vmatprep.mubr.f32.mxu0 0.0
      %1744 = vmatmul.mubr.f32.gmra.mrb[0].mxu0 %v1528
      %v1745 = vpop.f32.mrb[0].mxu0
      %v1746 = vadd.f32 0.0, %v1745
      %v1747 = vpop.f32.mrb[0].mxu0
      %1748 = vmatprep.mubr.f32.mxu0 0.0
      %1749 = vmatmul.mubr.f32.gmra.mrb[0].mxu0 %v1531
      %v1750 = vpop.f32.mrb[0].mxu0
      %v1751 = vadd.f32 0.0, %v1750
      %v1752 = vpop.f32.mrb[0].mxu0
      %1753 = vmatprep.mubr.f32.mxu0 0.0
      %1754 = vmatmul.mubr.f32.gmra.mrb[0].mxu0 %v1534
      %v1755 = vpop.f32.mrb[0].mxu0
      %v1756 = vadd.f32 0.0, %v1755
      %v1757 = vpop.f32.mrb[0].mxu0
      %1758 = vmatprep.mubr.f32.mxu0 0.0
      %1759 = vmatmul.mubr.f32.gmra.mrb[0].mxu0 %v1537
      %v1760 = vpop.f32.mrb[0].mxu0
      %v1761 = vadd.f32 0.0, %v1760
      %v1762 = vpop.f32.mrb[0].mxu0
      %1763 = vmatprep.mubr.f32.mxu0 0.0
      %1764 = vmatmul.mubr.f32.gmra.mrb[0].mxu0 %v1540
      %v1765 = vpop.f32.mrb[0].mxu0
      %v1766 = vadd.f32 0.0, %v1765
      %v1767 = vpop.f32.mrb[0].mxu0
      %1768 = vmatprep.mubr.f32.mxu0 0.0
      %1769 = vmatmul.mubr.f32.gmra.mrb[0].mxu0 %v1543
      %v1770 = vpop.f32.mrb[0].mxu0
      %v1771 = vadd.f32 0.0, %v1770
      %v1772 = vpop.f32.mrb[0].mxu0
      %1773 = vmatprep.mubr.f32.mxu0 0.0
      %1774 = vmatmul.mubr.f32.gmra.mrb[0].mxu0 %v1546
      %v1775 = vpop.f32.mrb[0].mxu0
      %v1776 = vadd.f32 0.0, %v1775
      %v1777 = vpop.f32.mrb[0].mxu0
      %1778 = vmatprep.mubr.f32.mxu0 0.0
      %1779 = vmatmul.mubr.f32.gmra.mrb[0].mxu0 %v1549
      %v1780 = vpop.f32.mrb[0].mxu0
      %v1781 = vadd.f32 0.0, %v1780
      %v1782 = vpop.f32.mrb[0].mxu0
      %1783 = vmatprep.mubr.f32.mxu0 0.0
      %1784 = vmatmul.mubr.f32.gmra.mrb[0].mxu0 %v1552
      %v1785 = vpop.f32.mrb[0].mxu0
      %v1786 = vadd.f32 0.0, %v1785
      %v1787 = vpop.f32.mrb[0].mxu0
      %1788 = vmatprep.mubr.f32.mxu0 0.0
      %1789 = vmatmul.mubr.f32.gmra.mrb[0].mxu0 %v1555
      %v1790 = vpop.f32.mrb[0].mxu0
      %v1791 = vadd.f32 0.0, %v1790
      %v1792 = vpop.f32.mrb[0].mxu0
      %1793 = vmatprep.mubr.f32.mxu0 0.0
      %1794 = vmatmul.mubr.f32.gmra.mrb[0].mxu0 %v1558
      %v1795 = vpop.f32.mrb[0].mxu0
      %v1796 = vadd.f32 0.0, %v1795
      %v1797 = vpop.f32.mrb[0].mxu0
      %1798 = vmatprep.mubr.f32.mxu0 0.0
      %1799 = vmatmul.mubr.f32.gmra.mrb[0].mxu0 %v1561
      %v1800 = vpop.f32.mrb[0].mxu0
      %v1801 = vadd.f32 0.0, %v1800
      %v1802 = vpop.f32.mrb[0].mxu0
      %1803 = vmatprep.mubr.f32.mxu0 0.0
      %1804 = vmatmul.mubr.f32.gmra.mrb[0].mxu0 %v1564
      %v1805 = vpop.f32.mrb[0].mxu0
      %v1806 = vadd.f32 0.0, %v1805
      %v1807 = vpop.f32.mrb[0].mxu0
      %1808 = vmatprep.mubr.f32.mxu0 0.0
      %1809 = vmatmul.mubr.f32.gmra.mrb[0].mxu0 %v1567
      %v1810 = vpop.f32.mrb[0].mxu0
      %v1811 = vadd.f32 0.0, %v1810
      %v1812 = vpop.f32.mrb[0].mxu0
      %1813 = vdwg.mxu0
      %v1814 = vadd.f32 %v1387, %v1636
      %v1815 = vadd.f32 %v1388, %v1641
      %v1816 = vadd.f32 %v1389, %v1646
      %v1817 = vadd.f32 %v1390, %v1651
      %v1818 = vadd.f32 %v1391, %v1656
      %v1819 = vadd.f32 %v1392, %v1661
      %v1820 = vadd.f32 %v1393, %v1666
      %v1821 = vadd.f32 %v1394, %v1671
      %v1822 = vadd.f32 %v1395, %v1676
      %v1823 = vadd.f32 %v1396, %v1681
      %v1824 = vadd.f32 %v1397, %v1686
      %v1825 = vadd.f32 %v1398, %v1691
      %v1826 = vadd.f32 %v1399, %v1696
      %v1827 = vadd.f32 %v1400, %v1701
      %v1828 = vadd.f32 %v1401, %v1706
      %v1829 = vadd.f32 %v1402, %v1711
      %v1830 = vadd.f32 %v1403, %v1716
      %v1831 = vadd.f32 %v1404, %v1721
      %v1832 = vadd.f32 %v1405, %v1726
      %v1833 = vadd.f32 %v1406, %v1731
      %v1834 = vadd.f32 %v1407, %v1736
      %v1835 = vadd.f32 %v1408, %v1741
      %v1836 = vadd.f32 %v1409, %v1746
      %v1837 = vadd.f32 %v1410, %v1751
      %v1838 = vadd.f32 %v1411, %v1756
      %v1839 = vadd.f32 %v1412, %v1761
      %v1840 = vadd.f32 %v1413, %v1766
      %v1841 = vadd.f32 %v1414, %v1771
      %v1842 = vadd.f32 %v1415, %v1776
      %v1843 = vadd.f32 %v1416, %v1781
      %v1844 = vadd.f32 %v1417, %v1786
      %v1845 = vadd.f32 %v1418, %v1791
      %v1846 = vadd.f32 %v1419, %v1796
      %v1847 = vadd.f32 %v1420, %v1801
      %v1848 = vadd.f32 %v1421, %v1806
      %v1849 = vadd.f32 %v1422, %v1811
      %v1850 = vld [vmem:[%s198 + $0x13] sm:$0xff]
      %v1851 = vld [vmem:[%s198 + $0x1b] sm:$0xff]
      %v1852 = vld [vmem:[%s198 + $0x23] sm:$0xff]
      %v1853 = vld [vmem:[%s198 + $0x2b] sm:$0xff]
      %v1854 = vld [vmem:[%s198 + $0x33] sm:$0xff]
      %v1855 = vld [vmem:[%s198 + $0x3b] sm:$0xff]
      %v1856 = vld [vmem:[%s198 + $0x43] sm:$0xff]
      %v1857 = vld [vmem:[%s198 + $0x4b] sm:$0xff]
      %v1858 = vld [vmem:[%s198 + $0x53] sm:$0xff]
      %v1859 = vld [vmem:[%s198 + $0x5b] sm:$0xff]
      %v1860 = vld [vmem:[%s198 + $0x63] sm:$0xff]
      %v1861 = vld [vmem:[%s198 + $0x6b] sm:$0xff]
      %v1862 = vld [vmem:[%s198 + $0x73] sm:$0xff]
      %v1863 = vld [vmem:[%s198 + $0x7b] sm:$0xff]
      %v1864 = vld [vmem:[%s198 + $0x83] sm:$0xff]
      %v1865 = vld [vmem:[%s198 + $0x8b] sm:$0xff]
      %v1866 = vld [vmem:[%s198 + $0x93] sm:$0xff]
      %v1867 = vld [vmem:[%s198 + $0x9b] sm:$0xff]
      %v1868 = vld [vmem:[%s198 + $0xa3] sm:$0xff]
      %v1869 = vld [vmem:[%s198 + $0xab] sm:$0xff]
      %v1870 = vld [vmem:[%s198 + $0xb3] sm:$0xff]
      %v1871 = vld [vmem:[%s198 + $0xbb] sm:$0xff]
      %v1872 = vld [vmem:[%s198 + $0xc3] sm:$0xff]
      %v1873 = vld [vmem:[%s198 + $0xcb] sm:$0xff]
      %v1874 = vld [vmem:[%s198 + $0xd3] sm:$0xff]
      %v1875 = vld [vmem:[%s198 + $0xdb] sm:$0xff]
      %v1876 = vld [vmem:[%s198 + $0xe3] sm:$0xff]
      %v1877 = vld [vmem:[%s198 + $0xeb] sm:$0xff]
      %v1878 = vld [vmem:[%s198 + $0xf3] sm:$0xff]
      %v1879 = vld [vmem:[%s198 + $0xfb] sm:$0xff]
      %v1880 = vld [vmem:[%s198 + $0x103] sm:$0xff]
      %v1881 = vld [vmem:[%s198 + $0x10b] sm:$0xff]
      %v1882 = vld [vmem:[%s198 + $0x113] sm:$0xff]
      %v1883 = vld [vmem:[%s198 + $0x11b] sm:$0xff]
      %v1884 = vld [vmem:[%s198 + $0x123] sm:$0xff]
      %v1885 = vld [vmem:[%s198 + $0x12b] sm:$0xff]
      %s1886 = scalar_lea.vmem %s204, 32
      %v1887 = vld [vmem:[%s1886] sm:$0xff]
      %v1889 = vsel %vm289, %v1850, 0
      %v1892 = vsel %vm289, %v1851, 0
      %v1895 = vsel %vm289, %v1852, 0
      %v1898 = vsel %vm289, %v1853, 0
      %v1901 = vsel %vm289, %v1854, 0
      %v1904 = vsel %vm289, %v1855, 0
      %v1907 = vsel %vm289, %v1856, 0
      %v1910 = vsel %vm289, %v1857, 0
      %v1913 = vsel %vm289, %v1858, 0
      %v1916 = vsel %vm289, %v1859, 0
      %v1919 = vsel %vm289, %v1860, 0
      %v1922 = vsel %vm289, %v1861, 0
      %v1925 = vsel %vm289, %v1862, 0
      %v1928 = vsel %vm289, %v1863, 0
      %v1931 = vsel %vm289, %v1864, 0
      %v1934 = vsel %vm289, %v1865, 0
      %v1937 = vsel %vm289, %v1866, 0
      %v1940 = vsel %vm289, %v1867, 0
      %v1943 = vsel %vm289, %v1868, 0
      %v1946 = vsel %vm289, %v1869, 0
      %v1949 = vsel %vm289, %v1870, 0
      %v1952 = vsel %vm289, %v1871, 0
      %v1955 = vsel %vm289, %v1872, 0
      %v1958 = vsel %vm289, %v1873, 0
      %v1961 = vsel %vm289, %v1874, 0
      %v1964 = vsel %vm289, %v1875, 0
      %v1967 = vsel %vm289, %v1876, 0
      %v1970 = vsel %vm289, %v1877, 0
      %v1973 = vsel %vm289, %v1878, 0
      %v1976 = vsel %vm289, %v1879, 0
      %v1979 = vsel %vm289, %v1880, 0
      %v1982 = vsel %vm289, %v1881, 0
      %v1985 = vsel %vm289, %v1882, 0
      %v1988 = vsel %vm289, %v1883, 0
      %v1991 = vsel %vm289, %v1884, 0
      %v1994 = vsel %vm289, %v1885, 0
      %1996 = vmatprep.subr.mxu0 0.0
      %1997 = vmatpush1.msra.mxu0 %v1887
      %1998 = vmatprep.subr.mxu0 0.0
      %1999 = vmatpush1.msra.mxu0 0.0
      %2000 = vmatprep.subr.mxu0 0.0
      %2001 = vmatpush1.msra.mxu0 0.0
      %2002 = vmatprep.subr.mxu0 0.0
      %2003 = vmatpush1.msra.mxu0 0.0
      %2004 = vmatprep.subr.mxu0 0.0
      %2005 = vmatpush1.msra.mxu0 0.0
      %2006 = vmatprep.subr.mxu0 0.0
      %2007 = vmatpush1.msra.mxu0 0.0
      %2008 = vmatprep.subr.mxu0 0.0
      %2009 = vmatpush1.msra.mxu0 0.0
      %2010 = vmatprep.subr.mxu0 0.0
      %2011 = vmatpush1.msra.mxu0 0.0
      %2012 = vmatprep.subr.mxu0 0.0
      %2013 = vmatpush1.msra.mxu0 0.0
      %2014 = vmatprep.subr.mxu0 0.0
      %2015 = vmatpush1.msra.mxu0 0.0
      %2016 = vmatprep.subr.mxu0 0.0
      %2017 = vmatpush1.msra.mxu0 0.0
      %2018 = vmatprep.subr.mxu0 0.0
      %2019 = vmatpush1.msra.mxu0 0.0
      %2020 = vmatprep.subr.mxu0 0.0
      %2021 = vmatpush1.msra.mxu0 0.0
      %2022 = vmatprep.subr.mxu0 0.0
      %2023 = vmatpush1.msra.mxu0 0.0
      %2024 = vmatprep.subr.mxu0 0.0
      %2025 = vmatpush1.msra.mxu0 0.0
      %2026 = vmatprep.subr.mxu0 0.0
      %2027 = vmatpush1.msra.mxu0 0.0
      %2028 = vmatprep.subr.mxu0 0.0
      %2029 = vmatpush1.msra.mxu0 0.0
      %2030 = vmatprep.subr.mxu0 0.0
      %2031 = vmatpush1.msra.mxu0 0.0
      %2032 = vmatprep.subr.mxu0 0.0
      %2033 = vmatpush1.msra.mxu0 0.0
      %2034 = vmatprep.subr.mxu0 0.0
      %2035 = vmatpush1.msra.mxu0 0.0
      %2036 = vmatprep.subr.mxu0 0.0
      %2037 = vmatpush1.msra.mxu0 0.0
      %2038 = vmatprep.subr.mxu0 0.0
      %2039 = vmatpush1.msra.mxu0 0.0
      %2040 = vmatprep.subr.mxu0 0.0
      %2041 = vmatpush1.msra.mxu0 0.0
      %2042 = vmatprep.subr.mxu0 0.0
      %2043 = vmatpush1.msra.mxu0 0.0
      %2044 = vmatprep.subr.mxu0 0.0
      %2045 = vmatpush1.msra.mxu0 0.0
      %2046 = vmatprep.subr.mxu0 0.0
      %2047 = vmatpush1.msra.mxu0 0.0
      %2048 = vmatprep.subr.mxu0 0.0
      %2049 = vmatpush1.msra.mxu0 0.0
      %2050 = vmatprep.subr.mxu0 0.0
      %2051 = vmatpush1.msra.mxu0 0.0
      %2052 = vmatprep.subr.mxu0 0.0
      %2053 = vmatpush1.msra.mxu0 0.0
      %2054 = vmatprep.subr.mxu0 0.0
      %2055 = vmatpush1.msra.mxu0 0.0
      %2056 = vmatprep.subr.mxu0 0.0
      %2057 = vmatpush1.msra.mxu0 0.0
      %2058 = vmatprep.subr.mxu0 0.0
      %2059 = vmatpush1.msra.mxu0 0.0
      %2060 = vmatprep.mubr.f32.mxu0 0.0
      %2061 = vmatmul.mubr.f32.gmra.mrb[0].mxu0 %v1889
      %v2062 = vpop.f32.mrb[0].mxu0
      %v2063 = vadd.f32 0.0, %v2062
      %v2064 = vpop.f32.mrb[0].mxu0
      %2065 = vmatprep.mubr.f32.mxu0 0.0
      %2066 = vmatmul.mubr.f32.gmra.mrb[0].mxu0 %v1892
      %v2067 = vpop.f32.mrb[0].mxu0
      %v2068 = vadd.f32 0.0, %v2067
      %v2069 = vpop.f32.mrb[0].mxu0
      %2070 = vmatprep.mubr.f32.mxu0 0.0
      %2071 = vmatmul.mubr.f32.gmra.mrb[0].mxu0 %v1895
      %v2072 = vpop.f32.mrb[0].mxu0
      %v2073 = vadd.f32 0.0, %v2072
      %v2074 = vpop.f32.mrb[0].mxu0
      %2075 = vmatprep.mubr.f32.mxu0 0.0
      %2076 = vmatmul.mubr.f32.gmra.mrb[0].mxu0 %v1898
      %v2077 = vpop.f32.mrb[0].mxu0
      %v2078 = vadd.f32 0.0, %v2077
      %v2079 = vpop.f32.mrb[0].mxu0
      %2080 = vmatprep.mubr.f32.mxu0 0.0
      %2081 = vmatmul.mubr.f32.gmra.mrb[0].mxu0 %v1901
      %v2082 = vpop.f32.mrb[0].mxu0
      %v2083 = vadd.f32 0.0, %v2082
      %v2084 = vpop.f32.mrb[0].mxu0
      %2085 = vmatprep.mubr.f32.mxu0 0.0
      %2086 = vmatmul.mubr.f32.gmra.mrb[0].mxu0 %v1904
      %v2087 = vpop.f32.mrb[0].mxu0
      %v2088 = vadd.f32 0.0, %v2087
      %v2089 = vpop.f32.mrb[0].mxu0
      %2090 = vmatprep.mubr.f32.mxu0 0.0
      %2091 = vmatmul.mubr.f32.gmra.mrb[0].mxu0 %v1907
      %v2092 = vpop.f32.mrb[0].mxu0
      %v2093 = vadd.f32 0.0, %v2092
      %v2094 = vpop.f32.mrb[0].mxu0
      %2095 = vmatprep.mubr.f32.mxu0 0.0
      %2096 = vmatmul.mubr.f32.gmra.mrb[0].mxu0 %v1910
      %v2097 = vpop.f32.mrb[0].mxu0
      %v2098 = vadd.f32 0.0, %v2097
      %v2099 = vpop.f32.mrb[0].mxu0
      %2100 = vmatprep.mubr.f32.mxu0 0.0
      %2101 = vmatmul.mubr.f32.gmra.mrb[0].mxu0 %v1913
      %v2102 = vpop.f32.mrb[0].mxu0
      %v2103 = vadd.f32 0.0, %v2102
      %v2104 = vpop.f32.mrb[0].mxu0
      %2105 = vmatprep.mubr.f32.mxu0 0.0
      %2106 = vmatmul.mubr.f32.gmra.mrb[0].mxu0 %v1916
      %v2107 = vpop.f32.mrb[0].mxu0
      %v2108 = vadd.f32 0.0, %v2107
      %v2109 = vpop.f32.mrb[0].mxu0
      %2110 = vmatprep.mubr.f32.mxu0 0.0
      %2111 = vmatmul.mubr.f32.gmra.mrb[0].mxu0 %v1919
      %v2112 = vpop.f32.mrb[0].mxu0
      %v2113 = vadd.f32 0.0, %v2112
      %v2114 = vpop.f32.mrb[0].mxu0
      %2115 = vmatprep.mubr.f32.mxu0 0.0
      %2116 = vmatmul.mubr.f32.gmra.mrb[0].mxu0 %v1922
      %v2117 = vpop.f32.mrb[0].mxu0
      %v2118 = vadd.f32 0.0, %v2117
      %v2119 = vpop.f32.mrb[0].mxu0
      %2120 = vmatprep.mubr.f32.mxu0 0.0
      %2121 = vmatmul.mubr.f32.gmra.mrb[0].mxu0 %v1925
      %v2122 = vpop.f32.mrb[0].mxu0
      %v2123 = vadd.f32 0.0, %v2122
      %v2124 = vpop.f32.mrb[0].mxu0
      %2125 = vmatprep.mubr.f32.mxu0 0.0
      %2126 = vmatmul.mubr.f32.gmra.mrb[0].mxu0 %v1928
      %v2127 = vpop.f32.mrb[0].mxu0
      %v2128 = vadd.f32 0.0, %v2127
      %v2129 = vpop.f32.mrb[0].mxu0
      %2130 = vmatprep.mubr.f32.mxu0 0.0
      %2131 = vmatmul.mubr.f32.gmra.mrb[0].mxu0 %v1931
      %v2132 = vpop.f32.mrb[0].mxu0
      %v2133 = vadd.f32 0.0, %v2132
      %v2134 = vpop.f32.mrb[0].mxu0
      %2135 = vmatprep.mubr.f32.mxu0 0.0
      %2136 = vmatmul.mubr.f32.gmra.mrb[0].mxu0 %v1934
      %v2137 = vpop.f32.mrb[0].mxu0
      %v2138 = vadd.f32 0.0, %v2137
      %v2139 = vpop.f32.mrb[0].mxu0
      %2140 = vmatprep.mubr.f32.mxu0 0.0
      %2141 = vmatmul.mubr.f32.gmra.mrb[0].mxu0 %v1937
      %v2142 = vpop.f32.mrb[0].mxu0
      %v2143 = vadd.f32 0.0, %v2142
      %v2144 = vpop.f32.mrb[0].mxu0
      %2145 = vmatprep.mubr.f32.mxu0 0.0
      %2146 = vmatmul.mubr.f32.gmra.mrb[0].mxu0 %v1940
      %v2147 = vpop.f32.mrb[0].mxu0
      %v2148 = vadd.f32 0.0, %v2147
      %v2149 = vpop.f32.mrb[0].mxu0
      %2150 = vmatprep.mubr.f32.mxu0 0.0
      %2151 = vmatmul.mubr.f32.gmra.mrb[0].mxu0 %v1943
      %v2152 = vpop.f32.mrb[0].mxu0
      %v2153 = vadd.f32 0.0, %v2152
      %v2154 = vpop.f32.mrb[0].mxu0
      %2155 = vmatprep.mubr.f32.mxu0 0.0
      %2156 = vmatmul.mubr.f32.gmra.mrb[0].mxu0 %v1946
      %v2157 = vpop.f32.mrb[0].mxu0
      %v2158 = vadd.f32 0.0, %v2157
      %v2159 = vpop.f32.mrb[0].mxu0
      %2160 = vmatprep.mubr.f32.mxu0 0.0
      %2161 = vmatmul.mubr.f32.gmra.mrb[0].mxu0 %v1949
      %v2162 = vpop.f32.mrb[0].mxu0
      %v2163 = vadd.f32 0.0, %v2162
      %v2164 = vpop.f32.mrb[0].mxu0
      %2165 = vmatprep.mubr.f32.mxu0 0.0
      %2166 = vmatmul.mubr.f32.gmra.mrb[0].mxu0 %v1952
      %v2167 = vpop.f32.mrb[0].mxu0
      %v2168 = vadd.f32 0.0, %v2167
      %v2169 = vpop.f32.mrb[0].mxu0
      %2170 = vmatprep.mubr.f32.mxu0 0.0
      %2171 = vmatmul.mubr.f32.gmra.mrb[0].mxu0 %v1955
      %v2172 = vpop.f32.mrb[0].mxu0
      %v2173 = vadd.f32 0.0, %v2172
      %v2174 = vpop.f32.mrb[0].mxu0
      %2175 = vmatprep.mubr.f32.mxu0 0.0
      %2176 = vmatmul.mubr.f32.gmra.mrb[0].mxu0 %v1958
      %v2177 = vpop.f32.mrb[0].mxu0
      %v2178 = vadd.f32 0.0, %v2177
      %v2179 = vpop.f32.mrb[0].mxu0
      %2180 = vmatprep.mubr.f32.mxu0 0.0
      %2181 = vmatmul.mubr.f32.gmra.mrb[0].mxu0 %v1961
      %v2182 = vpop.f32.mrb[0].mxu0
      %v2183 = vadd.f32 0.0, %v2182
      %v2184 = vpop.f32.mrb[0].mxu0
      %2185 = vmatprep.mubr.f32.mxu0 0.0
      %2186 = vmatmul.mubr.f32.gmra.mrb[0].mxu0 %v1964
      %v2187 = vpop.f32.mrb[0].mxu0
      %v2188 = vadd.f32 0.0, %v2187
      %v2189 = vpop.f32.mrb[0].mxu0
      %2190 = vmatprep.mubr.f32.mxu0 0.0
      %2191 = vmatmul.mubr.f32.gmra.mrb[0].mxu0 %v1967
      %v2192 = vpop.f32.mrb[0].mxu0
      %v2193 = vadd.f32 0.0, %v2192
      %v2194 = vpop.f32.mrb[0].mxu0
      %2195 = vmatprep.mubr.f32.mxu0 0.0
      %2196 = vmatmul.mubr.f32.gmra.mrb[0].mxu0 %v1970
      %v2197 = vpop.f32.mrb[0].mxu0
      %v2198 = vadd.f32 0.0, %v2197
      %v2199 = vpop.f32.mrb[0].mxu0
      %2200 = vmatprep.mubr.f32.mxu0 0.0
      %2201 = vmatmul.mubr.f32.gmra.mrb[0].mxu0 %v1973
      %v2202 = vpop.f32.mrb[0].mxu0
      %v2203 = vadd.f32 0.0, %v2202
      %v2204 = vpop.f32.mrb[0].mxu0
      %2205 = vmatprep.mubr.f32.mxu0 0.0
      %2206 = vmatmul.mubr.f32.gmra.mrb[0].mxu0 %v1976
      %v2207 = vpop.f32.mrb[0].mxu0
      %v2208 = vadd.f32 0.0, %v2207
      %v2209 = vpop.f32.mrb[0].mxu0
      %2210 = vmatprep.mubr.f32.mxu0 0.0
      %2211 = vmatmul.mubr.f32.gmra.mrb[0].mxu0 %v1979
      %v2212 = vpop.f32.mrb[0].mxu0
      %v2213 = vadd.f32 0.0, %v2212
      %v2214 = vpop.f32.mrb[0].mxu0
      %2215 = vmatprep.mubr.f32.mxu0 0.0
      %2216 = vmatmul.mubr.f32.gmra.mrb[0].mxu0 %v1982
      %v2217 = vpop.f32.mrb[0].mxu0
      %v2218 = vadd.f32 0.0, %v2217
      %v2219 = vpop.f32.mrb[0].mxu0
      %2220 = vmatprep.mubr.f32.mxu0 0.0
      %2221 = vmatmul.mubr.f32.gmra.mrb[0].mxu0 %v1985
      %v2222 = vpop.f32.mrb[0].mxu0
      %v2223 = vadd.f32 0.0, %v2222
      %v2224 = vpop.f32.mrb[0].mxu0
      %2225 = vmatprep.mubr.f32.mxu0 0.0
      %2226 = vmatmul.mubr.f32.gmra.mrb[0].mxu0 %v1988
      %v2227 = vpop.f32.mrb[0].mxu0
      %v2228 = vadd.f32 0.0, %v2227
      %v2229 = vpop.f32.mrb[0].mxu0
      %2230 = vmatprep.mubr.f32.mxu0 0.0
      %2231 = vmatmul.mubr.f32.gmra.mrb[0].mxu0 %v1991
      %v2232 = vpop.f32.mrb[0].mxu0
      %v2233 = vadd.f32 0.0, %v2232
      %v2234 = vpop.f32.mrb[0].mxu0
      %2235 = vmatprep.mubr.f32.mxu0 0.0
      %2236 = vmatmul.mubr.f32.gmra.mrb[0].mxu0 %v1994
      %v2237 = vpop.f32.mrb[0].mxu0
      %v2238 = vadd.f32 0.0, %v2237
      %v2239 = vpop.f32.mrb[0].mxu0
      %2240 = vdwg.mxu0
      %v2241 = vadd.f32 %v1814, %v2063
      %v2242 = vadd.f32 %v1815, %v2068
      %v2243 = vadd.f32 %v1816, %v2073
      %v2244 = vadd.f32 %v1817, %v2078
      %v2245 = vadd.f32 %v1818, %v2083
      %v2246 = vadd.f32 %v1819, %v2088
      %v2247 = vadd.f32 %v1820, %v2093
      %v2248 = vadd.f32 %v1821, %v2098
      %v2249 = vadd.f32 %v1822, %v2103
      %v2250 = vadd.f32 %v1823, %v2108
      %v2251 = vadd.f32 %v1824, %v2113
      %v2252 = vadd.f32 %v1825, %v2118
      %v2253 = vadd.f32 %v1826, %v2123
      %v2254 = vadd.f32 %v1827, %v2128
      %v2255 = vadd.f32 %v1828, %v2133
      %v2256 = vadd.f32 %v1829, %v2138
      %v2257 = vadd.f32 %v1830, %v2143
      %v2258 = vadd.f32 %v1831, %v2148
      %v2259 = vadd.f32 %v1832, %v2153
      %v2260 = vadd.f32 %v1833, %v2158
      %v2261 = vadd.f32 %v1834, %v2163
      %v2262 = vadd.f32 %v1835, %v2168
      %v2263 = vadd.f32 %v1836, %v2173
      %v2264 = vadd.f32 %v1837, %v2178
      %v2265 = vadd.f32 %v1838, %v2183
      %v2266 = vadd.f32 %v1839, %v2188
      %v2267 = vadd.f32 %v1840, %v2193
      %v2268 = vadd.f32 %v1841, %v2198
      %v2269 = vadd.f32 %v1842, %v2203
      %v2270 = vadd.f32 %v1843, %v2208
      %v2271 = vadd.f32 %v1844, %v2213
      %v2272 = vadd.f32 %v1845, %v2218
      %v2273 = vadd.f32 %v1846, %v2223
      %v2274 = vadd.f32 %v1847, %v2228
      %v2275 = vadd.f32 %v1848, %v2233
      %v2276 = vadd.f32 %v1849, %v2238
      %v2277 = vld [vmem:[%s198 + $0x14] sm:$0xff]
      %v2278 = vld [vmem:[%s198 + $0x1c] sm:$0xff]
      %v2279 = vld [vmem:[%s198 + $0x24] sm:$0xff]
      %v2280 = vld [vmem:[%s198 + $0x2c] sm:$0xff]
      %v2281 = vld [vmem:[%s198 + $0x34] sm:$0xff]
      %v2282 = vld [vmem:[%s198 + $0x3c] sm:$0xff]
      %v2283 = vld [vmem:[%s198 + $0x44] sm:$0xff]
      %v2284 = vld [vmem:[%s198 + $0x4c] sm:$0xff]
      %v2285 = vld [vmem:[%s198 + $0x54] sm:$0xff]
      %v2286 = vld [vmem:[%s198 + $0x5c] sm:$0xff]
      %v2287 = vld [vmem:[%s198 + $0x64] sm:$0xff]
      %v2288 = vld [vmem:[%s198 + $0x6c] sm:$0xff]
      %v2289 = vld [vmem:[%s198 + $0x74] sm:$0xff]
      %v2290 = vld [vmem:[%s198 + $0x7c] sm:$0xff]
      %v2291 = vld [vmem:[%s198 + $0x84] sm:$0xff]
      %v2292 = vld [vmem:[%s198 + $0x8c] sm:$0xff]
      %v2293 = vld [vmem:[%s198 + $0x94] sm:$0xff]
      %v2294 = vld [vmem:[%s198 + $0x9c] sm:$0xff]
      %v2295 = vld [vmem:[%s198 + $0xa4] sm:$0xff]
      %v2296 = vld [vmem:[%s198 + $0xac] sm:$0xff]
      %v2297 = vld [vmem:[%s198 + $0xb4] sm:$0xff]
      %v2298 = vld [vmem:[%s198 + $0xbc] sm:$0xff]
      %v2299 = vld [vmem:[%s198 + $0xc4] sm:$0xff]
      %v2300 = vld [vmem:[%s198 + $0xcc] sm:$0xff]
      %v2301 = vld [vmem:[%s198 + $0xd4] sm:$0xff]
      %v2302 = vld [vmem:[%s198 + $0xdc] sm:$0xff]
      %v2303 = vld [vmem:[%s198 + $0xe4] sm:$0xff]
      %v2304 = vld [vmem:[%s198 + $0xec] sm:$0xff]
      %v2305 = vld [vmem:[%s198 + $0xf4] sm:$0xff]
      %v2306 = vld [vmem:[%s198 + $0xfc] sm:$0xff]
      %v2307 = vld [vmem:[%s198 + $0x104] sm:$0xff]
      %v2308 = vld [vmem:[%s198 + $0x10c] sm:$0xff]
      %v2309 = vld [vmem:[%s198 + $0x114] sm:$0xff]
      %v2310 = vld [vmem:[%s198 + $0x11c] sm:$0xff]
      %v2311 = vld [vmem:[%s198 + $0x124] sm:$0xff]
      %v2312 = vld [vmem:[%s198 + $0x12c] sm:$0xff]
      %s2313 = scalar_lea.vmem %s204, 40
      %v2314 = vld [vmem:[%s2313] sm:$0xff]
      %v2316 = vsel %vm289, %v2277, 0
      %v2319 = vsel %vm289, %v2278, 0
      %v2322 = vsel %vm289, %v2279, 0
      %v2325 = vsel %vm289, %v2280, 0
      %v2328 = vsel %vm289, %v2281, 0
      %v2331 = vsel %vm289, %v2282, 0
      %v2334 = vsel %vm289, %v2283, 0
      %v2337 = vsel %vm289, %v2284, 0
      %v2340 = vsel %vm289, %v2285, 0
      %v2343 = vsel %vm289, %v2286, 0
      %v2346 = vsel %vm289, %v2287, 0
      %v2349 = vsel %vm289, %v2288, 0
      %v2352 = vsel %vm289, %v2289, 0
      %v2355 = vsel %vm289, %v2290, 0
      %v2358 = vsel %vm289, %v2291, 0
      %v2361 = vsel %vm289, %v2292, 0
      %v2364 = vsel %vm289, %v2293, 0
      %v2367 = vsel %vm289, %v2294, 0
      %v2370 = vsel %vm289, %v2295, 0
      %v2373 = vsel %vm289, %v2296, 0
      %v2376 = vsel %vm289, %v2297, 0
      %v2379 = vsel %vm289, %v2298, 0
      %v2382 = vsel %vm289, %v2299, 0
      %v2385 = vsel %vm289, %v2300, 0
      %v2388 = vsel %vm289, %v2301, 0
      %v2391 = vsel %vm289, %v2302, 0
      %v2394 = vsel %vm289, %v2303, 0
      %v2397 = vsel %vm289, %v2304, 0
      %v2400 = vsel %vm289, %v2305, 0
      %v2403 = vsel %vm289, %v2306, 0
      %v2406 = vsel %vm289, %v2307, 0
      %v2409 = vsel %vm289, %v2308, 0
      %v2412 = vsel %vm289, %v2309, 0
      %v2415 = vsel %vm289, %v2310, 0
      %v2418 = vsel %vm289, %v2311, 0
      %v2421 = vsel %vm289, %v2312, 0
      %2423 = vmatprep.subr.mxu0 0.0
      %2424 = vmatpush1.msra.mxu0 %v2314
      %2425 = vmatprep.subr.mxu0 0.0
      %2426 = vmatpush1.msra.mxu0 0.0
      %2427 = vmatprep.subr.mxu0 0.0
      %2428 = vmatpush1.msra.mxu0 0.0
      %2429 = vmatprep.subr.mxu0 0.0
      %2430 = vmatpush1.msra.mxu0 0.0
      %2431 = vmatprep.subr.mxu0 0.0
      %2432 = vmatpush1.msra.mxu0 0.0
      %2433 = vmatprep.subr.mxu0 0.0
      %2434 = vmatpush1.msra.mxu0 0.0
      %2435 = vmatprep.subr.mxu0 0.0
      %2436 = vmatpush1.msra.mxu0 0.0
      %2437 = vmatprep.subr.mxu0 0.0
      %2438 = vmatpush1.msra.mxu0 0.0
      %2439 = vmatprep.subr.mxu0 0.0
      %2440 = vmatpush1.msra.mxu0 0.0
      %2441 = vmatprep.subr.mxu0 0.0
      %2442 = vmatpush1.msra.mxu0 0.0
      %2443 = vmatprep.subr.mxu0 0.0
      %2444 = vmatpush1.msra.mxu0 0.0
      %2445 = vmatprep.subr.mxu0 0.0
      %2446 = vmatpush1.msra.mxu0 0.0
      %2447 = vmatprep.subr.mxu0 0.0
      %2448 = vmatpush1.msra.mxu0 0.0
      %2449 = vmatprep.subr.mxu0 0.0
      %2450 = vmatpush1.msra.mxu0 0.0
      %2451 = vmatprep.subr.mxu0 0.0
      %2452 = vmatpush1.msra.mxu0 0.0
      %2453 = vmatprep.subr.mxu0 0.0
      %2454 = vmatpush1.msra.mxu0 0.0
      %2455 = vmatprep.subr.mxu0 0.0
      %2456 = vmatpush1.msra.mxu0 0.0
      %2457 = vmatprep.subr.mxu0 0.0
      %2458 = vmatpush1.msra.mxu0 0.0
      %2459 = vmatprep.subr.mxu0 0.0
      %2460 = vmatpush1.msra.mxu0 0.0
      %2461 = vmatprep.subr.mxu0 0.0
      %2462 = vmatpush1.msra.mxu0 0.0
      %2463 = vmatprep.subr.mxu0 0.0
      %2464 = vmatpush1.msra.mxu0 0.0
      %2465 = vmatprep.subr.mxu0 0.0
      %2466 = vmatpush1.msra.mxu0 0.0
      %2467 = vmatprep.subr.mxu0 0.0
      %2468 = vmatpush1.msra.mxu0 0.0
      %2469 = vmatprep.subr.mxu0 0.0
      %2470 = vmatpush1.msra.mxu0 0.0
      %2471 = vmatprep.subr.mxu0 0.0
      %2472 = vmatpush1.msra.mxu0 0.0
      %2473 = vmatprep.subr.mxu0 0.0
      %2474 = vmatpush1.msra.mxu0 0.0
      %2475 = vmatprep.subr.mxu0 0.0
      %2476 = vmatpush1.msra.mxu0 0.0
      %2477 = vmatprep.subr.mxu0 0.0
      %2478 = vmatpush1.msra.mxu0 0.0
      %2479 = vmatprep.subr.mxu0 0.0
      %2480 = vmatpush1.msra.mxu0 0.0
      %2481 = vmatprep.subr.mxu0 0.0
      %2482 = vmatpush1.msra.mxu0 0.0
      %2483 = vmatprep.subr.mxu0 0.0
      %2484 = vmatpush1.msra.mxu0 0.0
      %2485 = vmatprep.subr.mxu0 0.0
      %2486 = vmatpush1.msra.mxu0 0.0
      %2487 = vmatprep.mubr.f32.mxu0 0.0
      %2488 = vmatmul.mubr.f32.gmra.mrb[0].mxu0 %v2316
      %v2489 = vpop.f32.mrb[0].mxu0
      %v2490 = vadd.f32 0.0, %v2489
      %v2491 = vpop.f32.mrb[0].mxu0
      %2492 = vmatprep.mubr.f32.mxu0 0.0
      %2493 = vmatmul.mubr.f32.gmra.mrb[0].mxu0 %v2319
      %v2494 = vpop.f32.mrb[0].mxu0
      %v2495 = vadd.f32 0.0, %v2494
      %v2496 = vpop.f32.mrb[0].mxu0
      %2497 = vmatprep.mubr.f32.mxu0 0.0
      %2498 = vmatmul.mubr.f32.gmra.mrb[0].mxu0 %v2322
      %v2499 = vpop.f32.mrb[0].mxu0
      %v2500 = vadd.f32 0.0, %v2499
      %v2501 = vpop.f32.mrb[0].mxu0
      %2502 = vmatprep.mubr.f32.mxu0 0.0
      %2503 = vmatmul.mubr.f32.gmra.mrb[0].mxu0 %v2325
      %v2504 = vpop.f32.mrb[0].mxu0
      %v2505 = vadd.f32 0.0, %v2504
      %v2506 = vpop.f32.mrb[0].mxu0
      %2507 = vmatprep.mubr.f32.mxu0 0.0
      %2508 = vmatmul.mubr.f32.gmra.mrb[0].mxu0 %v2328
      %v2509 = vpop.f32.mrb[0].mxu0
      %v2510 = vadd.f32 0.0, %v2509
      %v2511 = vpop.f32.mrb[0].mxu0
      %2512 = vmatprep.mubr.f32.mxu0 0.0
      %2513 = vmatmul.mubr.f32.gmra.mrb[0].mxu0 %v2331
      %v2514 = vpop.f32.mrb[0].mxu0
      %v2515 = vadd.f32 0.0, %v2514
      %v2516 = vpop.f32.mrb[0].mxu0
      %2517 = vmatprep.mubr.f32.mxu0 0.0
      %2518 = vmatmul.mubr.f32.gmra.mrb[0].mxu0 %v2334
      %v2519 = vpop.f32.mrb[0].mxu0
      %v2520 = vadd.f32 0.0, %v2519
      %v2521 = vpop.f32.mrb[0].mxu0
      %2522 = vmatprep.mubr.f32.mxu0 0.0
      %2523 = vmatmul.mubr.f32.gmra.mrb[0].mxu0 %v2337
      %v2524 = vpop.f32.mrb[0].mxu0
      %v2525 = vadd.f32 0.0, %v2524
      %v2526 = vpop.f32.mrb[0].mxu0
      %2527 = vmatprep.mubr.f32.mxu0 0.0
      %2528 = vmatmul.mubr.f32.gmra.mrb[0].mxu0 %v2340
      %v2529 = vpop.f32.mrb[0].mxu0
      %v2530 = vadd.f32 0.0, %v2529
      %v2531 = vpop.f32.mrb[0].mxu0
      %2532 = vmatprep.mubr.f32.mxu0 0.0
      %2533 = vmatmul.mubr.f32.gmra.mrb[0].mxu0 %v2343
      %v2534 = vpop.f32.mrb[0].mxu0
      %v2535 = vadd.f32 0.0, %v2534
      %v2536 = vpop.f32.mrb[0].mxu0
      %2537 = vmatprep.mubr.f32.mxu0 0.0
      %2538 = vmatmul.mubr.f32.gmra.mrb[0].mxu0 %v2346
      %v2539 = vpop.f32.mrb[0].mxu0
      %v2540 = vadd.f32 0.0, %v2539
      %v2541 = vpop.f32.mrb[0].mxu0
      %2542 = vmatprep.mubr.f32.mxu0 0.0
      %2543 = vmatmul.mubr.f32.gmra.mrb[0].mxu0 %v2349
      %v2544 = vpop.f32.mrb[0].mxu0
      %v2545 = vadd.f32 0.0, %v2544
      %v2546 = vpop.f32.mrb[0].mxu0
      %2547 = vmatprep.mubr.f32.mxu0 0.0
      %2548 = vmatmul.mubr.f32.gmra.mrb[0].mxu0 %v2352
      %v2549 = vpop.f32.mrb[0].mxu0
      %v2550 = vadd.f32 0.0, %v2549
      %v2551 = vpop.f32.mrb[0].mxu0
      %2552 = vmatprep.mubr.f32.mxu0 0.0
      %2553 = vmatmul.mubr.f32.gmra.mrb[0].mxu0 %v2355
      %v2554 = vpop.f32.mrb[0].mxu0
      %v2555 = vadd.f32 0.0, %v2554
      %v2556 = vpop.f32.mrb[0].mxu0
      %2557 = vmatprep.mubr.f32.mxu0 0.0
      %2558 = vmatmul.mubr.f32.gmra.mrb[0].mxu0 %v2358
      %v2559 = vpop.f32.mrb[0].mxu0
      %v2560 = vadd.f32 0.0, %v2559
      %v2561 = vpop.f32.mrb[0].mxu0
      %2562 = vmatprep.mubr.f32.mxu0 0.0
      %2563 = vmatmul.mubr.f32.gmra.mrb[0].mxu0 %v2361
      %v2564 = vpop.f32.mrb[0].mxu0
      %v2565 = vadd.f32 0.0, %v2564
      %v2566 = vpop.f32.mrb[0].mxu0
      %2567 = vmatprep.mubr.f32.mxu0 0.0
      %2568 = vmatmul.mubr.f32.gmra.mrb[0].mxu0 %v2364
      %v2569 = vpop.f32.mrb[0].mxu0
      %v2570 = vadd.f32 0.0, %v2569
      %v2571 = vpop.f32.mrb[0].mxu0
      %2572 = vmatprep.mubr.f32.mxu0 0.0
      %2573 = vmatmul.mubr.f32.gmra.mrb[0].mxu0 %v2367
      %v2574 = vpop.f32.mrb[0].mxu0
      %v2575 = vadd.f32 0.0, %v2574
      %v2576 = vpop.f32.mrb[0].mxu0
      %2577 = vmatprep.mubr.f32.mxu0 0.0
      %2578 = vmatmul.mubr.f32.gmra.mrb[0].mxu0 %v2370
      %v2579 = vpop.f32.mrb[0].mxu0
      %v2580 = vadd.f32 0.0, %v2579
      %v2581 = vpop.f32.mrb[0].mxu0
      %2582 = vmatprep.mubr.f32.mxu0 0.0
      %2583 = vmatmul.mubr.f32.gmra.mrb[0].mxu0 %v2373
      %v2584 = vpop.f32.mrb[0].mxu0
      %v2585 = vadd.f32 0.0, %v2584
      %v2586 = vpop.f32.mrb[0].mxu0
      %2587 = vmatprep.mubr.f32.mxu0 0.0
      %2588 = vmatmul.mubr.f32.gmra.mrb[0].mxu0 %v2376
      %v2589 = vpop.f32.mrb[0].mxu0
      %v2590 = vadd.f32 0.0, %v2589
      %v2591 = vpop.f32.mrb[0].mxu0
      %2592 = vmatprep.mubr.f32.mxu0 0.0
      %2593 = vmatmul.mubr.f32.gmra.mrb[0].mxu0 %v2379
      %v2594 = vpop.f32.mrb[0].mxu0
      %v2595 = vadd.f32 0.0, %v2594
      %v2596 = vpop.f32.mrb[0].mxu0
      %2597 = vmatprep.mubr.f32.mxu0 0.0
      %2598 = vmatmul.mubr.f32.gmra.mrb[0].mxu0 %v2382
      %v2599 = vpop.f32.mrb[0].mxu0
      %v2600 = vadd.f32 0.0, %v2599
      %v2601 = vpop.f32.mrb[0].mxu0
      %2602 = vmatprep.mubr.f32.mxu0 0.0
      %2603 = vmatmul.mubr.f32.gmra.mrb[0].mxu0 %v2385
      %v2604 = vpop.f32.mrb[0].mxu0
      %v2605 = vadd.f32 0.0, %v2604
      %v2606 = vpop.f32.mrb[0].mxu0
      %2607 = vmatprep.mubr.f32.mxu0 0.0
      %2608 = vmatmul.mubr.f32.gmra.mrb[0].mxu0 %v2388
      %v2609 = vpop.f32.mrb[0].mxu0
      %v2610 = vadd.f32 0.0, %v2609
      %v2611 = vpop.f32.mrb[0].mxu0
      %2612 = vmatprep.mubr.f32.mxu0 0.0
      %2613 = vmatmul.mubr.f32.gmra.mrb[0].mxu0 %v2391
      %v2614 = vpop.f32.mrb[0].mxu0
      %v2615 = vadd.f32 0.0, %v2614
      %v2616 = vpop.f32.mrb[0].mxu0
      %2617 = vmatprep.mubr.f32.mxu0 0.0
      %2618 = vmatmul.mubr.f32.gmra.mrb[0].mxu0 %v2394
      %v2619 = vpop.f32.mrb[0].mxu0
      %v2620 = vadd.f32 0.0, %v2619
      %v2621 = vpop.f32.mrb[0].mxu0
      %2622 = vmatprep.mubr.f32.mxu0 0.0
      %2623 = vmatmul.mubr.f32.gmra.mrb[0].mxu0 %v2397
      %v2624 = vpop.f32.mrb[0].mxu0
      %v2625 = vadd.f32 0.0, %v2624
      %v2626 = vpop.f32.mrb[0].mxu0
      %2627 = vmatprep.mubr.f32.mxu0 0.0
      %2628 = vmatmul.mubr.f32.gmra.mrb[0].mxu0 %v2400
      %v2629 = vpop.f32.mrb[0].mxu0
      %v2630 = vadd.f32 0.0, %v2629
      %v2631 = vpop.f32.mrb[0].mxu0
      %2632 = vmatprep.mubr.f32.mxu0 0.0
      %2633 = vmatmul.mubr.f32.gmra.mrb[0].mxu0 %v2403
      %v2634 = vpop.f32.mrb[0].mxu0
      %v2635 = vadd.f32 0.0, %v2634
      %v2636 = vpop.f32.mrb[0].mxu0
      %2637 = vmatprep.mubr.f32.mxu0 0.0
      %2638 = vmatmul.mubr.f32.gmra.mrb[0].mxu0 %v2406
      %v2639 = vpop.f32.mrb[0].mxu0
      %v2640 = vadd.f32 0.0, %v2639
      %v2641 = vpop.f32.mrb[0].mxu0
      %2642 = vmatprep.mubr.f32.mxu0 0.0
      %2643 = vmatmul.mubr.f32.gmra.mrb[0].mxu0 %v2409
      %v2644 = vpop.f32.mrb[0].mxu0
      %v2645 = vadd.f32 0.0, %v2644
      %v2646 = vpop.f32.mrb[0].mxu0
      %2647 = vmatprep.mubr.f32.mxu0 0.0
      %2648 = vmatmul.mubr.f32.gmra.mrb[0].mxu0 %v2412
      %v2649 = vpop.f32.mrb[0].mxu0
      %v2650 = vadd.f32 0.0, %v2649
      %v2651 = vpop.f32.mrb[0].mxu0
      %2652 = vmatprep.mubr.f32.mxu0 0.0
      %2653 = vmatmul.mubr.f32.gmra.mrb[0].mxu0 %v2415
      %v2654 = vpop.f32.mrb[0].mxu0
      %v2655 = vadd.f32 0.0, %v2654
      %v2656 = vpop.f32.mrb[0].mxu0
      %2657 = vmatprep.mubr.f32.mxu0 0.0
      %2658 = vmatmul.mubr.f32.gmra.mrb[0].mxu0 %v2418
      %v2659 = vpop.f32.mrb[0].mxu0
      %v2660 = vadd.f32 0.0, %v2659
      %v2661 = vpop.f32.mrb[0].mxu0
      %2662 = vmatprep.mubr.f32.mxu0 0.0
      %2663 = vmatmul.mubr.f32.gmra.mrb[0].mxu0 %v2421
      %v2664 = vpop.f32.mrb[0].mxu0
      %v2665 = vadd.f32 0.0, %v2664
      %v2666 = vpop.f32.mrb[0].mxu0
      %2667 = vdwg.mxu0
      %v2668 = vadd.f32 %v2241, %v2490
      %v2669 = vadd.f32 %v2242, %v2495
      %v2670 = vadd.f32 %v2243, %v2500
      %v2671 = vadd.f32 %v2244, %v2505
      %v2672 = vadd.f32 %v2245, %v2510
      %v2673 = vadd.f32 %v2246, %v2515
      %v2674 = vadd.f32 %v2247, %v2520
      %v2675 = vadd.f32 %v2248, %v2525
      %v2676 = vadd.f32 %v2249, %v2530
      %v2677 = vadd.f32 %v2250, %v2535
      %v2678 = vadd.f32 %v2251, %v2540
      %v2679 = vadd.f32 %v2252, %v2545
      %v2680 = vadd.f32 %v2253, %v2550
      %v2681 = vadd.f32 %v2254, %v2555
      %v2682 = vadd.f32 %v2255, %v2560
      %v2683 = vadd.f32 %v2256, %v2565
      %v2684 = vadd.f32 %v2257, %v2570
      %v2685 = vadd.f32 %v2258, %v2575
      %v2686 = vadd.f32 %v2259, %v2580
      %v2687 = vadd.f32 %v2260, %v2585
      %v2688 = vadd.f32 %v2261, %v2590
      %v2689 = vadd.f32 %v2262, %v2595
      %v2690 = vadd.f32 %v2263, %v2600
      %v2691 = vadd.f32 %v2264, %v2605
      %v2692 = vadd.f32 %v2265, %v2610
      %v2693 = vadd.f32 %v2266, %v2615
      %v2694 = vadd.f32 %v2267, %v2620
      %v2695 = vadd.f32 %v2268, %v2625
      %v2696 = vadd.f32 %v2269, %v2630
      %v2697 = vadd.f32 %v2270, %v2635
      %v2698 = vadd.f32 %v2271, %v2640
      %v2699 = vadd.f32 %v2272, %v2645
      %v2700 = vadd.f32 %v2273, %v2650
      %v2701 = vadd.f32 %v2274, %v2655
      %v2702 = vadd.f32 %v2275, %v2660
      %v2703 = vadd.f32 %v2276, %v2665
      %v2704 = vld [vmem:[%s198 + $0x24] sm:$0xff]
      %v2705 = vld [vmem:[%s198 + $0x2c] sm:$0xff]
      %v2706 = vld [vmem:[%s198 + $0x34] sm:$0xff]
      %v2707 = vld [vmem:[%s198 + $0x3c] sm:$0xff]
      %v2708 = vld [vmem:[%s198 + $0x44] sm:$0xff]
      %v2709 = vld [vmem:[%s198 + $0x4c] sm:$0xff]
      %v2710 = vld [vmem:[%s198 + $0x54] sm:$0xff]
      %v2711 = vld [vmem:[%s198 + $0x5c] sm:$0xff]
      %v2712 = vld [vmem:[%s198 + $0x64] sm:$0xff]
      %v2713 = vld [vmem:[%s198 + $0x6c] sm:$0xff]
      %v2714 = vld [vmem:[%s198 + $0x74] sm:$0xff]
      %v2715 = vld [vmem:[%s198 + $0x7c] sm:$0xff]
      %v2716 = vld [vmem:[%s198 + $0x84] sm:$0xff]
      %v2717 = vld [vmem:[%s198 + $0x8c] sm:$0xff]
      %v2718 = vld [vmem:[%s198 + $0x94] sm:$0xff]
      %v2719 = vld [vmem:[%s198 + $0x9c] sm:$0xff]
      %v2720 = vld [vmem:[%s198 + $0xa4] sm:$0xff]
      %v2721 = vld [vmem:[%s198 + $0xac] sm:$0xff]
      %v2722 = vld [vmem:[%s198 + $0xb4] sm:$0xff]
      %v2723 = vld [vmem:[%s198 + $0xbc] sm:$0xff]
      %v2724 = vld [vmem:[%s198 + $0xc4] sm:$0xff]
      %v2725 = vld [vmem:[%s198 + $0xcc] sm:$0xff]
      %v2726 = vld [vmem:[%s198 + $0xd4] sm:$0xff]
      %v2727 = vld [vmem:[%s198 + $0xdc] sm:$0xff]
      %v2728 = vld [vmem:[%s198 + $0xe4] sm:$0xff]
      %v2729 = vld [vmem:[%s198 + $0xec] sm:$0xff]
      %v2730 = vld [vmem:[%s198 + $0xf4] sm:$0xff]
      %v2731 = vld [vmem:[%s198 + $0xfc] sm:$0xff]
      %v2732 = vld [vmem:[%s198 + $0x104] sm:$0xff]
      %v2733 = vld [vmem:[%s198 + $0x10c] sm:$0xff]
      %v2734 = vld [vmem:[%s198 + $0x114] sm:$0xff]
      %v2735 = vld [vmem:[%s198 + $0x11c] sm:$0xff]
      %v2736 = vld [vmem:[%s198 + $0x124] sm:$0xff]
      %v2737 = vld [vmem:[%s198 + $0x12c] sm:$0xff]
      %v2738 = vld [vmem:[%s198 + $0x134] sm:$0xff]
      %v2739 = vld [vmem:[%s198 + $0x13c] sm:$0xff]
      %s2740 = scalar_lea.vmem %s204, 48
      %v2741 = vld [vmem:[%s2740] sm:$0xff]
      %v2743 = vsel %vm289, %v2704, 0
      %v2746 = vsel %vm289, %v2705, 0
      %v2749 = vsel %vm289, %v2706, 0
      %v2752 = vsel %vm289, %v2707, 0
      %v2755 = vsel %vm289, %v2708, 0
      %v2758 = vsel %vm289, %v2709, 0
      %v2761 = vsel %vm289, %v2710, 0
      %v2764 = vsel %vm289, %v2711, 0
      %v2767 = vsel %vm289, %v2712, 0
      %v2770 = vsel %vm289, %v2713, 0
      %v2773 = vsel %vm289, %v2714, 0
      %v2776 = vsel %vm289, %v2715, 0
      %v2779 = vsel %vm289, %v2716, 0
      %v2782 = vsel %vm289, %v2717, 0
      %v2785 = vsel %vm289, %v2718, 0
      %v2788 = vsel %vm289, %v2719, 0
      %v2791 = vsel %vm289, %v2720, 0
      %v2794 = vsel %vm289, %v2721, 0
      %v2797 = vsel %vm289, %v2722, 0
      %v2800 = vsel %vm289, %v2723, 0
      %v2803 = vsel %vm289, %v2724, 0
      %v2806 = vsel %vm289, %v2725, 0
      %v2809 = vsel %vm289, %v2726, 0
      %v2812 = vsel %vm289, %v2727, 0
      %v2815 = vsel %vm289, %v2728, 0
      %v2818 = vsel %vm289, %v2729, 0
      %v2821 = vsel %vm289, %v2730, 0
      %v2824 = vsel %vm289, %v2731, 0
      %v2827 = vsel %vm289, %v2732, 0
      %v2830 = vsel %vm289, %v2733, 0
      %v2833 = vsel %vm289, %v2734, 0
      %v2836 = vsel %vm289, %v2735, 0
      %v2839 = vsel %vm289, %v2736, 0
      %v2842 = vsel %vm289, %v2737, 0
      %v2845 = vsel %vm289, %v2738, 0
      %v2848 = vsel %vm289, %v2739, 0
      %2850 = vmatprep.subr.mxu0 0.0
      %2851 = vmatpush1.msra.mxu0 %v2741
      %2852 = vmatprep.subr.mxu0 0.0
      %2853 = vmatpush1.msra.mxu0 0.0
      %2854 = vmatprep.subr.mxu0 0.0
      %2855 = vmatpush1.msra.mxu0 0.0
      %2856 = vmatprep.subr.mxu0 0.0
      %2857 = vmatpush1.msra.mxu0 0.0
      %2858 = vmatprep.subr.mxu0 0.0
      %2859 = vmatpush1.msra.mxu0 0.0
      %2860 = vmatprep.subr.mxu0 0.0
      %2861 = vmatpush1.msra.mxu0 0.0
      %2862 = vmatprep.subr.mxu0 0.0
      %2863 = vmatpush1.msra.mxu0 0.0
      %2864 = vmatprep.subr.mxu0 0.0
      %2865 = vmatpush1.msra.mxu0 0.0
      %2866 = vmatprep.subr.mxu0 0.0
      %2867 = vmatpush1.msra.mxu0 0.0
      %2868 = vmatprep.subr.mxu0 0.0
      %2869 = vmatpush1.msra.mxu0 0.0
      %2870 = vmatprep.subr.mxu0 0.0
      %2871 = vmatpush1.msra.mxu0 0.0
      %2872 = vmatprep.subr.mxu0 0.0
      %2873 = vmatpush1.msra.mxu0 0.0
      %2874 = vmatprep.subr.mxu0 0.0
      %2875 = vmatpush1.msra.mxu0 0.0
      %2876 = vmatprep.subr.mxu0 0.0
      %2877 = vmatpush1.msra.mxu0 0.0
      %2878 = vmatprep.subr.mxu0 0.0
      %2879 = vmatpush1.msra.mxu0 0.0
      %2880 = vmatprep.subr.mxu0 0.0
      %2881 = vmatpush1.msra.mxu0 0.0
      %2882 = vmatprep.subr.mxu0 0.0
      %2883 = vmatpush1.msra.mxu0 0.0
      %2884 = vmatprep.subr.mxu0 0.0
      %2885 = vmatpush1.msra.mxu0 0.0
      %2886 = vmatprep.subr.mxu0 0.0
      %2887 = vmatpush1.msra.mxu0 0.0
      %2888 = vmatprep.subr.mxu0 0.0
      %2889 = vmatpush1.msra.mxu0 0.0
      %2890 = vmatprep.subr.mxu0 0.0
      %2891 = vmatpush1.msra.mxu0 0.0
      %2892 = vmatprep.subr.mxu0 0.0
      %2893 = vmatpush1.msra.mxu0 0.0
      %2894 = vmatprep.subr.mxu0 0.0
      %2895 = vmatpush1.msra.mxu0 0.0
      %2896 = vmatprep.subr.mxu0 0.0
      %2897 = vmatpush1.msra.mxu0 0.0
      %2898 = vmatprep.subr.mxu0 0.0
      %2899 = vmatpush1.msra.mxu0 0.0
      %2900 = vmatprep.subr.mxu0 0.0
      %2901 = vmatpush1.msra.mxu0 0.0
      %2902 = vmatprep.subr.mxu0 0.0
      %2903 = vmatpush1.msra.mxu0 0.0
      %2904 = vmatprep.subr.mxu0 0.0
      %2905 = vmatpush1.msra.mxu0 0.0
      %2906 = vmatprep.subr.mxu0 0.0
      %2907 = vmatpush1.msra.mxu0 0.0
      %2908 = vmatprep.subr.mxu0 0.0
      %2909 = vmatpush1.msra.mxu0 0.0
      %2910 = vmatprep.subr.mxu0 0.0
      %2911 = vmatpush1.msra.mxu0 0.0
      %2912 = vmatprep.subr.mxu0 0.0
      %2913 = vmatpush1.msra.mxu0 0.0
      %2914 = vmatprep.mubr.f32.mxu0 0.0
      %2915 = vmatmul.mubr.f32.gmra.mrb[0].mxu0 %v2743
      %v2916 = vpop.f32.mrb[0].mxu0
      %v2917 = vadd.f32 0.0, %v2916
      %v2918 = vpop.f32.mrb[0].mxu0
      %2919 = vmatprep.mubr.f32.mxu0 0.0
      %2920 = vmatmul.mubr.f32.gmra.mrb[0].mxu0 %v2746
      %v2921 = vpop.f32.mrb[0].mxu0
      %v2922 = vadd.f32 0.0, %v2921
      %v2923 = vpop.f32.mrb[0].mxu0
      %2924 = vmatprep.mubr.f32.mxu0 0.0
      %2925 = vmatmul.mubr.f32.gmra.mrb[0].mxu0 %v2749
      %v2926 = vpop.f32.mrb[0].mxu0
      %v2927 = vadd.f32 0.0, %v2926
      %v2928 = vpop.f32.mrb[0].mxu0
      %2929 = vmatprep.mubr.f32.mxu0 0.0
      %2930 = vmatmul.mubr.f32.gmra.mrb[0].mxu0 %v2752
      %v2931 = vpop.f32.mrb[0].mxu0
      %v2932 = vadd.f32 0.0, %v2931
      %v2933 = vpop.f32.mrb[0].mxu0
      %2934 = vmatprep.mubr.f32.mxu0 0.0
      %2935 = vmatmul.mubr.f32.gmra.mrb[0].mxu0 %v2755
      %v2936 = vpop.f32.mrb[0].mxu0
      %v2937 = vadd.f32 0.0, %v2936
      %v2938 = vpop.f32.mrb[0].mxu0
      %2939 = vmatprep.mubr.f32.mxu0 0.0
      %2940 = vmatmul.mubr.f32.gmra.mrb[0].mxu0 %v2758
      %v2941 = vpop.f32.mrb[0].mxu0
      %v2942 = vadd.f32 0.0, %v2941
      %v2943 = vpop.f32.mrb[0].mxu0
      %2944 = vmatprep.mubr.f32.mxu0 0.0
      %2945 = vmatmul.mubr.f32.gmra.mrb[0].mxu0 %v2761
      %v2946 = vpop.f32.mrb[0].mxu0
      %v2947 = vadd.f32 0.0, %v2946
      %v2948 = vpop.f32.mrb[0].mxu0
      %2949 = vmatprep.mubr.f32.mxu0 0.0
      %2950 = vmatmul.mubr.f32.gmra.mrb[0].mxu0 %v2764
      %v2951 = vpop.f32.mrb[0].mxu0
      %v2952 = vadd.f32 0.0, %v2951
      %v2953 = vpop.f32.mrb[0].mxu0
      %2954 = vmatprep.mubr.f32.mxu0 0.0
      %2955 = vmatmul.mubr.f32.gmra.mrb[0].mxu0 %v2767
      %v2956 = vpop.f32.mrb[0].mxu0
      %v2957 = vadd.f32 0.0, %v2956
      %v2958 = vpop.f32.mrb[0].mxu0
      %2959 = vmatprep.mubr.f32.mxu0 0.0
      %2960 = vmatmul.mubr.f32.gmra.mrb[0].mxu0 %v2770
      %v2961 = vpop.f32.mrb[0].mxu0
      %v2962 = vadd.f32 0.0, %v2961
      %v2963 = vpop.f32.mrb[0].mxu0
      %2964 = vmatprep.mubr.f32.mxu0 0.0
      %2965 = vmatmul.mubr.f32.gmra.mrb[0].mxu0 %v2773
      %v2966 = vpop.f32.mrb[0].mxu0
      %v2967 = vadd.f32 0.0, %v2966
      %v2968 = vpop.f32.mrb[0].mxu0
      %2969 = vmatprep.mubr.f32.mxu0 0.0
      %2970 = vmatmul.mubr.f32.gmra.mrb[0].mxu0 %v2776
      %v2971 = vpop.f32.mrb[0].mxu0
      %v2972 = vadd.f32 0.0, %v2971
      %v2973 = vpop.f32.mrb[0].mxu0
      %2974 = vmatprep.mubr.f32.mxu0 0.0
      %2975 = vmatmul.mubr.f32.gmra.mrb[0].mxu0 %v2779
      %v2976 = vpop.f32.mrb[0].mxu0
      %v2977 = vadd.f32 0.0, %v2976
      %v2978 = vpop.f32.mrb[0].mxu0
      %2979 = vmatprep.mubr.f32.mxu0 0.0
      %2980 = vmatmul.mubr.f32.gmra.mrb[0].mxu0 %v2782
      %v2981 = vpop.f32.mrb[0].mxu0
      %v2982 = vadd.f32 0.0, %v2981
      %v2983 = vpop.f32.mrb[0].mxu0
      %2984 = vmatprep.mubr.f32.mxu0 0.0
      %2985 = vmatmul.mubr.f32.gmra.mrb[0].mxu0 %v2785
      %v2986 = vpop.f32.mrb[0].mxu0
      %v2987 = vadd.f32 0.0, %v2986
      %v2988 = vpop.f32.mrb[0].mxu0
      %2989 = vmatprep.mubr.f32.mxu0 0.0
      %2990 = vmatmul.mubr.f32.gmra.mrb[0].mxu0 %v2788
      %v2991 = vpop.f32.mrb[0].mxu0
      %v2992 = vadd.f32 0.0, %v2991
      %v2993 = vpop.f32.mrb[0].mxu0
      %2994 = vmatprep.mubr.f32.mxu0 0.0
      %2995 = vmatmul.mubr.f32.gmra.mrb[0].mxu0 %v2791
      %v2996 = vpop.f32.mrb[0].mxu0
      %v2997 = vadd.f32 0.0, %v2996
      %v2998 = vpop.f32.mrb[0].mxu0
      %2999 = vmatprep.mubr.f32.mxu0 0.0
      %3000 = vmatmul.mubr.f32.gmra.mrb[0].mxu0 %v2794
      %v3001 = vpop.f32.mrb[0].mxu0
      %v3002 = vadd.f32 0.0, %v3001
      %v3003 = vpop.f32.mrb[0].mxu0
      %3004 = vmatprep.mubr.f32.mxu0 0.0
      %3005 = vmatmul.mubr.f32.gmra.mrb[0].mxu0 %v2797
      %v3006 = vpop.f32.mrb[0].mxu0
      %v3007 = vadd.f32 0.0, %v3006
      %v3008 = vpop.f32.mrb[0].mxu0
      %3009 = vmatprep.mubr.f32.mxu0 0.0
      %3010 = vmatmul.mubr.f32.gmra.mrb[0].mxu0 %v2800
      %v3011 = vpop.f32.mrb[0].mxu0
      %v3012 = vadd.f32 0.0, %v3011
      %v3013 = vpop.f32.mrb[0].mxu0
      %3014 = vmatprep.mubr.f32.mxu0 0.0
      %3015 = vmatmul.mubr.f32.gmra.mrb[0].mxu0 %v2803
      %v3016 = vpop.f32.mrb[0].mxu0
      %v3017 = vadd.f32 0.0, %v3016
      %v3018 = vpop.f32.mrb[0].mxu0
      %3019 = vmatprep.mubr.f32.mxu0 0.0
      %3020 = vmatmul.mubr.f32.gmra.mrb[0].mxu0 %v2806
      %v3021 = vpop.f32.mrb[0].mxu0
      %v3022 = vadd.f32 0.0, %v3021
      %v3023 = vpop.f32.mrb[0].mxu0
      %3024 = vmatprep.mubr.f32.mxu0 0.0
      %3025 = vmatmul.mubr.f32.gmra.mrb[0].mxu0 %v2809
      %v3026 = vpop.f32.mrb[0].mxu0
      %v3027 = vadd.f32 0.0, %v3026
      %v3028 = vpop.f32.mrb[0].mxu0
      %3029 = vmatprep.mubr.f32.mxu0 0.0
      %3030 = vmatmul.mubr.f32.gmra.mrb[0].mxu0 %v2812
      %v3031 = vpop.f32.mrb[0].mxu0
      %v3032 = vadd.f32 0.0, %v3031
      %v3033 = vpop.f32.mrb[0].mxu0
      %3034 = vmatprep.mubr.f32.mxu0 0.0
      %3035 = vmatmul.mubr.f32.gmra.mrb[0].mxu0 %v2815
      %v3036 = vpop.f32.mrb[0].mxu0
      %v3037 = vadd.f32 0.0, %v3036
      %v3038 = vpop.f32.mrb[0].mxu0
      %3039 = vmatprep.mubr.f32.mxu0 0.0
      %3040 = vmatmul.mubr.f32.gmra.mrb[0].mxu0 %v2818
      %v3041 = vpop.f32.mrb[0].mxu0
      %v3042 = vadd.f32 0.0, %v3041
      %v3043 = vpop.f32.mrb[0].mxu0
      %3044 = vmatprep.mubr.f32.mxu0 0.0
      %3045 = vmatmul.mubr.f32.gmra.mrb[0].mxu0 %v2821
      %v3046 = vpop.f32.mrb[0].mxu0
      %v3047 = vadd.f32 0.0, %v3046
      %v3048 = vpop.f32.mrb[0].mxu0
      %3049 = vmatprep.mubr.f32.mxu0 0.0
      %3050 = vmatmul.mubr.f32.gmra.mrb[0].mxu0 %v2824
      %v3051 = vpop.f32.mrb[0].mxu0
      %v3052 = vadd.f32 0.0, %v3051
      %v3053 = vpop.f32.mrb[0].mxu0
      %3054 = vmatprep.mubr.f32.mxu0 0.0
      %3055 = vmatmul.mubr.f32.gmra.mrb[0].mxu0 %v2827
      %v3056 = vpop.f32.mrb[0].mxu0
      %v3057 = vadd.f32 0.0, %v3056
      %v3058 = vpop.f32.mrb[0].mxu0
      %3059 = vmatprep.mubr.f32.mxu0 0.0
      %3060 = vmatmul.mubr.f32.gmra.mrb[0].mxu0 %v2830
      %v3061 = vpop.f32.mrb[0].mxu0
      %v3062 = vadd.f32 0.0, %v3061
      %v3063 = vpop.f32.mrb[0].mxu0
      %3064 = vmatprep.mubr.f32.mxu0 0.0
      %3065 = vmatmul.mubr.f32.gmra.mrb[0].mxu0 %v2833
      %v3066 = vpop.f32.mrb[0].mxu0
      %v3067 = vadd.f32 0.0, %v3066
      %v3068 = vpop.f32.mrb[0].mxu0
      %3069 = vmatprep.mubr.f32.mxu0 0.0
      %3070 = vmatmul.mubr.f32.gmra.mrb[0].mxu0 %v2836
      %v3071 = vpop.f32.mrb[0].mxu0
      %v3072 = vadd.f32 0.0, %v3071
      %v3073 = vpop.f32.mrb[0].mxu0
      %3074 = vmatprep.mubr.f32.mxu0 0.0
      %3075 = vmatmul.mubr.f32.gmra.mrb[0].mxu0 %v2839
      %v3076 = vpop.f32.mrb[0].mxu0
      %v3077 = vadd.f32 0.0, %v3076
      %v3078 = vpop.f32.mrb[0].mxu0
      %3079 = vmatprep.mubr.f32.mxu0 0.0
      %3080 = vmatmul.mubr.f32.gmra.mrb[0].mxu0 %v2842
      %v3081 = vpop.f32.mrb[0].mxu0
      %v3082 = vadd.f32 0.0, %v3081
      %v3083 = vpop.f32.mrb[0].mxu0
      %3084 = vmatprep.mubr.f32.mxu0 0.0
      %3085 = vmatmul.mubr.f32.gmra.mrb[0].mxu0 %v2845
      %v3086 = vpop.f32.mrb[0].mxu0
      %v3087 = vadd.f32 0.0, %v3086
      %v3088 = vpop.f32.mrb[0].mxu0
      %3089 = vmatprep.mubr.f32.mxu0 0.0
      %3090 = vmatmul.mubr.f32.gmra.mrb[0].mxu0 %v2848
      %v3091 = vpop.f32.mrb[0].mxu0
      %v3092 = vadd.f32 0.0, %v3091
      %v3093 = vpop.f32.mrb[0].mxu0
      %3094 = vdwg.mxu0
      %v3095 = vadd.f32 %v2668, %v2917
      %v3096 = vadd.f32 %v2669, %v2922
      %v3097 = vadd.f32 %v2670, %v2927
      %v3098 = vadd.f32 %v2671, %v2932
      %v3099 = vadd.f32 %v2672, %v2937
      %v3100 = vadd.f32 %v2673, %v2942
      %v3101 = vadd.f32 %v2674, %v2947
      %v3102 = vadd.f32 %v2675, %v2952
      %v3103 = vadd.f32 %v2676, %v2957
      %v3104 = vadd.f32 %v2677, %v2962
      %v3105 = vadd.f32 %v2678, %v2967
      %v3106 = vadd.f32 %v2679, %v2972
      %v3107 = vadd.f32 %v2680, %v2977
      %v3108 = vadd.f32 %v2681, %v2982
      %v3109 = vadd.f32 %v2682, %v2987
      %v3110 = vadd.f32 %v2683, %v2992
      %v3111 = vadd.f32 %v2684, %v2997
      %v3112 = vadd.f32 %v2685, %v3002
      %v3113 = vadd.f32 %v2686, %v3007
      %v3114 = vadd.f32 %v2687, %v3012
      %v3115 = vadd.f32 %v2688, %v3017
      %v3116 = vadd.f32 %v2689, %v3022
      %v3117 = vadd.f32 %v2690, %v3027
      %v3118 = vadd.f32 %v2691, %v3032
      %v3119 = vadd.f32 %v2692, %v3037
      %v3120 = vadd.f32 %v2693, %v3042
      %v3121 = vadd.f32 %v2694, %v3047
      %v3122 = vadd.f32 %v2695, %v3052
      %v3123 = vadd.f32 %v2696, %v3057
      %v3124 = vadd.f32 %v2697, %v3062
      %v3125 = vadd.f32 %v2698, %v3067
      %v3126 = vadd.f32 %v2699, %v3072
      %v3127 = vadd.f32 %v2700, %v3077
      %v3128 = vadd.f32 %v2701, %v3082
      %v3129 = vadd.f32 %v2702, %v3087
      %v3130 = vadd.f32 %v2703, %v3092
      %v3131 = vld [vmem:[%s198 + $0x25] sm:$0xff]
      %v3132 = vld [vmem:[%s198 + $0x2d] sm:$0xff]
      %v3133 = vld [vmem:[%s198 + $0x35] sm:$0xff]
      %v3134 = vld [vmem:[%s198 + $0x3d] sm:$0xff]
      %v3135 = vld [vmem:[%s198 + $0x45] sm:$0xff]
      %v3136 = vld [vmem:[%s198 + $0x4d] sm:$0xff]
      %v3137 = vld [vmem:[%s198 + $0x55] sm:$0xff]
      %v3138 = vld [vmem:[%s198 + $0x5d] sm:$0xff]
      %v3139 = vld [vmem:[%s198 + $0x65] sm:$0xff]
      %v3140 = vld [vmem:[%s198 + $0x6d] sm:$0xff]
      %v3141 = vld [vmem:[%s198 + $0x75] sm:$0xff]
      %v3142 = vld [vmem:[%s198 + $0x7d] sm:$0xff]
      %v3143 = vld [vmem:[%s198 + $0x85] sm:$0xff]
      %v3144 = vld [vmem:[%s198 + $0x8d] sm:$0xff]
      %v3145 = vld [vmem:[%s198 + $0x95] sm:$0xff]
      %v3146 = vld [vmem:[%s198 + $0x9d] sm:$0xff]
      %v3147 = vld [vmem:[%s198 + $0xa5] sm:$0xff]
      %v3148 = vld [vmem:[%s198 + $0xad] sm:$0xff]
      %v3149 = vld [vmem:[%s198 + $0xb5] sm:$0xff]
      %v3150 = vld [vmem:[%s198 + $0xbd] sm:$0xff]
      %v3151 = vld [vmem:[%s198 + $0xc5] sm:$0xff]
      %v3152 = vld [vmem:[%s198 + $0xcd] sm:$0xff]
      %v3153 = vld [vmem:[%s198 + $0xd5] sm:$0xff]
      %v3154 = vld [vmem:[%s198 + $0xdd] sm:$0xff]
      %v3155 = vld [vmem:[%s198 + $0xe5] sm:$0xff]
      %v3156 = vld [vmem:[%s198 + $0xed] sm:$0xff]
      %v3157 = vld [vmem:[%s198 + $0xf5] sm:$0xff]
      %v3158 = vld [vmem:[%s198 + $0xfd] sm:$0xff]
      %v3159 = vld [vmem:[%s198 + $0x105] sm:$0xff]
      %v3160 = vld [vmem:[%s198 + $0x10d] sm:$0xff]
      %v3161 = vld [vmem:[%s198 + $0x115] sm:$0xff]
      %v3162 = vld [vmem:[%s198 + $0x11d] sm:$0xff]
      %v3163 = vld [vmem:[%s198 + $0x125] sm:$0xff]
      %v3164 = vld [vmem:[%s198 + $0x12d] sm:$0xff]
      %v3165 = vld [vmem:[%s198 + $0x135] sm:$0xff]
      %v3166 = vld [vmem:[%s198 + $0x13d] sm:$0xff]
      %s3167 = scalar_lea.vmem %s204, 56
      %v3168 = vld [vmem:[%s3167] sm:$0xff]
      %v3170 = vsel %vm289, %v3131, 0
      %v3173 = vsel %vm289, %v3132, 0
      %v3176 = vsel %vm289, %v3133, 0
      %v3179 = vsel %vm289, %v3134, 0
      %v3182 = vsel %vm289, %v3135, 0
      %v3185 = vsel %vm289, %v3136, 0
      %v3188 = vsel %vm289, %v3137, 0
      %v3191 = vsel %vm289, %v3138, 0
      %v3194 = vsel %vm289, %v3139, 0
      %v3197 = vsel %vm289, %v3140, 0
      %v3200 = vsel %vm289, %v3141, 0
      %v3203 = vsel %vm289, %v3142, 0
      %v3206 = vsel %vm289, %v3143, 0
      %v3209 = vsel %vm289, %v3144, 0
      %v3212 = vsel %vm289, %v3145, 0
      %v3215 = vsel %vm289, %v3146, 0
      %v3218 = vsel %vm289, %v3147, 0
      %v3221 = vsel %vm289, %v3148, 0
      %v3224 = vsel %vm289, %v3149, 0
      %v3227 = vsel %vm289, %v3150, 0
      %v3230 = vsel %vm289, %v3151, 0
      %v3233 = vsel %vm289, %v3152, 0
      %v3236 = vsel %vm289, %v3153, 0
      %v3239 = vsel %vm289, %v3154, 0
      %v3242 = vsel %vm289, %v3155, 0
      %v3245 = vsel %vm289, %v3156, 0
      %v3248 = vsel %vm289, %v3157, 0
      %v3251 = vsel %vm289, %v3158, 0
      %v3254 = vsel %vm289, %v3159, 0
      %v3257 = vsel %vm289, %v3160, 0
      %v3260 = vsel %vm289, %v3161, 0
      %v3263 = vsel %vm289, %v3162, 0
      %v3266 = vsel %vm289, %v3163, 0
      %v3269 = vsel %vm289, %v3164, 0
      %v3272 = vsel %vm289, %v3165, 0
      %v3275 = vsel %vm289, %v3166, 0
      %3277 = vmatprep.subr.mxu0 0.0
      %3278 = vmatpush1.msra.mxu0 %v3168
      %3279 = vmatprep.subr.mxu0 0.0
      %3280 = vmatpush1.msra.mxu0 0.0
      %3281 = vmatprep.subr.mxu0 0.0
      %3282 = vmatpush1.msra.mxu0 0.0
      %3283 = vmatprep.subr.mxu0 0.0
      %3284 = vmatpush1.msra.mxu0 0.0
      %3285 = vmatprep.subr.mxu0 0.0
      %3286 = vmatpush1.msra.mxu0 0.0
      %3287 = vmatprep.subr.mxu0 0.0
      %3288 = vmatpush1.msra.mxu0 0.0
      %3289 = vmatprep.subr.mxu0 0.0
      %3290 = vmatpush1.msra.mxu0 0.0
      %3291 = vmatprep.subr.mxu0 0.0
      %3292 = vmatpush1.msra.mxu0 0.0
      %3293 = vmatprep.subr.mxu0 0.0
      %3294 = vmatpush1.msra.mxu0 0.0
      %3295 = vmatprep.subr.mxu0 0.0
      %3296 = vmatpush1.msra.mxu0 0.0
      %3297 = vmatprep.subr.mxu0 0.0
      %3298 = vmatpush1.msra.mxu0 0.0
      %3299 = vmatprep.subr.mxu0 0.0
      %3300 = vmatpush1.msra.mxu0 0.0
      %3301 = vmatprep.subr.mxu0 0.0
      %3302 = vmatpush1.msra.mxu0 0.0
      %3303 = vmatprep.subr.mxu0 0.0
      %3304 = vmatpush1.msra.mxu0 0.0
      %3305 = vmatprep.subr.mxu0 0.0
      %3306 = vmatpush1.msra.mxu0 0.0
      %3307 = vmatprep.subr.mxu0 0.0
      %3308 = vmatpush1.msra.mxu0 0.0
      %3309 = vmatprep.subr.mxu0 0.0
      %3310 = vmatpush1.msra.mxu0 0.0
      %3311 = vmatprep.subr.mxu0 0.0
      %3312 = vmatpush1.msra.mxu0 0.0
      %3313 = vmatprep.subr.mxu0 0.0
      %3314 = vmatpush1.msra.mxu0 0.0
      %3315 = vmatprep.subr.mxu0 0.0
      %3316 = vmatpush1.msra.mxu0 0.0
      %3317 = vmatprep.subr.mxu0 0.0
      %3318 = vmatpush1.msra.mxu0 0.0
      %3319 = vmatprep.subr.mxu0 0.0
      %3320 = vmatpush1.msra.mxu0 0.0
      %3321 = vmatprep.subr.mxu0 0.0
      %3322 = vmatpush1.msra.mxu0 0.0
      %3323 = vmatprep.subr.mxu0 0.0
      %3324 = vmatpush1.msra.mxu0 0.0
      %3325 = vmatprep.subr.mxu0 0.0
      %3326 = vmatpush1.msra.mxu0 0.0
      %3327 = vmatprep.subr.mxu0 0.0
      %3328 = vmatpush1.msra.mxu0 0.0
      %3329 = vmatprep.subr.mxu0 0.0
      %3330 = vmatpush1.msra.mxu0 0.0
      %3331 = vmatprep.subr.mxu0 0.0
      %3332 = vmatpush1.msra.mxu0 0.0
      %3333 = vmatprep.subr.mxu0 0.0
      %3334 = vmatpush1.msra.mxu0 0.0
      %3335 = vmatprep.subr.mxu0 0.0
      %3336 = vmatpush1.msra.mxu0 0.0
      %3337 = vmatprep.subr.mxu0 0.0
      %3338 = vmatpush1.msra.mxu0 0.0
      %3339 = vmatprep.subr.mxu0 0.0
      %3340 = vmatpush1.msra.mxu0 0.0
      %3341 = vmatprep.mubr.f32.mxu0 0.0
      %3342 = vmatmul.mubr.f32.gmra.mrb[0].mxu0 %v3170
      %v3343 = vpop.f32.mrb[0].mxu0
      %v3344 = vadd.f32 0.0, %v3343
      %v3345 = vpop.f32.mrb[0].mxu0
      %3346 = vmatprep.mubr.f32.mxu0 0.0
      %3347 = vmatmul.mubr.f32.gmra.mrb[0].mxu0 %v3173
      %v3348 = vpop.f32.mrb[0].mxu0
      %v3349 = vadd.f32 0.0, %v3348
      %v3350 = vpop.f32.mrb[0].mxu0
      %3351 = vmatprep.mubr.f32.mxu0 0.0
      %3352 = vmatmul.mubr.f32.gmra.mrb[0].mxu0 %v3176
      %v3353 = vpop.f32.mrb[0].mxu0
      %v3354 = vadd.f32 0.0, %v3353
      %v3355 = vpop.f32.mrb[0].mxu0
      %3356 = vmatprep.mubr.f32.mxu0 0.0
      %3357 = vmatmul.mubr.f32.gmra.mrb[0].mxu0 %v3179
      %v3358 = vpop.f32.mrb[0].mxu0
      %v3359 = vadd.f32 0.0, %v3358
      %v3360 = vpop.f32.mrb[0].mxu0
      %3361 = vmatprep.mubr.f32.mxu0 0.0
      %3362 = vmatmul.mubr.f32.gmra.mrb[0].mxu0 %v3182
      %v3363 = vpop.f32.mrb[0].mxu0
      %v3364 = vadd.f32 0.0, %v3363
      %v3365 = vpop.f32.mrb[0].mxu0
      %3366 = vmatprep.mubr.f32.mxu0 0.0
      %3367 = vmatmul.mubr.f32.gmra.mrb[0].mxu0 %v3185
      %v3368 = vpop.f32.mrb[0].mxu0
      %v3369 = vadd.f32 0.0, %v3368
      %v3370 = vpop.f32.mrb[0].mxu0
      %3371 = vmatprep.mubr.f32.mxu0 0.0
      %3372 = vmatmul.mubr.f32.gmra.mrb[0].mxu0 %v3188
      %v3373 = vpop.f32.mrb[0].mxu0
      %v3374 = vadd.f32 0.0, %v3373
      %v3375 = vpop.f32.mrb[0].mxu0
      %3376 = vmatprep.mubr.f32.mxu0 0.0
      %3377 = vmatmul.mubr.f32.gmra.mrb[0].mxu0 %v3191
      %v3378 = vpop.f32.mrb[0].mxu0
      %v3379 = vadd.f32 0.0, %v3378
      %v3380 = vpop.f32.mrb[0].mxu0
      %3381 = vmatprep.mubr.f32.mxu0 0.0
      %3382 = vmatmul.mubr.f32.gmra.mrb[0].mxu0 %v3194
      %v3383 = vpop.f32.mrb[0].mxu0
      %v3384 = vadd.f32 0.0, %v3383
      %v3385 = vpop.f32.mrb[0].mxu0
      %3386 = vmatprep.mubr.f32.mxu0 0.0
      %3387 = vmatmul.mubr.f32.gmra.mrb[0].mxu0 %v3197
      %v3388 = vpop.f32.mrb[0].mxu0
      %v3389 = vadd.f32 0.0, %v3388
      %v3390 = vpop.f32.mrb[0].mxu0
      %3391 = vmatprep.mubr.f32.mxu0 0.0
      %3392 = vmatmul.mubr.f32.gmra.mrb[0].mxu0 %v3200
      %v3393 = vpop.f32.mrb[0].mxu0
      %v3394 = vadd.f32 0.0, %v3393
      %v3395 = vpop.f32.mrb[0].mxu0
      %3396 = vmatprep.mubr.f32.mxu0 0.0
      %3397 = vmatmul.mubr.f32.gmra.mrb[0].mxu0 %v3203
      %v3398 = vpop.f32.mrb[0].mxu0
      %v3399 = vadd.f32 0.0, %v3398
      %v3400 = vpop.f32.mrb[0].mxu0
      %3401 = vmatprep.mubr.f32.mxu0 0.0
      %3402 = vmatmul.mubr.f32.gmra.mrb[0].mxu0 %v3206
      %v3403 = vpop.f32.mrb[0].mxu0
      %v3404 = vadd.f32 0.0, %v3403
      %v3405 = vpop.f32.mrb[0].mxu0
      %3406 = vmatprep.mubr.f32.mxu0 0.0
      %3407 = vmatmul.mubr.f32.gmra.mrb[0].mxu0 %v3209
      %v3408 = vpop.f32.mrb[0].mxu0
      %v3409 = vadd.f32 0.0, %v3408
      %v3410 = vpop.f32.mrb[0].mxu0
      %3411 = vmatprep.mubr.f32.mxu0 0.0
      %3412 = vmatmul.mubr.f32.gmra.mrb[0].mxu0 %v3212
      %v3413 = vpop.f32.mrb[0].mxu0
      %v3414 = vadd.f32 0.0, %v3413
      %v3415 = vpop.f32.mrb[0].mxu0
      %3416 = vmatprep.mubr.f32.mxu0 0.0
      %3417 = vmatmul.mubr.f32.gmra.mrb[0].mxu0 %v3215
      %v3418 = vpop.f32.mrb[0].mxu0
      %v3419 = vadd.f32 0.0, %v3418
      %v3420 = vpop.f32.mrb[0].mxu0
      %3421 = vmatprep.mubr.f32.mxu0 0.0
      %3422 = vmatmul.mubr.f32.gmra.mrb[0].mxu0 %v3218
      %v3423 = vpop.f32.mrb[0].mxu0
      %v3424 = vadd.f32 0.0, %v3423
      %v3425 = vpop.f32.mrb[0].mxu0
      %3426 = vmatprep.mubr.f32.mxu0 0.0
      %3427 = vmatmul.mubr.f32.gmra.mrb[0].mxu0 %v3221
      %v3428 = vpop.f32.mrb[0].mxu0
      %v3429 = vadd.f32 0.0, %v3428
      %v3430 = vpop.f32.mrb[0].mxu0
      %3431 = vmatprep.mubr.f32.mxu0 0.0
      %3432 = vmatmul.mubr.f32.gmra.mrb[0].mxu0 %v3224
      %v3433 = vpop.f32.mrb[0].mxu0
      %v3434 = vadd.f32 0.0, %v3433
      %v3435 = vpop.f32.mrb[0].mxu0
      %3436 = vmatprep.mubr.f32.mxu0 0.0
      %3437 = vmatmul.mubr.f32.gmra.mrb[0].mxu0 %v3227
      %v3438 = vpop.f32.mrb[0].mxu0
      %v3439 = vadd.f32 0.0, %v3438
      %v3440 = vpop.f32.mrb[0].mxu0
      %3441 = vmatprep.mubr.f32.mxu0 0.0
      %3442 = vmatmul.mubr.f32.gmra.mrb[0].mxu0 %v3230
      %v3443 = vpop.f32.mrb[0].mxu0
      %v3444 = vadd.f32 0.0, %v3443
      %v3445 = vpop.f32.mrb[0].mxu0
      %3446 = vmatprep.mubr.f32.mxu0 0.0
      %3447 = vmatmul.mubr.f32.gmra.mrb[0].mxu0 %v3233
      %v3448 = vpop.f32.mrb[0].mxu0
      %v3449 = vadd.f32 0.0, %v3448
      %v3450 = vpop.f32.mrb[0].mxu0
      %3451 = vmatprep.mubr.f32.mxu0 0.0
      %3452 = vmatmul.mubr.f32.gmra.mrb[0].mxu0 %v3236
      %v3453 = vpop.f32.mrb[0].mxu0
      %v3454 = vadd.f32 0.0, %v3453
      %v3455 = vpop.f32.mrb[0].mxu0
      %3456 = vmatprep.mubr.f32.mxu0 0.0
      %3457 = vmatmul.mubr.f32.gmra.mrb[0].mxu0 %v3239
      %v3458 = vpop.f32.mrb[0].mxu0
      %v3459 = vadd.f32 0.0, %v3458
      %v3460 = vpop.f32.mrb[0].mxu0
      %3461 = vmatprep.mubr.f32.mxu0 0.0
      %3462 = vmatmul.mubr.f32.gmra.mrb[0].mxu0 %v3242
      %v3463 = vpop.f32.mrb[0].mxu0
      %v3464 = vadd.f32 0.0, %v3463
      %v3465 = vpop.f32.mrb[0].mxu0
      %3466 = vmatprep.mubr.f32.mxu0 0.0
      %3467 = vmatmul.mubr.f32.gmra.mrb[0].mxu0 %v3245
      %v3468 = vpop.f32.mrb[0].mxu0
      %v3469 = vadd.f32 0.0, %v3468
      %v3470 = vpop.f32.mrb[0].mxu0
      %3471 = vmatprep.mubr.f32.mxu0 0.0
      %3472 = vmatmul.mubr.f32.gmra.mrb[0].mxu0 %v3248
      %v3473 = vpop.f32.mrb[0].mxu0
      %v3474 = vadd.f32 0.0, %v3473
      %v3475 = vpop.f32.mrb[0].mxu0
      %3476 = vmatprep.mubr.f32.mxu0 0.0
      %3477 = vmatmul.mubr.f32.gmra.mrb[0].mxu0 %v3251
      %v3478 = vpop.f32.mrb[0].mxu0
      %v3479 = vadd.f32 0.0, %v3478
      %v3480 = vpop.f32.mrb[0].mxu0
      %3481 = vmatprep.mubr.f32.mxu0 0.0
      %3482 = vmatmul.mubr.f32.gmra.mrb[0].mxu0 %v3254
      %v3483 = vpop.f32.mrb[0].mxu0
      %v3484 = vadd.f32 0.0, %v3483
      %v3485 = vpop.f32.mrb[0].mxu0
      %3486 = vmatprep.mubr.f32.mxu0 0.0
      %3487 = vmatmul.mubr.f32.gmra.mrb[0].mxu0 %v3257
      %v3488 = vpop.f32.mrb[0].mxu0
      %v3489 = vadd.f32 0.0, %v3488
      %v3490 = vpop.f32.mrb[0].mxu0
      %3491 = vmatprep.mubr.f32.mxu0 0.0
      %3492 = vmatmul.mubr.f32.gmra.mrb[0].mxu0 %v3260
      %v3493 = vpop.f32.mrb[0].mxu0
      %v3494 = vadd.f32 0.0, %v3493
      %v3495 = vpop.f32.mrb[0].mxu0
      %3496 = vmatprep.mubr.f32.mxu0 0.0
      %3497 = vmatmul.mubr.f32.gmra.mrb[0].mxu0 %v3263
      %v3498 = vpop.f32.mrb[0].mxu0
      %v3499 = vadd.f32 0.0, %v3498
      %v3500 = vpop.f32.mrb[0].mxu0
      %3501 = vmatprep.mubr.f32.mxu0 0.0
      %3502 = vmatmul.mubr.f32.gmra.mrb[0].mxu0 %v3266
      %v3503 = vpop.f32.mrb[0].mxu0
      %v3504 = vadd.f32 0.0, %v3503
      %v3505 = vpop.f32.mrb[0].mxu0
      %3506 = vmatprep.mubr.f32.mxu0 0.0
      %3507 = vmatmul.mubr.f32.gmra.mrb[0].mxu0 %v3269
      %v3508 = vpop.f32.mrb[0].mxu0
      %v3509 = vadd.f32 0.0, %v3508
      %v3510 = vpop.f32.mrb[0].mxu0
      %3511 = vmatprep.mubr.f32.mxu0 0.0
      %3512 = vmatmul.mubr.f32.gmra.mrb[0].mxu0 %v3272
      %v3513 = vpop.f32.mrb[0].mxu0
      %v3514 = vadd.f32 0.0, %v3513
      %v3515 = vpop.f32.mrb[0].mxu0
      %3516 = vmatprep.mubr.f32.mxu0 0.0
      %3517 = vmatmul.mubr.f32.gmra.mrb[0].mxu0 %v3275
      %v3518 = vpop.f32.mrb[0].mxu0
      %v3519 = vadd.f32 0.0, %v3518
      %v3520 = vpop.f32.mrb[0].mxu0
      %3521 = vdwg.mxu0
      %v3522 = vadd.f32 %v3095, %v3344
      %v3523 = vadd.f32 %v3096, %v3349
      %v3524 = vadd.f32 %v3097, %v3354
      %v3525 = vadd.f32 %v3098, %v3359
      %v3526 = vadd.f32 %v3099, %v3364
      %v3527 = vadd.f32 %v3100, %v3369
      %v3528 = vadd.f32 %v3101, %v3374
      %v3529 = vadd.f32 %v3102, %v3379
      %v3530 = vadd.f32 %v3103, %v3384
      %v3531 = vadd.f32 %v3104, %v3389
      %v3532 = vadd.f32 %v3105, %v3394
      %v3533 = vadd.f32 %v3106, %v3399
      %v3534 = vadd.f32 %v3107, %v3404
      %v3535 = vadd.f32 %v3108, %v3409
      %v3536 = vadd.f32 %v3109, %v3414
      %v3537 = vadd.f32 %v3110, %v3419
      %v3538 = vadd.f32 %v3111, %v3424
      %v3539 = vadd.f32 %v3112, %v3429
      %v3540 = vadd.f32 %v3113, %v3434
      %v3541 = vadd.f32 %v3114, %v3439
      %v3542 = vadd.f32 %v3115, %v3444
      %v3543 = vadd.f32 %v3116, %v3449
      %v3544 = vadd.f32 %v3117, %v3454
      %v3545 = vadd.f32 %v3118, %v3459
      %v3546 = vadd.f32 %v3119, %v3464
      %v3547 = vadd.f32 %v3120, %v3469
      %v3548 = vadd.f32 %v3121, %v3474
      %v3549 = vadd.f32 %v3122, %v3479
      %v3550 = vadd.f32 %v3123, %v3484
      %v3551 = vadd.f32 %v3124, %v3489
      %v3552 = vadd.f32 %v3125, %v3494
      %v3553 = vadd.f32 %v3126, %v3499
      %v3554 = vadd.f32 %v3127, %v3504
      %v3555 = vadd.f32 %v3128, %v3509
      %v3556 = vadd.f32 %v3129, %v3514
      %v3557 = vadd.f32 %v3130, %v3519
      %v3558 = vld [vmem:[%s198 + $0x26] sm:$0xff]
      %v3559 = vld [vmem:[%s198 + $0x2e] sm:$0xff]
      %v3560 = vld [vmem:[%s198 + $0x36] sm:$0xff]
      %v3561 = vld [vmem:[%s198 + $0x3e] sm:$0xff]
      %v3562 = vld [vmem:[%s198 + $0x46] sm:$0xff]
      %v3563 = vld [vmem:[%s198 + $0x4e] sm:$0xff]
      %v3564 = vld [vmem:[%s198 + $0x56] sm:$0xff]
      %v3565 = vld [vmem:[%s198 + $0x5e] sm:$0xff]
      %v3566 = vld [vmem:[%s198 + $0x66] sm:$0xff]
      %v3567 = vld [vmem:[%s198 + $0x6e] sm:$0xff]
      %v3568 = vld [vmem:[%s198 + $0x76] sm:$0xff]
      %v3569 = vld [vmem:[%s198 + $0x7e] sm:$0xff]
      %v3570 = vld [vmem:[%s198 + $0x86] sm:$0xff]
      %v3571 = vld [vmem:[%s198 + $0x8e] sm:$0xff]
      %v3572 = vld [vmem:[%s198 + $0x96] sm:$0xff]
      %v3573 = vld [vmem:[%s198 + $0x9e] sm:$0xff]
      %v3574 = vld [vmem:[%s198 + $0xa6] sm:$0xff]
      %v3575 = vld [vmem:[%s198 + $0xae] sm:$0xff]
      %v3576 = vld [vmem:[%s198 + $0xb6] sm:$0xff]
      %v3577 = vld [vmem:[%s198 + $0xbe] sm:$0xff]
      %v3578 = vld [vmem:[%s198 + $0xc6] sm:$0xff]
      %v3579 = vld [vmem:[%s198 + $0xce] sm:$0xff]
      %v3580 = vld [vmem:[%s198 + $0xd6] sm:$0xff]
      %v3581 = vld [vmem:[%s198 + $0xde] sm:$0xff]
      %v3582 = vld [vmem:[%s198 + $0xe6] sm:$0xff]
      %v3583 = vld [vmem:[%s198 + $0xee] sm:$0xff]
      %v3584 = vld [vmem:[%s198 + $0xf6] sm:$0xff]
      %v3585 = vld [vmem:[%s198 + $0xfe] sm:$0xff]
      %v3586 = vld [vmem:[%s198 + $0x106] sm:$0xff]
      %v3587 = vld [vmem:[%s198 + $0x10e] sm:$0xff]
      %v3588 = vld [vmem:[%s198 + $0x116] sm:$0xff]
      %v3589 = vld [vmem:[%s198 + $0x11e] sm:$0xff]
      %v3590 = vld [vmem:[%s198 + $0x126] sm:$0xff]
      %v3591 = vld [vmem:[%s198 + $0x12e] sm:$0xff]
      %v3592 = vld [vmem:[%s198 + $0x136] sm:$0xff]
      %v3593 = vld [vmem:[%s198 + $0x13e] sm:$0xff]
      %s3594 = scalar_lea.vmem %s204, 64
      %v3595 = vld [vmem:[%s3594] sm:$0xff]
      %v3597 = vsel %vm289, %v3558, 0
      %v3600 = vsel %vm289, %v3559, 0
      %v3603 = vsel %vm289, %v3560, 0
      %v3606 = vsel %vm289, %v3561, 0
      %v3609 = vsel %vm289, %v3562, 0
      %v3612 = vsel %vm289, %v3563, 0
      %v3615 = vsel %vm289, %v3564, 0
      %v3618 = vsel %vm289, %v3565, 0
      %v3621 = vsel %vm289, %v3566, 0
      %v3624 = vsel %vm289, %v3567, 0
      %v3627 = vsel %vm289, %v3568, 0
      %v3630 = vsel %vm289, %v3569, 0
      %v3633 = vsel %vm289, %v3570, 0
      %v3636 = vsel %vm289, %v3571, 0
      %v3639 = vsel %vm289, %v3572, 0
      %v3642 = vsel %vm289, %v3573, 0
      %v3645 = vsel %vm289, %v3574, 0
      %v3648 = vsel %vm289, %v3575, 0
      %v3651 = vsel %vm289, %v3576, 0
      %v3654 = vsel %vm289, %v3577, 0
      %v3657 = vsel %vm289, %v3578, 0
      %v3660 = vsel %vm289, %v3579, 0
      %v3663 = vsel %vm289, %v3580, 0
      %v3666 = vsel %vm289, %v3581, 0
      %v3669 = vsel %vm289, %v3582, 0
      %v3672 = vsel %vm289, %v3583, 0
      %v3675 = vsel %vm289, %v3584, 0
      %v3678 = vsel %vm289, %v3585, 0
      %v3681 = vsel %vm289, %v3586, 0
      %v3684 = vsel %vm289, %v3587, 0
      %v3687 = vsel %vm289, %v3588, 0
      %v3690 = vsel %vm289, %v3589, 0
      %v3693 = vsel %vm289, %v3590, 0
      %v3696 = vsel %vm289, %v3591, 0
      %v3699 = vsel %vm289, %v3592, 0
      %v3702 = vsel %vm289, %v3593, 0
      %3704 = vmatprep.subr.mxu0 0.0
      %3705 = vmatpush1.msra.mxu0 %v3595
      %3706 = vmatprep.subr.mxu0 0.0
      %3707 = vmatpush1.msra.mxu0 0.0
      %3708 = vmatprep.subr.mxu0 0.0
      %3709 = vmatpush1.msra.mxu0 0.0
      %3710 = vmatprep.subr.mxu0 0.0
      %3711 = vmatpush1.msra.mxu0 0.0
      %3712 = vmatprep.subr.mxu0 0.0
      %3713 = vmatpush1.msra.mxu0 0.0
      %3714 = vmatprep.subr.mxu0 0.0
      %3715 = vmatpush1.msra.mxu0 0.0
      %3716 = vmatprep.subr.mxu0 0.0
      %3717 = vmatpush1.msra.mxu0 0.0
      %3718 = vmatprep.subr.mxu0 0.0
      %3719 = vmatpush1.msra.mxu0 0.0
      %3720 = vmatprep.subr.mxu0 0.0
      %3721 = vmatpush1.msra.mxu0 0.0
      %3722 = vmatprep.subr.mxu0 0.0
      %3723 = vmatpush1.msra.mxu0 0.0
      %3724 = vmatprep.subr.mxu0 0.0
      %3725 = vmatpush1.msra.mxu0 0.0
      %3726 = vmatprep.subr.mxu0 0.0
      %3727 = vmatpush1.msra.mxu0 0.0
      %3728 = vmatprep.subr.mxu0 0.0
      %3729 = vmatpush1.msra.mxu0 0.0
      %3730 = vmatprep.subr.mxu0 0.0
      %3731 = vmatpush1.msra.mxu0 0.0
      %3732 = vmatprep.subr.mxu0 0.0
      %3733 = vmatpush1.msra.mxu0 0.0
      %3734 = vmatprep.subr.mxu0 0.0
      %3735 = vmatpush1.msra.mxu0 0.0
      %3736 = vmatprep.subr.mxu0 0.0
      %3737 = vmatpush1.msra.mxu0 0.0
      %3738 = vmatprep.subr.mxu0 0.0
      %3739 = vmatpush1.msra.mxu0 0.0
      %3740 = vmatprep.subr.mxu0 0.0
      %3741 = vmatpush1.msra.mxu0 0.0
      %3742 = vmatprep.subr.mxu0 0.0
      %3743 = vmatpush1.msra.mxu0 0.0
      %3744 = vmatprep.subr.mxu0 0.0
      %3745 = vmatpush1.msra.mxu0 0.0
      %3746 = vmatprep.subr.mxu0 0.0
      %3747 = vmatpush1.msra.mxu0 0.0
      %3748 = vmatprep.subr.mxu0 0.0
      %3749 = vmatpush1.msra.mxu0 0.0
      %3750 = vmatprep.subr.mxu0 0.0
      %3751 = vmatpush1.msra.mxu0 0.0
      %3752 = vmatprep.subr.mxu0 0.0
      %3753 = vmatpush1.msra.mxu0 0.0
      %3754 = vmatprep.subr.mxu0 0.0
      %3755 = vmatpush1.msra.mxu0 0.0
      %3756 = vmatprep.subr.mxu0 0.0
      %3757 = vmatpush1.msra.mxu0 0.0
      %3758 = vmatprep.subr.mxu0 0.0
      %3759 = vmatpush1.msra.mxu0 0.0
      %3760 = vmatprep.subr.mxu0 0.0
      %3761 = vmatpush1.msra.mxu0 0.0
      %3762 = vmatprep.subr.mxu0 0.0
      %3763 = vmatpush1.msra.mxu0 0.0
      %3764 = vmatprep.subr.mxu0 0.0
      %3765 = vmatpush1.msra.mxu0 0.0
      %3766 = vmatprep.subr.mxu0 0.0
      %3767 = vmatpush1.msra.mxu0 0.0
      %3768 = vmatprep.mubr.f32.mxu0 0.0
      %3769 = vmatmul.mubr.f32.gmra.mrb[0].mxu0 %v3597
      %v3770 = vpop.f32.mrb[0].mxu0
      %v3771 = vadd.f32 0.0, %v3770
      %v3772 = vpop.f32.mrb[0].mxu0
      %3773 = vmatprep.mubr.f32.mxu0 0.0
      %3774 = vmatmul.mubr.f32.gmra.mrb[0].mxu0 %v3600
      %v3775 = vpop.f32.mrb[0].mxu0
      %v3776 = vadd.f32 0.0, %v3775
      %v3777 = vpop.f32.mrb[0].mxu0
      %3778 = vmatprep.mubr.f32.mxu0 0.0
      %3779 = vmatmul.mubr.f32.gmra.mrb[0].mxu0 %v3603
      %v3780 = vpop.f32.mrb[0].mxu0
      %v3781 = vadd.f32 0.0, %v3780
      %v3782 = vpop.f32.mrb[0].mxu0
      %3783 = vmatprep.mubr.f32.mxu0 0.0
      %3784 = vmatmul.mubr.f32.gmra.mrb[0].mxu0 %v3606
      %v3785 = vpop.f32.mrb[0].mxu0
      %v3786 = vadd.f32 0.0, %v3785
      %v3787 = vpop.f32.mrb[0].mxu0
      %3788 = vmatprep.mubr.f32.mxu0 0.0
      %3789 = vmatmul.mubr.f32.gmra.mrb[0].mxu0 %v3609
      %v3790 = vpop.f32.mrb[0].mxu0
      %v3791 = vadd.f32 0.0, %v3790
      %v3792 = vpop.f32.mrb[0].mxu0
      %3793 = vmatprep.mubr.f32.mxu0 0.0
      %3794 = vmatmul.mubr.f32.gmra.mrb[0].mxu0 %v3612
      %v3795 = vpop.f32.mrb[0].mxu0
      %v3796 = vadd.f32 0.0, %v3795
      %v3797 = vpop.f32.mrb[0].mxu0
      %3798 = vmatprep.mubr.f32.mxu0 0.0
      %3799 = vmatmul.mubr.f32.gmra.mrb[0].mxu0 %v3615
      %v3800 = vpop.f32.mrb[0].mxu0
      %v3801 = vadd.f32 0.0, %v3800
      %v3802 = vpop.f32.mrb[0].mxu0
      %3803 = vmatprep.mubr.f32.mxu0 0.0
      %3804 = vmatmul.mubr.f32.gmra.mrb[0].mxu0 %v3618
      %v3805 = vpop.f32.mrb[0].mxu0
      %v3806 = vadd.f32 0.0, %v3805
      %v3807 = vpop.f32.mrb[0].mxu0
      %3808 = vmatprep.mubr.f32.mxu0 0.0
      %3809 = vmatmul.mubr.f32.gmra.mrb[0].mxu0 %v3621
      %v3810 = vpop.f32.mrb[0].mxu0
      %v3811 = vadd.f32 0.0, %v3810
      %v3812 = vpop.f32.mrb[0].mxu0
      %3813 = vmatprep.mubr.f32.mxu0 0.0
      %3814 = vmatmul.mubr.f32.gmra.mrb[0].mxu0 %v3624
      %v3815 = vpop.f32.mrb[0].mxu0
      %v3816 = vadd.f32 0.0, %v3815
      %v3817 = vpop.f32.mrb[0].mxu0
      %3818 = vmatprep.mubr.f32.mxu0 0.0
      %3819 = vmatmul.mubr.f32.gmra.mrb[0].mxu0 %v3627
      %v3820 = vpop.f32.mrb[0].mxu0
      %v3821 = vadd.f32 0.0, %v3820
      %v3822 = vpop.f32.mrb[0].mxu0
      %3823 = vmatprep.mubr.f32.mxu0 0.0
      %3824 = vmatmul.mubr.f32.gmra.mrb[0].mxu0 %v3630
      %v3825 = vpop.f32.mrb[0].mxu0
      %v3826 = vadd.f32 0.0, %v3825
      %v3827 = vpop.f32.mrb[0].mxu0
      %3828 = vmatprep.mubr.f32.mxu0 0.0
      %3829 = vmatmul.mubr.f32.gmra.mrb[0].mxu0 %v3633
      %v3830 = vpop.f32.mrb[0].mxu0
      %v3831 = vadd.f32 0.0, %v3830
      %v3832 = vpop.f32.mrb[0].mxu0
      %3833 = vmatprep.mubr.f32.mxu0 0.0
      %3834 = vmatmul.mubr.f32.gmra.mrb[0].mxu0 %v3636
      %v3835 = vpop.f32.mrb[0].mxu0
      %v3836 = vadd.f32 0.0, %v3835
      %v3837 = vpop.f32.mrb[0].mxu0
      %3838 = vmatprep.mubr.f32.mxu0 0.0
      %3839 = vmatmul.mubr.f32.gmra.mrb[0].mxu0 %v3639
      %v3840 = vpop.f32.mrb[0].mxu0
      %v3841 = vadd.f32 0.0, %v3840
      %v3842 = vpop.f32.mrb[0].mxu0
      %3843 = vmatprep.mubr.f32.mxu0 0.0
      %3844 = vmatmul.mubr.f32.gmra.mrb[0].mxu0 %v3642
      %v3845 = vpop.f32.mrb[0].mxu0
      %v3846 = vadd.f32 0.0, %v3845
      %v3847 = vpop.f32.mrb[0].mxu0
      %3848 = vmatprep.mubr.f32.mxu0 0.0
      %3849 = vmatmul.mubr.f32.gmra.mrb[0].mxu0 %v3645
      %v3850 = vpop.f32.mrb[0].mxu0
      %v3851 = vadd.f32 0.0, %v3850
      %v3852 = vpop.f32.mrb[0].mxu0
      %3853 = vmatprep.mubr.f32.mxu0 0.0
      %3854 = vmatmul.mubr.f32.gmra.mrb[0].mxu0 %v3648
      %v3855 = vpop.f32.mrb[0].mxu0
      %v3856 = vadd.f32 0.0, %v3855
      %v3857 = vpop.f32.mrb[0].mxu0
      %3858 = vmatprep.mubr.f32.mxu0 0.0
      %3859 = vmatmul.mubr.f32.gmra.mrb[0].mxu0 %v3651
      %v3860 = vpop.f32.mrb[0].mxu0
      %v3861 = vadd.f32 0.0, %v3860
      %v3862 = vpop.f32.mrb[0].mxu0
      %3863 = vmatprep.mubr.f32.mxu0 0.0
      %3864 = vmatmul.mubr.f32.gmra.mrb[0].mxu0 %v3654
      %v3865 = vpop.f32.mrb[0].mxu0
      %v3866 = vadd.f32 0.0, %v3865
      %v3867 = vpop.f32.mrb[0].mxu0
      %3868 = vmatprep.mubr.f32.mxu0 0.0
      %3869 = vmatmul.mubr.f32.gmra.mrb[0].mxu0 %v3657
      %v3870 = vpop.f32.mrb[0].mxu0
      %v3871 = vadd.f32 0.0, %v3870
      %v3872 = vpop.f32.mrb[0].mxu0
      %3873 = vmatprep.mubr.f32.mxu0 0.0
      %3874 = vmatmul.mubr.f32.gmra.mrb[0].mxu0 %v3660
      %v3875 = vpop.f32.mrb[0].mxu0
      %v3876 = vadd.f32 0.0, %v3875
      %v3877 = vpop.f32.mrb[0].mxu0
      %3878 = vmatprep.mubr.f32.mxu0 0.0
      %3879 = vmatmul.mubr.f32.gmra.mrb[0].mxu0 %v3663
      %v3880 = vpop.f32.mrb[0].mxu0
      %v3881 = vadd.f32 0.0, %v3880
      %v3882 = vpop.f32.mrb[0].mxu0
      %3883 = vmatprep.mubr.f32.mxu0 0.0
      %3884 = vmatmul.mubr.f32.gmra.mrb[0].mxu0 %v3666
      %v3885 = vpop.f32.mrb[0].mxu0
      %v3886 = vadd.f32 0.0, %v3885
      %v3887 = vpop.f32.mrb[0].mxu0
      %3888 = vmatprep.mubr.f32.mxu0 0.0
      %3889 = vmatmul.mubr.f32.gmra.mrb[0].mxu0 %v3669
      %v3890 = vpop.f32.mrb[0].mxu0
      %v3891 = vadd.f32 0.0, %v3890
      %v3892 = vpop.f32.mrb[0].mxu0
      %3893 = vmatprep.mubr.f32.mxu0 0.0
      %3894 = vmatmul.mubr.f32.gmra.mrb[0].mxu0 %v3672
      %v3895 = vpop.f32.mrb[0].mxu0
      %v3896 = vadd.f32 0.0, %v3895
      %v3897 = vpop.f32.mrb[0].mxu0
      %3898 = vmatprep.mubr.f32.mxu0 0.0
      %3899 = vmatmul.mubr.f32.gmra.mrb[0].mxu0 %v3675
      %v3900 = vpop.f32.mrb[0].mxu0
      %v3901 = vadd.f32 0.0, %v3900
      %v3902 = vpop.f32.mrb[0].mxu0
      %3903 = vmatprep.mubr.f32.mxu0 0.0
      %3904 = vmatmul.mubr.f32.gmra.mrb[0].mxu0 %v3678
      %v3905 = vpop.f32.mrb[0].mxu0
      %v3906 = vadd.f32 0.0, %v3905
      %v3907 = vpop.f32.mrb[0].mxu0
      %3908 = vmatprep.mubr.f32.mxu0 0.0
      %3909 = vmatmul.mubr.f32.gmra.mrb[0].mxu0 %v3681
      %v3910 = vpop.f32.mrb[0].mxu0
      %v3911 = vadd.f32 0.0, %v3910
      %v3912 = vpop.f32.mrb[0].mxu0
      %3913 = vmatprep.mubr.f32.mxu0 0.0
      %3914 = vmatmul.mubr.f32.gmra.mrb[0].mxu0 %v3684
      %v3915 = vpop.f32.mrb[0].mxu0
      %v3916 = vadd.f32 0.0, %v3915
      %v3917 = vpop.f32.mrb[0].mxu0
      %3918 = vmatprep.mubr.f32.mxu0 0.0
      %3919 = vmatmul.mubr.f32.gmra.mrb[0].mxu0 %v3687
      %v3920 = vpop.f32.mrb[0].mxu0
      %v3921 = vadd.f32 0.0, %v3920
      %v3922 = vpop.f32.mrb[0].mxu0
      %3923 = vmatprep.mubr.f32.mxu0 0.0
      %3924 = vmatmul.mubr.f32.gmra.mrb[0].mxu0 %v3690
      %v3925 = vpop.f32.mrb[0].mxu0
      %v3926 = vadd.f32 0.0, %v3925
      %v3927 = vpop.f32.mrb[0].mxu0
      %3928 = vmatprep.mubr.f32.mxu0 0.0
      %3929 = vmatmul.mubr.f32.gmra.mrb[0].mxu0 %v3693
      %v3930 = vpop.f32.mrb[0].mxu0
      %v3931 = vadd.f32 0.0, %v3930
      %v3932 = vpop.f32.mrb[0].mxu0
      %3933 = vmatprep.mubr.f32.mxu0 0.0
      %3934 = vmatmul.mubr.f32.gmra.mrb[0].mxu0 %v3696
      %v3935 = vpop.f32.mrb[0].mxu0
      %v3936 = vadd.f32 0.0, %v3935
      %v3937 = vpop.f32.mrb[0].mxu0
      %3938 = vmatprep.mubr.f32.mxu0 0.0
      %3939 = vmatmul.mubr.f32.gmra.mrb[0].mxu0 %v3699
      %v3940 = vpop.f32.mrb[0].mxu0
      %v3941 = vadd.f32 0.0, %v3940
      %v3942 = vpop.f32.mrb[0].mxu0
      %3943 = vmatprep.mubr.f32.mxu0 0.0
      %3944 = vmatmul.mubr.f32.gmra.mrb[0].mxu0 %v3702
      %v3945 = vpop.f32.mrb[0].mxu0
      %v3946 = vadd.f32 0.0, %v3945
      %v3947 = vpop.f32.mrb[0].mxu0
      %3948 = vdwg.mxu0
      %v3949 = vadd.f32 %v3522, %v3771
      %v3950 = vadd.f32 %v3523, %v3776
      %v3951 = vadd.f32 %v3524, %v3781
      %v3952 = vadd.f32 %v3525, %v3786
      %v3953 = vadd.f32 %v3526, %v3791
      %v3954 = vadd.f32 %v3527, %v3796
      %v3955 = vadd.f32 %v3528, %v3801
      %v3956 = vadd.f32 %v3529, %v3806
      %v3957 = vadd.f32 %v3530, %v3811
      %v3958 = vadd.f32 %v3531, %v3816
      %v3959 = vadd.f32 %v3532, %v3821
      %v3960 = vadd.f32 %v3533, %v3826
      %v3961 = vadd.f32 %v3534, %v3831
      %v3962 = vadd.f32 %v3535, %v3836
      %v3963 = vadd.f32 %v3536, %v3841
      %v3964 = vadd.f32 %v3537, %v3846
      %v3965 = vadd.f32 %v3538, %v3851
      %v3966 = vadd.f32 %v3539, %v3856
      %v3967 = vadd.f32 %v3540, %v3861
      %v3968 = vadd.f32 %v3541, %v3866
      %v3969 = vadd.f32 %v3542, %v3871
      %v3970 = vadd.f32 %v3543, %v3876
      %v3971 = vadd.f32 %v3544, %v3881
      %v3972 = vadd.f32 %v3545, %v3886
      %v3973 = vadd.f32 %v3546, %v3891
      %v3974 = vadd.f32 %v3547, %v3896
      %v3975 = vadd.f32 %v3548, %v3901
      %v3976 = vadd.f32 %v3549, %v3906
      %v3977 = vadd.f32 %v3550, %v3911
      %v3978 = vadd.f32 %v3551, %v3916
      %v3979 = vadd.f32 %v3552, %v3921
      %v3980 = vadd.f32 %v3553, %v3926
      %v3981 = vadd.f32 %v3554, %v3931
      %v3982 = vadd.f32 %v3555, %v3936
      %v3983 = vadd.f32 %v3556, %v3941
      %v3984 = vadd.f32 %v3557, %v3946
      %p3985 = scmp.eq.s32.totalorder %s20, 0
      // Predicated region
      $region29: #{tpu_custom_call.1} parent=27 // pred_check
        %p3986 = pneg %p3985
      $region30: #{tpu_custom_call.1} parent=27 // pred_check_branch
        %3988 = sbr.rel (%p3986) target = $region32
      $region31: #{tpu_custom_call.1} parent=27 // pred_region
        %3989 = vst.msk [vmem:[%s213] sm:$0xff] %vm289, %v3949
        %3990 = vst.msk [vmem:[%s213 + $0x8] sm:$0xff] %vm289, %v3950
        %3991 = vst.msk [vmem:[%s213 + $0x10] sm:$0xff] %vm289, %v3951
        %3992 = vst.msk [vmem:[%s213 + $0x18] sm:$0xff] %vm289, %v3952
        %3993 = vst.msk [vmem:[%s213 + $0x20] sm:$0xff] %vm289, %v3953
        %3994 = vst.msk [vmem:[%s213 + $0x28] sm:$0xff] %vm289, %v3954
        %3995 = vst.msk [vmem:[%s213 + $0x30] sm:$0xff] %vm289, %v3955
        %3996 = vst.msk [vmem:[%s213 + $0x38] sm:$0xff] %vm289, %v3956
        %3997 = vst.msk [vmem:[%s213 + $0x40] sm:$0xff] %vm289, %v3957
        %3998 = vst.msk [vmem:[%s213 + $0x48] sm:$0xff] %vm289, %v3958
        %3999 = vst.msk [vmem:[%s213 + $0x50] sm:$0xff] %vm289, %v3959
        %4000 = vst.msk [vmem:[%s213 + $0x58] sm:$0xff] %vm289, %v3960
        %4001 = vst.msk [vmem:[%s213 + $0x60] sm:$0xff] %vm289, %v3961
        %4002 = vst.msk [vmem:[%s213 + $0x68] sm:$0xff] %vm289, %v3962
        %4003 = vst.msk [vmem:[%s213 + $0x70] sm:$0xff] %vm289, %v3963
        %4004 = vst.msk [vmem:[%s213 + $0x78] sm:$0xff] %vm289, %v3964
        %4005 = vst.msk [vmem:[%s213 + $0x80] sm:$0xff] %vm289, %v3965
        %4006 = vst.msk [vmem:[%s213 + $0x88] sm:$0xff] %vm289, %v3966
        %4007 = vst.msk [vmem:[%s213 + $0x90] sm:$0xff] %vm289, %v3967
        %4008 = vst.msk [vmem:[%s213 + $0x98] sm:$0xff] %vm289, %v3968
        %4009 = vst.msk [vmem:[%s213 + $0xa0] sm:$0xff] %vm289, %v3969
        %4010 = vst.msk [vmem:[%s213 + $0xa8] sm:$0xff] %vm289, %v3970
        %4011 = vst.msk [vmem:[%s213 + $0xb0] sm:$0xff] %vm289, %v3971
        %4012 = vst.msk [vmem:[%s213 + $0xb8] sm:$0xff] %vm289, %v3972
        %4013 = vst.msk [vmem:[%s213 + $0xc0] sm:$0xff] %vm289, %v3973
        %4014 = vst.msk [vmem:[%s213 + $0xc8] sm:$0xff] %vm289, %v3974
        %4015 = vst.msk [vmem:[%s213 + $0xd0] sm:$0xff] %vm289, %v3975
        %4016 = vst.msk [vmem:[%s213 + $0xd8] sm:$0xff] %vm289, %v3976
        %4017 = vst.msk [vmem:[%s213 + $0xe0] sm:$0xff] %vm289, %v3977
        %4018 = vst.msk [vmem:[%s213 + $0xe8] sm:$0xff] %vm289, %v3978
        %4019 = vst.msk [vmem:[%s213 + $0xf0] sm:$0xff] %vm289, %v3979
        %4020 = vst.msk [vmem:[%s213 + $0xf8] sm:$0xff] %vm289, %v3980
        %4021 = vst.msk [vmem:[%s213 + $0x100] sm:$0xff] %vm289, %v3981
        %4022 = vst.msk [vmem:[%s213 + $0x108] sm:$0xff] %vm289, %v3982
        %4023 = vst.msk [vmem:[%s213 + $0x110] sm:$0xff] %vm289, %v3983
        %4024 = vst.msk [vmem:[%s213 + $0x118] sm:$0xff] %vm289, %v3984
      $region32: #{tpu_custom_call.1} parent=27 // pred_fallthru
        _
      %p4025 = scmp.gt.s32.totalorder %s20, 0
      // Predicated region
      $region33: #{tpu_custom_call.1} parent=27 // pred_check
        %p4026 = pneg %p4025
      $region34: #{tpu_custom_call.1} parent=27 // pred_check_branch
        %4028 = sbr.rel (%p4026) target = $region36
      $region35: #{tpu_custom_call.1} parent=27 // pred_region
        %v4029 = vld [vmem:[%s213] sm:$0xff]
        %v4030 = vld [vmem:[%s213 + $0x8] sm:$0xff]
        %v4031 = vld [vmem:[%s213 + $0x10] sm:$0xff]
        %v4032 = vld [vmem:[%s213 + $0x18] sm:$0xff]
        %v4033 = vld [vmem:[%s213 + $0x20] sm:$0xff]
        %v4034 = vld [vmem:[%s213 + $0x28] sm:$0xff]
        %v4035 = vld [vmem:[%s213 + $0x30] sm:$0xff]
        %v4036 = vld [vmem:[%s213 + $0x38] sm:$0xff]
        %v4037 = vld [vmem:[%s213 + $0x40] sm:$0xff]
        %v4038 = vld [vmem:[%s213 + $0x48] sm:$0xff]
        %v4039 = vld [vmem:[%s213 + $0x50] sm:$0xff]
        %v4040 = vld [vmem:[%s213 + $0x58] sm:$0xff]
        %v4041 = vld [vmem:[%s213 + $0x60] sm:$0xff]
        %v4042 = vld [vmem:[%s213 + $0x68] sm:$0xff]
        %v4043 = vld [vmem:[%s213 + $0x70] sm:$0xff]
        %v4044 = vld [vmem:[%s213 + $0x78] sm:$0xff]
        %v4045 = vld [vmem:[%s213 + $0x80] sm:$0xff]
        %v4046 = vld [vmem:[%s213 + $0x88] sm:$0xff]
        %v4047 = vld [vmem:[%s213 + $0x90] sm:$0xff]
        %v4048 = vld [vmem:[%s213 + $0x98] sm:$0xff]
        %v4049 = vld [vmem:[%s213 + $0xa0] sm:$0xff]
        %v4050 = vld [vmem:[%s213 + $0xa8] sm:$0xff]
        %v4051 = vld [vmem:[%s213 + $0xb0] sm:$0xff]
        %v4052 = vld [vmem:[%s213 + $0xb8] sm:$0xff]
        %v4053 = vld [vmem:[%s213 + $0xc0] sm:$0xff]
        %v4054 = vld [vmem:[%s213 + $0xc8] sm:$0xff]
        %v4055 = vld [vmem:[%s213 + $0xd0] sm:$0xff]
        %v4056 = vld [vmem:[%s213 + $0xd8] sm:$0xff]
        %v4057 = vld [vmem:[%s213 + $0xe0] sm:$0xff]
        %v4058 = vld [vmem:[%s213 + $0xe8] sm:$0xff]
        %v4059 = vld [vmem:[%s213 + $0xf0] sm:$0xff]
        %v4060 = vld [vmem:[%s213 + $0xf8] sm:$0xff]
        %v4061 = vld [vmem:[%s213 + $0x100] sm:$0xff]
        %v4062 = vld [vmem:[%s213 + $0x108] sm:$0xff]
        %v4063 = vld [vmem:[%s213 + $0x110] sm:$0xff]
        %v4064 = vld [vmem:[%s213 + $0x118] sm:$0xff]
        %v4065 = vadd.f32 %v4029, %v3949
        %v4066 = vadd.f32 %v4030, %v3950
        %v4067 = vadd.f32 %v4031, %v3951
        %v4068 = vadd.f32 %v4032, %v3952
        %v4069 = vadd.f32 %v4033, %v3953
        %v4070 = vadd.f32 %v4034, %v3954
        %v4071 = vadd.f32 %v4035, %v3955
        %v4072 = vadd.f32 %v4036, %v3956
        %v4073 = vadd.f32 %v4037, %v3957
        %v4074 = vadd.f32 %v4038, %v3958
        %v4075 = vadd.f32 %v4039, %v3959
        %v4076 = vadd.f32 %v4040, %v3960
        %v4077 = vadd.f32 %v4041, %v3961
        %v4078 = vadd.f32 %v4042, %v3962
        %v4079 = vadd.f32 %v4043, %v3963
        %v4080 = vadd.f32 %v4044, %v3964
        %v4081 = vadd.f32 %v4045, %v3965
        %v4082 = vadd.f32 %v4046, %v3966
        %v4083 = vadd.f32 %v4047, %v3967
        %v4084 = vadd.f32 %v4048, %v3968
        %v4085 = vadd.f32 %v4049, %v3969
        %v4086 = vadd.f32 %v4050, %v3970
        %v4087 = vadd.f32 %v4051, %v3971
        %v4088 = vadd.f32 %v4052, %v3972
        %v4089 = vadd.f32 %v4053, %v3973
        %v4090 = vadd.f32 %v4054, %v3974
        %v4091 = vadd.f32 %v4055, %v3975
        %v4092 = vadd.f32 %v4056, %v3976
        %v4093 = vadd.f32 %v4057, %v3977
        %v4094 = vadd.f32 %v4058, %v3978
        %v4095 = vadd.f32 %v4059, %v3979
        %v4096 = vadd.f32 %v4060, %v3980
        %v4097 = vadd.f32 %v4061, %v3981
        %v4098 = vadd.f32 %v4062, %v3982
        %v4099 = vadd.f32 %v4063, %v3983
        %v4100 = vadd.f32 %v4064, %v3984
        %4101 = vst.msk [vmem:[%s213] sm:$0xff] %vm289, %v4065
        %4102 = vst.msk [vmem:[%s213 + $0x8] sm:$0xff] %vm289, %v4066
        %4103 = vst.msk [vmem:[%s213 + $0x10] sm:$0xff] %vm289, %v4067
        %4104 = vst.msk [vmem:[%s213 + $0x18] sm:$0xff] %vm289, %v4068
        %4105 = vst.msk [vmem:[%s213 + $0x20] sm:$0xff] %vm289, %v4069
        %4106 = vst.msk [vmem:[%s213 + $0x28] sm:$0xff] %vm289, %v4070
        %4107 = vst.msk [vmem:[%s213 + $0x30] sm:$0xff] %vm289, %v4071
        %4108 = vst.msk [vmem:[%s213 + $0x38] sm:$0xff] %vm289, %v4072
        %4109 = vst.msk [vmem:[%s213 + $0x40] sm:$0xff] %vm289, %v4073
        %4110 = vst.msk [vmem:[%s213 + $0x48] sm:$0xff] %vm289, %v4074
        %4111 = vst.msk [vmem:[%s213 + $0x50] sm:$0xff] %vm289, %v4075
        %4112 = vst.msk [vmem:[%s213 + $0x58] sm:$0xff] %vm289, %v4076
        %4113 = vst.msk [vmem:[%s213 + $0x60] sm:$0xff] %vm289, %v4077
        %4114 = vst.msk [vmem:[%s213 + $0x68] sm:$0xff] %vm289, %v4078
        %4115 = vst.msk [vmem:[%s213 + $0x70] sm:$0xff] %vm289, %v4079
        %4116 = vst.msk [vmem:[%s213 + $0x78] sm:$0xff] %vm289, %v4080
        %4117 = vst.msk [vmem:[%s213 + $0x80] sm:$0xff] %vm289, %v4081
        %4118 = vst.msk [vmem:[%s213 + $0x88] sm:$0xff] %vm289, %v4082
        %4119 = vst.msk [vmem:[%s213 + $0x90] sm:$0xff] %vm289, %v4083
        %4120 = vst.msk [vmem:[%s213 + $0x98] sm:$0xff] %vm289, %v4084
        %4121 = vst.msk [vmem:[%s213 + $0xa0] sm:$0xff] %vm289, %v4085
        %4122 = vst.msk [vmem:[%s213 + $0xa8] sm:$0xff] %vm289, %v4086
        %4123 = vst.msk [vmem:[%s213 + $0xb0] sm:$0xff] %vm289, %v4087
        %4124 = vst.msk [vmem:[%s213 + $0xb8] sm:$0xff] %vm289, %v4088
        %4125 = vst.msk [vmem:[%s213 + $0xc0] sm:$0xff] %vm289, %v4089
        %4126 = vst.msk [vmem:[%s213 + $0xc8] sm:$0xff] %vm289, %v4090
        %4127 = vst.msk [vmem:[%s213 + $0xd0] sm:$0xff] %vm289, %v4091
        %4128 = vst.msk [vmem:[%s213 + $0xd8] sm:$0xff] %vm289, %v4092
        %4129 = vst.msk [vmem:[%s213 + $0xe0] sm:$0xff] %vm289, %v4093
        %4130 = vst.msk [vmem:[%s213 + $0xe8] sm:$0xff] %vm289, %v4094
        %4131 = vst.msk [vmem:[%s213 + $0xf0] sm:$0xff] %vm289, %v4095
        %4132 = vst.msk [vmem:[%s213 + $0xf8] sm:$0xff] %vm289, %v4096
        %4133 = vst.msk [vmem:[%s213 + $0x100] sm:$0xff] %vm289, %v4097
        %4134 = vst.msk [vmem:[%s213 + $0x108] sm:$0xff] %vm289, %v4098
        %4135 = vst.msk [vmem:[%s213 + $0x110] sm:$0xff] %vm289, %v4099
        %4136 = vst.msk [vmem:[%s213 + $0x118] sm:$0xff] %vm289, %v4100
      $region36: #{tpu_custom_call.1} parent=27 // pred_fallthru
        _
      %p4137 = scmp.lt.s32.totalorder %s18, 1
      %s4138 = scalar_select %p4137, %s18, 1
      %p4139 = scmp.lt.s32.totalorder %s19, 7
      %s4140 = scalar_select %p4139, %s19, 7
      %s4141 = smul.addr %s4140, 36
      %s4142 = smul.addr %s4138, 288
      %s4143 = sadd.s32 %s4141, %s4142
      %s4144 = smul.addr %s4143, 8
      %s4145 = scalar_lea.vmem %s2, %s4144
      // Predicated region
      $region37: #{tpu_custom_call.1} parent=27 // pred_check
        %p4146 = pneg %p108
      $region38: #{tpu_custom_call.1} parent=27 // pred_check_branch
        %4148 = sbr.rel (%p4146) target = $region40
      $region39: #{tpu_custom_call.1} parent=27 // pred_region
        _
      $region40: #{tpu_custom_call.1} parent=27 // pred_fallthru
        _
    $region28: #{tpu_custom_call.1} parent=5 // pred_fallthru
      _
    %p4149 = scmp.le.s32.totalorder 2, %s8
    // Predicated region
    $region41: #{tpu_custom_call.1} parent=5 // pred_check
      %p4150 = pneg %p4149
    $region42: #{tpu_custom_call.1} parent=5 // pred_check_branch
      %4152 = sbr.rel (%p4150) target = $region44
    $region43: #{tpu_custom_call.1} parent=5 // pred_region
      %s4153 = ssub.s32 %s8, 2
      // Predicated region
      $region45: #{tpu_custom_call.1} parent=43 // pred_check
        %p4154 = pneg %p114
      $region46: #{tpu_custom_call.1} parent=43 // pred_check_branch
        %4156 = sbr.rel (%p4154) target = $region48
      $region47: #{tpu_custom_call.1} parent=43 // pred_region
        %p4157 = scmp.lt.s32.totalorder %s21, 1
        %s4158 = scalar_select %p4157, %s21, 1
        %p4159 = scmp.lt.s32.totalorder %s22, 7
        %s4160 = scalar_select %p4159, %s22, 7
        %s4161 = smul.addr %s4160, 36
        %s4162 = smul.addr %s4158, 288
        %s4163 = sadd.s32 %s4161, %s4162
        %s4164 = smul.addr %s4163, 8
        %s4165 = scalar_lea.vmem %s2, %s4164
      $region48: #{tpu_custom_call.1} parent=43 // pred_fallthru
        _
    $region44: #{tpu_custom_call.1} parent=5 // pred_fallthru
      _
  $region6: #{tpu_custom_call.1} parent=0 // loop_footer
    %s12 = sadd.s32 1, %s8
  $region7: #{tpu_custom_call.1} parent=0 // loop_footer_branch
    %7 = sbr.rel target = $region3
  $region8: #{tpu_custom_call.1} parent=0 // loop_exit
    _

</llo_original>
